<compile_context>
chip_gen: v5e
topology: v5e:2x2
jax: 0.10.0
libtpu: 0.0.40
codegen_flags: <defaults>
</compile_context>

<pallas_src>
import functools
import math

import jax
import jax.numpy as jnp
from jax.experimental import pallas as pl
from jax.experimental.pallas import tpu as pltpu


def _round_up(v, m):
    return (v + m - 1) // m * m


def _bidir_lstm_kernel(seq_len, padded_len,
                       xf_ref, xb_ref,
                       wih_f_ref, wih_b_ref,
                       whh_f_ref, whh_b_ref,
                       bf_ref, bb_ref,
                       out_f_ref, out_b_ref, hN_ref, cN_ref,
                       hf_sc, cf_sc, hb_sc, cb_sc):
    """Interleaved bidirectional LSTM over one time block.

    Grid: (time_block,)  -- sequential ("arbitrary") recurrence axis.
    xf_ref : (Tc, Bp, Dp)  inputs for time block tb          (forward order)
    xb_ref : (Tc, Bp, Dp)  inputs for time block nb-1-tb     (backward order)
    wih_*  : (Dp, 4Hp)     W_ih^T per direction (resident)
    whh_*  : (Hp, 4Hp)     W_hh^T per direction (resident)
    b*     : (1, 4Hp)      b_ih + b_hh per direction
    out_f  : (Tc, Bp, Hp)  hidden states, forward direction, original time order
    out_b  : (Tc, Bp, Hp)  hidden states, backward direction, original time order
    hN/cN  : (2, Bp, Hp)   final states (dir 0 = fwd, dir 1 = bwd)
    *_sc   : (Bp, Hp) f32  recurrent carries in VMEM scratch
    """
    Tc, Bp, Dp = xf_ref.shape
    Hp = hf_sc.shape[1]
    nb = padded_len // Tc                       # static
    tb = pl.program_id(0)
    need_mask = padded_len != seq_len           # static

    @pl.when(tb == 0)
    def _init():
        hf_sc[...] = jnp.zeros_like(hf_sc)
        cf_sc[...] = jnp.zeros_like(cf_sc)
        hb_sc[...] = jnp.zeros_like(hb_sc)
        cb_sc[...] = jnp.zeros_like(cb_sc)

    # Block-level input projection: one lane-dense MXU GEMM per direction instead of an
    # HBM round-trip of a precomputed (T,B,4H) gates tensor.
    gf = jnp.dot(xf_ref[...].reshape(Tc * Bp, Dp), wih_f_ref[...],
                 preferred_element_type=jnp.float32) + bf_ref[...]     # (Tc*Bp, 4Hp)
    gb = jnp.dot(xb_ref[...].reshape(Tc * Bp, Dp), wih_b_ref[...],
                 preferred_element_type=jnp.float32) + bb_ref[...]     # (Tc*Bp, 4Hp)

    w_hh_f = whh_f_ref[...]
    w_hh_b = whh_b_ref[...]

    h_f = hf_sc[...]
    c_f = cf_sc[...]
    h_b = hb_sc[...]
    c_b = cb_sc[...]

    def lstm_cell(gates, c_prev):
        # PyTorch gate ordering: i, f, g, o (lane-aligned slices, Hp % 128 == 0).
        i = jax.nn.sigmoid(gates[:, 0 * Hp:1 * Hp])
        f = jax.nn.sigmoid(gates[:, 1 * Hp:2 * Hp])
        g = jnp.tanh(gates[:, 2 * Hp:3 * Hp])
        o = jax.nn.sigmoid(gates[:, 3 * Hp:4 * Hp])
        c_new = f * c_prev + i * g
        h_new = o * jnp.tanh(c_new)
        return h_new, c_new

    # Interleaved forward/backward recurrence: two independent dependency chains per
    # iteration fill each other's MXU/EUP/VPU latency bubbles on a single TensorCore.
    # Static Python unroll (Tc is VMEM/unroll capped) -> static row addressing everywhere.
    for s in range(Tc):
        rb = Tc - 1 - s                                  # backward walks its block reversed

        gate_f = gf[s * Bp:(s + 1) * Bp, :] + jnp.dot(
            h_f, w_hh_f, preferred_element_type=jnp.float32)
        gate_b = gb[rb * Bp:(rb + 1) * Bp, :] + jnp.dot(
            h_b, w_hh_b, preferred_element_type=jnp.float32)

        h_f_new, c_f_new = lstm_cell(gate_f, c_f)
        h_b_new, c_b_new = lstm_cell(gate_b, c_b)

        if need_mask:
            # Freeze the carries on padded timesteps (keeps hN/cN exact; padded output
            # rows are sliced away in the wrapper).
            t_f = tb * Tc + s
            t_b = (nb - 1 - tb) * Tc + rb
            vf = t_f < seq_len
            vb = t_b < seq_len
            h_f = jnp.where(vf, h_f_new, h_f)
            c_f = jnp.where(vf, c_f_new, c_f)
            h_b = jnp.where(vb, h_b_new, h_b)
            c_b = jnp.where(vb, c_b_new, c_b)
        else:
            h_f, c_f = h_f_new, c_f_new
            h_b, c_b = h_b_new, c_b_new

        out_f_ref[s] = h_f.astype(out_f_ref.dtype)
        out_b_ref[rb] = h_b.astype(out_b_ref.dtype)

    hf_sc[...] = h_f
    cf_sc[...] = c_f
    hb_sc[...] = h_b
    cb_sc[...] = c_b

    @pl.when(tb == nb - 1)
    def _finalize():
        hN_ref[0] = h_f.astype(hN_ref.dtype)
        hN_ref[1] = h_b.astype(hN_ref.dtype)
        cN_ref[0] = c_f.astype(cN_ref.dtype)
        cN_ref[1] = c_b.astype(cN_ref.dtype)


def encoder_forward(x, params, *, max_time_block=16):
    """Matches Encoder.forward for num_layers=1, bidirectional LSTM.
       x: (B, T, D) batch-first.
       Returns (output (B,T,2H), hidden (2,B,H), cell (2,B,H)); dir 0 = fwd, dir 1 = bwd."""
    B, T, D = x.shape
    H = params["w_hh_f"].shape[1]
    f32 = jnp.float32

    LANE, SUB = 128, 8
    Hp = _round_up(H, LANE)        # lane-aligned gate blocks + lane-dense output stores
    Dp = _round_up(D, LANE)
    Bp = _round_up(B, SUB)         # sublane-dense (Bp, Hp) carries / per-step slabs

    # --- pad parameters (per-gate-block padding keeps padded hidden columns exactly 0) ---
    def pad_gate_mat(w, in_dim, in_dim_p):
        w4 = w.reshape(4, H, in_dim).astype(f32)
        out = jnp.zeros((4, Hp, in_dim_p), f32).at[:, :H, :in_dim].set(w4)
        return out.reshape(4 * Hp, in_dim_p)

    def pad_gate_vec(b):
        b4 = b.reshape(4, H).astype(f32)
        return jnp.zeros((4, Hp), f32).at[:, :H].set(b4).reshape(1, 4 * Hp)

    wih_f_t = pad_gate_mat(params["w_ih_f"], D, Dp).T          # (Dp, 4Hp)
    wih_b_t = pad_gate_mat(params["w_ih_b"], D, Dp).T
    whh_f_t = pad_gate_mat(params["w_hh_f"], H, Hp).T          # (Hp, 4Hp)
    whh_b_t = pad_gate_mat(params["w_hh_b"], H, Hp).T
    b_f = pad_gate_vec(params["b_ih_f"] + params["b_hh_f"])    # (1, 4Hp)
    b_b = pad_gate_vec(params["b_ih_b"] + params["b_hh_b"])

    # --- VMEM-budget-aware time block (safe on v7x 64 MiB as well as v5e/v6e 128 MiB) ---
    # Tc-scaled bytes per grid step (f32): 2 dirs x double-buffered x blocks + 2 dirs x
    # double-buffered out blocks + 2 dirs x in-kernel gate slabs.
    bytes_per_t = 4 * Bp * (2 * 2 * Dp + 2 * 2 * Hp + 2 * 4 * Hp)
    Tc = int(max(1, min(max_time_block, T, (16 << 20) // max(bytes_per_t, 1))))
    Tp = _round_up(T, Tc)
    nb = Tp // Tc

    weight_bytes = 2 * 2 * 4 * (Dp * 4 * Hp + Hp * 4 * Hp)      # 2 dirs, double-buffered, f32
    est = Tc * bytes_per_t + weight_bytes + 4 * 4 * Bp * Hp + (4 << 20)
    vmem_limit = int(min(max(est, 32 << 20), 64 << 20))

    # --- time-major, padded input (no (T,B,4H) gates tensor ever hits HBM) ---
    x_tm = jnp.transpose(x.astype(f32), (1, 0, 2))                       # (T, B, D)
    x_pad = jnp.pad(x_tm, ((0, Tp - T), (0, Bp - B), (0, Dp - D)))       # (Tp, Bp, Dp)

    out_f, out_b, hN, cN = pl.pallas_call(
        functools.partial(_bidir_lstm_kernel, T, Tp),
        out_shape=(
            jax.ShapeDtypeStruct((Tp, Bp, Hp), f32),   # forward hidden states
            jax.ShapeDtypeStruct((Tp, Bp, Hp), f32),   # backward hidden states
            jax.ShapeDtypeStruct((2, Bp, Hp), f32),    # final h (fwd, bwd)
            jax.ShapeDtypeStruct((2, Bp, Hp), f32),    # final c (fwd, bwd)
        ),
        grid_spec=pltpu.PrefetchScalarGridSpec(
            num_scalar_prefetch=0,
            grid=(nb,),                                # single sequential recurrence axis
            in_specs=[
                # same x array passed twice: forward-order and backward-order blocks
                pl.BlockSpec((Tc, Bp, Dp), lambda tb: (tb, 0, 0)),
                pl.BlockSpec((Tc, Bp, Dp), lambda tb: (nb - 1 - tb, 0, 0)),
                pl.BlockSpec((Dp, 4 * Hp), lambda tb: (0, 0)),
                pl.BlockSpec((Dp, 4 * Hp), lambda tb: (0, 0)),
                pl.BlockSpec((Hp, 4 * Hp), lambda tb: (0, 0)),
                pl.BlockSpec((Hp, 4 * Hp), lambda tb: (0, 0)),
                pl.BlockSpec((1, 4 * Hp), lambda tb: (0, 0)),
                pl.BlockSpec((1, 4 * Hp), lambda tb: (0, 0)),
            ],
            out_specs=[
                pl.BlockSpec((Tc, Bp, Hp), lambda tb: (tb, 0, 0)),           # fwd, time order
                pl.BlockSpec((Tc, Bp, Hp), lambda tb: (nb - 1 - tb, 0, 0)),  # bwd, time order
                pl.BlockSpec((2, Bp, Hp), lambda tb: (0, 0, 0)),             # final h
                pl.BlockSpec((2, Bp, Hp), lambda tb: (0, 0, 0)),             # final c
            ],
            scratch_shapes=[pltpu.VMEM((Bp, Hp), f32)] * 4,   # h_f, c_f, h_b, c_b carries
        ),
        compiler_params=pltpu.CompilerParams(
            dimension_semantics=("arbitrary",),       # recurrence -> sequential
            vmem_limit_bytes=vmem_limit),
    )(x_pad, x_pad, wih_f_t, wih_b_t, whh_f_t, whh_b_t, b_f, b_b)

    # Cheap epilogue: outputs are already in original time order per direction; just
    # concat the two lane halves and swap (T,B,.) -> (B,T,.) to match batch_first.
    output = jnp.concatenate([out_f[:T, :B, :H], out_b[:T, :B, :H]], axis=-1)  # (T,B,2H)
    output = jnp.transpose(output, (1, 0, 2))                                  # (B,T,2H)
    hidden = hN[:, :B, :H]
    cell = cN[:, :B, :H]
    return output, hidden, cell


def _pure_jax_reference(x, params):
    """lax.scan reference (no Pallas) used for a correctness check."""
    def one_dir(x_tbd, w_ih, w_hh, b_ih, b_hh):
        H = w_hh.shape[1]
        b = b_ih + b_hh

        def step(carry, x_t):
            h, c = carry
            gates = x_t @ w_ih.T + h @ w_hh.T + b
            i = jax.nn.sigmoid(gates[:, 0 * H:1 * H])
            f = jax.nn.sigmoid(gates[:, 1 * H:2 * H])
            g = jnp.tanh(gates[:, 2 * H:3 * H])
            o = jax.nn.sigmoid(gates[:, 3 * H:4 * H])
            c_new = f * c + i * g
            h_new = o * jnp.tanh(c_new)
            return (h_new, c_new), h_new

        B = x_tbd.shape[1]
        init = (jnp.zeros((B, H), jnp.float32), jnp.zeros((B, H), jnp.float32))
        (hN, cN), outs = jax.lax.scan(step, init, x_tbd)
        return outs, hN, cN

    x_tbd = jnp.transpose(x, (1, 0, 2)).astype(jnp.float32)
    out_f, h_f, c_f = one_dir(x_tbd, params["w_ih_f"], params["w_hh_f"],
                              params["b_ih_f"], params["b_hh_f"])
    out_b_rev, h_b, c_b = one_dir(x_tbd[::-1], params["w_ih_b"], params["w_hh_b"],
                                  params["b_ih_b"], params["b_hh_b"])
    out_b = out_b_rev[::-1]
    output = jnp.transpose(jnp.concatenate([out_f, out_b], axis=-1), (1, 0, 2))
    return output, jnp.stack([h_f, h_b]), jnp.stack([c_f, c_b])


def init_params(key, input_dim, hidden_dim):
    """PyTorch nn.LSTM default init: U(-1/sqrt(H), 1/sqrt(H)) for all params."""
    k = 1.0 / math.sqrt(hidden_dim)
    keys = jax.random.split(key, 8)

    def u(kk, shape):
        return jax.random.uniform(kk, shape, jnp.float32, minval=-k, maxval=k)

    H, D = hidden_dim, input_dim
    return {
        "w_ih_f": u(keys[0], (4 * H, D)), "w_hh_f": u(keys[1], (4 * H, H)),
        "b_ih_f": u(keys[2], (4 * H,)),   "b_hh_f": u(keys[3], (4 * H,)),
        "w_ih_b": u(keys[4], (4 * H, D)), "w_hh_b": u(keys[5], (4 * H, H)),
        "b_ih_b": u(keys[6], (4 * H,)),   "b_hh_b": u(keys[7], (4 * H,)),
    }


if __name__ == "__main__":
    key = jax.random.PRNGKey(0)

    def run_check(k, B, T, D, H, max_tc, tol=2e-5):
        k_x, k_p = jax.random.split(k)
        x = jax.random.normal(k_x, (B, T, D), dtype=jnp.float32)
        params = init_params(k_p, D, H)

        fwd = jax.jit(functools.partial(encoder_forward, max_time_block=max_tc))
        output, hidden, cell = jax.block_until_ready(fwd(x, params))

        assert output.shape == (B, T, 2 * H)
        assert hidden.shape == (2, B, H)
        assert cell.shape == (2, B, H)

        ref_out, ref_h, ref_c = _pure_jax_reference(x, params)
        assert jnp.max(jnp.abs(output - ref_out)) < tol
        assert jnp.max(jnp.abs(hidden - ref_h)) < tol
        assert jnp.max(jnp.abs(cell - ref_c)) < tol

    # Main case: B=2, T=8, D=4, H=32 (single time block).
    run_check(key, B=2, T=8, D=4, H=32, max_tc=16)
    # Awkward-T case: exercises time padding + in-kernel validity mask and the
    # multi-block forward/backward interleave (T=11, Tc=4 -> Tp=12, 3 time blocks).
    run_check(jax.random.fold_in(key, 1), B=2, T=11, D=4, H=32, max_tc=4)

    print("KERNEL_OK")
</pallas_src>

<mosaic_0001>
module attributes {stable_mosaic.version = 11 : i64} {
  func.func @_bidir_lstm_kernel(%arg0: i32, %arg1: memref<8x8x128xf32, #tpu.memory_space<vmem>>, %arg2: memref<8x8x128xf32, #tpu.memory_space<vmem>>, %arg3: memref<128x512xf32, #tpu.memory_space<vmem>>, %arg4: memref<128x512xf32, #tpu.memory_space<vmem>>, %arg5: memref<128x512xf32, #tpu.memory_space<vmem>>, %arg6: memref<128x512xf32, #tpu.memory_space<vmem>>, %arg7: memref<1x512xf32, #tpu.memory_space<vmem>>, %arg8: memref<1x512xf32, #tpu.memory_space<vmem>>, %arg9: memref<8x8x128xf32, #tpu.memory_space<vmem>>, %arg10: memref<8x8x128xf32, #tpu.memory_space<vmem>>, %arg11: memref<2x8x128xf32, #tpu.memory_space<vmem>>, %arg12: memref<2x8x128xf32, #tpu.memory_space<vmem>>, %arg13: memref<8x128xf32, #tpu.memory_space<vmem>>, %arg14: memref<8x128xf32, #tpu.memory_space<vmem>>, %arg15: memref<8x128xf32, #tpu.memory_space<vmem>>, %arg16: memref<8x128xf32, #tpu.memory_space<vmem>>) attributes {dimension_semantics = [#tpu.dimension_semantics<arbitrary>], iteration_bounds = array<i64: 1>, scalar_prefetch = 0 : i64, scratch_operands = 4 : i64, tpu.core_type = #tpu.core_type<tc>, window_params = [{transform_indices = @transform_0, window_bounds = array<i64: 8, 8, 128>}, {transform_indices = @transform_1, window_bounds = array<i64: 8, 8, 128>}, {pipeline_mode = #tpu.pipeline_mode<synchronous>, transform_indices = @transform_2, window_bounds = array<i64: 128, 512>}, {pipeline_mode = #tpu.pipeline_mode<synchronous>, transform_indices = @transform_3, window_bounds = array<i64: 128, 512>}, {pipeline_mode = #tpu.pipeline_mode<synchronous>, transform_indices = @transform_4, window_bounds = array<i64: 128, 512>}, {pipeline_mode = #tpu.pipeline_mode<synchronous>, transform_indices = @transform_5, window_bounds = array<i64: 128, 512>}, {pipeline_mode = #tpu.pipeline_mode<synchronous>, transform_indices = @transform_6, window_bounds = array<i64: 1, 512>}, {pipeline_mode = #tpu.pipeline_mode<synchronous>, transform_indices = @transform_7, window_bounds = array<i64: 1, 512>}, {transform_indices = @transform_8, window_bounds = array<i64: 8, 8, 128>}, {transform_indices = @transform_9, window_bounds = array<i64: 8, 8, 128>}, {pipeline_mode = #tpu.pipeline_mode<synchronous>, transform_indices = @transform_10, window_bounds = array<i64: 2, 8, 128>}, {pipeline_mode = #tpu.pipeline_mode<synchronous>, transform_indices = @transform_11, window_bounds = array<i64: 2, 8, 128>}]} {
    %c0_i32 = arith.constant 0 : i32
    %0 = arith.cmpi eq, %arg0, %c0_i32 : i32
    %1 = arith.extui %0 : i1 to i32
    %c0_i32_0 = arith.constant 0 : i32
    %2 = arith.cmpi ne, %1, %c0_i32_0 : i32
    scf.if %2 {
      %cst_142 = arith.constant 0.000000e+00 : f32
      %526 = vector.broadcast %cst_142 : f32 to vector<8x128xf32>
      %c0_143 = arith.constant 0 : index
      %c0_144 = arith.constant 0 : index
      %527 = vector.load %arg13[%c0_143, %c0_144] : memref<8x128xf32, #tpu.memory_space<vmem>>, vector<8x128xf32>
      tpu.vector_store %arg13[%c0_143, %c0_144], %526 {strides = array<i32>} : memref<8x128xf32, #tpu.memory_space<vmem>>, vector<8x128xf32>,
      %cst_145 = arith.constant 0.000000e+00 : f32
      %528 = vector.broadcast %cst_145 : f32 to vector<8x128xf32>
      %c0_146 = arith.constant 0 : index
      %c0_147 = arith.constant 0 : index
      %529 = vector.load %arg14[%c0_146, %c0_147] : memref<8x128xf32, #tpu.memory_space<vmem>>, vector<8x128xf32>
      tpu.vector_store %arg14[%c0_146, %c0_147], %528 {strides = array<i32>} : memref<8x128xf32, #tpu.memory_space<vmem>>, vector<8x128xf32>,
      %cst_148 = arith.constant 0.000000e+00 : f32
      %530 = vector.broadcast %cst_148 : f32 to vector<8x128xf32>
      %c0_149 = arith.constant 0 : index
      %c0_150 = arith.constant 0 : index
      %531 = vector.load %arg15[%c0_149, %c0_150] : memref<8x128xf32, #tpu.memory_space<vmem>>, vector<8x128xf32>
      tpu.vector_store %arg15[%c0_149, %c0_150], %530 {strides = array<i32>} : memref<8x128xf32, #tpu.memory_space<vmem>>, vector<8x128xf32>,
      %cst_151 = arith.constant 0.000000e+00 : f32
      %532 = vector.broadcast %cst_151 : f32 to vector<8x128xf32>
      %c0_152 = arith.constant 0 : index
      %c0_153 = arith.constant 0 : index
      %533 = vector.load %arg16[%c0_152, %c0_153] : memref<8x128xf32, #tpu.memory_space<vmem>>, vector<8x128xf32>
      tpu.vector_store %arg16[%c0_152, %c0_153], %532 {strides = array<i32>} : memref<8x128xf32, #tpu.memory_space<vmem>>, vector<8x128xf32>,
    } else {
    }
    %c0 = arith.constant 0 : index
    %c0_1 = arith.constant 0 : index
    %c0_2 = arith.constant 0 : index
    %3 = vector.load %arg1[%c0, %c0_1, %c0_2] : memref<8x8x128xf32, #tpu.memory_space<vmem>>, vector<8x8x128xf32>
    %4 = vector.shape_cast %3 : vector<8x8x128xf32> to vector<64x128xf32>
    %c0_3 = arith.constant 0 : index
    %c0_4 = arith.constant 0 : index
    %5 = vector.load %arg3[%c0_3, %c0_4] : memref<128x512xf32, #tpu.memory_space<vmem>>, vector<128x512xf32>
    %cst = arith.constant dense<0.000000e+00> : vector<64x512xf32>
    %6 = tpu.matmul %4, %5, %cst {dimension_numbers = #tpu.dot_dimension_numbers<[1], [0], [0], [1], [0, 0, 1, 1], [], []>} : vector<64x128xf32>, vector<128x512xf32>, vector<64x512xf32> -> vector<64x512xf32>
    %c0_5 = arith.constant 0 : index
    %c0_6 = arith.constant 0 : index
    %7 = vector.load %arg7[%c0_5, %c0_6] : memref<1x512xf32, #tpu.memory_space<vmem>>, vector<1x512xf32>
    %8 = vector.broadcast %7 : vector<1x512xf32> to vector<64x512xf32>
    %9 = arith.addf %6, %8 : vector<64x512xf32>
    %c0_7 = arith.constant 0 : index
    %c0_8 = arith.constant 0 : index
    %c0_9 = arith.constant 0 : index
    %10 = vector.load %arg2[%c0_7, %c0_8, %c0_9] : memref<8x8x128xf32, #tpu.memory_space<vmem>>, vector<8x8x128xf32>
    %11 = vector.shape_cast %10 : vector<8x8x128xf32> to vector<64x128xf32>
    %c0_10 = arith.constant 0 : index
    %c0_11 = arith.constant 0 : index
    %12 = vector.load %arg4[%c0_10, %c0_11] : memref<128x512xf32, #tpu.memory_space<vmem>>, vector<128x512xf32>
    %cst_12 = arith.constant dense<0.000000e+00> : vector<64x512xf32>
    %13 = tpu.matmul %11, %12, %cst_12 {dimension_numbers = #tpu.dot_dimension_numbers<[1], [0], [0], [1], [0, 0, 1, 1], [], []>} : vector<64x128xf32>, vector<128x512xf32>, vector<64x512xf32> -> vector<64x512xf32>
    %c0_13 = arith.constant 0 : index
    %c0_14 = arith.constant 0 : index
    %14 = vector.load %arg8[%c0_13, %c0_14] : memref<1x512xf32, #tpu.memory_space<vmem>>, vector<1x512xf32>
    %15 = vector.broadcast %14 : vector<1x512xf32> to vector<64x512xf32>
    %16 = arith.addf %13, %15 : vector<64x512xf32>
    %c0_15 = arith.constant 0 : index
    %c0_16 = arith.constant 0 : index
    %17 = vector.load %arg5[%c0_15, %c0_16] : memref<128x512xf32, #tpu.memory_space<vmem>>, vector<128x512xf32>
    %c0_17 = arith.constant 0 : index
    %c0_18 = arith.constant 0 : index
    %18 = vector.load %arg6[%c0_17, %c0_18] : memref<128x512xf32, #tpu.memory_space<vmem>>, vector<128x512xf32>
    %c0_19 = arith.constant 0 : index
    %c0_20 = arith.constant 0 : index
    %19 = vector.load %arg13[%c0_19, %c0_20] : memref<8x128xf32, #tpu.memory_space<vmem>>, vector<8x128xf32>
    %c0_21 = arith.constant 0 : index
    %c0_22 = arith.constant 0 : index
    %20 = vector.load %arg14[%c0_21, %c0_22] : memref<8x128xf32, #tpu.memory_space<vmem>>, vector<8x128xf32>
    %c0_23 = arith.constant 0 : index
    %c0_24 = arith.constant 0 : index
    %21 = vector.load %arg15[%c0_23, %c0_24] : memref<8x128xf32, #tpu.memory_space<vmem>>, vector<8x128xf32>
    %c0_25 = arith.constant 0 : index
    %c0_26 = arith.constant 0 : index
    %22 = vector.load %arg16[%c0_25, %c0_26] : memref<8x128xf32, #tpu.memory_space<vmem>>, vector<8x128xf32>
    %23 = vector.extract_strided_slice %9 {offsets = [0, 0], sizes = [8, 512], strides = [1, 1]} : vector<64x512xf32> to vector<8x512xf32>
    %cst_27 = arith.constant dense<0.000000e+00> : vector<8x512xf32>
    %24 = tpu.matmul %19, %17, %cst_27 {dimension_numbers = #tpu.dot_dimension_numbers<[1], [0], [0], [1], [0, 0, 1, 1], [], []>} : vector<8x128xf32>, vector<128x512xf32>, vector<8x512xf32> -> vector<8x512xf32>
    %25 = arith.addf %23, %24 : vector<8x512xf32>
    %26 = vector.extract_strided_slice %16 {offsets = [56, 0], sizes = [8, 512], strides = [1, 1]} : vector<64x512xf32> to vector<8x512xf32>
    %cst_28 = arith.constant dense<0.000000e+00> : vector<8x512xf32>
    %27 = tpu.matmul %21, %18, %cst_28 {dimension_numbers = #tpu.dot_dimension_numbers<[1], [0], [0], [1], [0, 0, 1, 1], [], []>} : vector<8x128xf32>, vector<128x512xf32>, vector<8x512xf32> -> vector<8x512xf32>
    %28 = arith.addf %26, %27 : vector<8x512xf32>
    %29 = vector.extract_strided_slice %25 {offsets = [0, 0], sizes = [8, 128], strides = [1, 1]} : vector<8x512xf32> to vector<8x128xf32>
    %30 = arith.negf %29 : vector<8x128xf32>
    %31 = math.exp %30 : vector<8x128xf32>
    %cst_29 = arith.constant 1.000000e+00 : f32
    %32 = vector.broadcast %cst_29 : f32 to vector<8x128xf32>
    %33 = arith.addf %32, %31 : vector<8x128xf32>
    %34 = arith.divf %32, %33 : vector<8x128xf32>
    %35 = vector.extract_strided_slice %25 {offsets = [0, 128], sizes = [8, 128], strides = [1, 1]} : vector<8x512xf32> to vector<8x128xf32>
    %36 = arith.negf %35 : vector<8x128xf32>
    %37 = math.exp %36 : vector<8x128xf32>
    %cst_30 = arith.constant 1.000000e+00 : f32
    %38 = vector.broadcast %cst_30 : f32 to vector<8x128xf32>
    %39 = arith.addf %38, %37 : vector<8x128xf32>
    %40 = arith.divf %38, %39 : vector<8x128xf32>
    %41 = vector.extract_strided_slice %25 {offsets = [0, 256], sizes = [8, 128], strides = [1, 1]} : vector<8x512xf32> to vector<8x128xf32>
    %42 = math.tanh %41 : vector<8x128xf32>
    %43 = vector.extract_strided_slice %25 {offsets = [0, 384], sizes = [8, 128], strides = [1, 1]} : vector<8x512xf32> to vector<8x128xf32>
    %44 = arith.negf %43 : vector<8x128xf32>
    %45 = math.exp %44 : vector<8x128xf32>
    %cst_31 = arith.constant 1.000000e+00 : f32
    %46 = vector.broadcast %cst_31 : f32 to vector<8x128xf32>
    %47 = arith.addf %46, %45 : vector<8x128xf32>
    %48 = arith.divf %46, %47 : vector<8x128xf32>
    %49 = arith.mulf %40, %20 : vector<8x128xf32>
    %50 = arith.mulf %34, %42 : vector<8x128xf32>
    %51 = arith.addf %49, %50 : vector<8x128xf32>
    %52 = math.tanh %51 : vector<8x128xf32>
    %53 = arith.mulf %48, %52 : vector<8x128xf32>
    %54 = vector.extract_strided_slice %28 {offsets = [0, 0], sizes = [8, 128], strides = [1, 1]} : vector<8x512xf32> to vector<8x128xf32>
    %55 = arith.negf %54 : vector<8x128xf32>
    %56 = math.exp %55 : vector<8x128xf32>
    %cst_32 = arith.constant 1.000000e+00 : f32
    %57 = vector.broadcast %cst_32 : f32 to vector<8x128xf32>
    %58 = arith.addf %57, %56 : vector<8x128xf32>
    %59 = arith.divf %57, %58 : vector<8x128xf32>
    %60 = vector.extract_strided_slice %28 {offsets = [0, 128], sizes = [8, 128], strides = [1, 1]} : vector<8x512xf32> to vector<8x128xf32>
    %61 = arith.negf %60 : vector<8x128xf32>
    %62 = math.exp %61 : vector<8x128xf32>
    %cst_33 = arith.constant 1.000000e+00 : f32
    %63 = vector.broadcast %cst_33 : f32 to vector<8x128xf32>
    %64 = arith.addf %63, %62 : vector<8x128xf32>
    %65 = arith.divf %63, %64 : vector<8x128xf32>
    %66 = vector.extract_strided_slice %28 {offsets = [0, 256], sizes = [8, 128], strides = [1, 1]} : vector<8x512xf32> to vector<8x128xf32>
    %67 = math.tanh %66 : vector<8x128xf32>
    %68 = vector.extract_strided_slice %28 {offsets = [0, 384], sizes = [8, 128], strides = [1, 1]} : vector<8x512xf32> to vector<8x128xf32>
    %69 = arith.negf %68 : vector<8x128xf32>
    %70 = math.exp %69 : vector<8x128xf32>
    %cst_34 = arith.constant 1.000000e+00 : f32
    %71 = vector.broadcast %cst_34 : f32 to vector<8x128xf32>
    %72 = arith.addf %71, %70 : vector<8x128xf32>
    %73 = arith.divf %71, %72 : vector<8x128xf32>
    %74 = arith.mulf %65, %22 : vector<8x128xf32>
    %75 = arith.mulf %59, %67 : vector<8x128xf32>
    %76 = arith.addf %74, %75 : vector<8x128xf32>
    %77 = math.tanh %76 : vector<8x128xf32>
    %78 = arith.mulf %73, %77 : vector<8x128xf32>
    %c0_35 = arith.constant 0 : index
    %c0_36 = arith.constant 0 : index
    %c0_37 = arith.constant 0 : index
    %79 = vector.load %arg9[%c0_35, %c0_36, %c0_37] : memref<8x8x128xf32, #tpu.memory_space<vmem>>, vector<1x8x128xf32>
    %80 = vector.shape_cast %79 : vector<1x8x128xf32> to vector<8x128xf32>
    %81 = vector.shape_cast %53 : vector<8x128xf32> to vector<1x8x128xf32>
    tpu.vector_store %arg9[%c0_35, %c0_36, %c0_37], %81 {strides = array<i32>} : memref<8x8x128xf32, #tpu.memory_space<vmem>>, vector<1x8x128xf32>,
    %c7 = arith.constant 7 : index
    %c0_38 = arith.constant 0 : index
    %c0_39 = arith.constant 0 : index
    %82 = vector.load %arg10[%c7, %c0_38, %c0_39] : memref<8x8x128xf32, #tpu.memory_space<vmem>>, vector<1x8x128xf32>
    %83 = vector.shape_cast %82 : vector<1x8x128xf32> to vector<8x128xf32>
    %84 = vector.shape_cast %78 : vector<8x128xf32> to vector<1x8x128xf32>
    tpu.vector_store %arg10[%c7, %c0_38, %c0_39], %84 {strides = array<i32>} : memref<8x8x128xf32, #tpu.memory_space<vmem>>, vector<1x8x128xf32>,
    %85 = vector.extract_strided_slice %9 {offsets = [8, 0], sizes = [8, 512], strides = [1, 1]} : vector<64x512xf32> to vector<8x512xf32>
    %cst_40 = arith.constant dense<0.000000e+00> : vector<8x512xf32>
    %86 = tpu.matmul %53, %17, %cst_40 {dimension_numbers = #tpu.dot_dimension_numbers<[1], [0], [0], [1], [0, 0, 1, 1], [], []>} : vector<8x128xf32>, vector<128x512xf32>, vector<8x512xf32> -> vector<8x512xf32>
    %87 = arith.addf %85, %86 : vector<8x512xf32>
    %88 = vector.extract_strided_slice %16 {offsets = [48, 0], sizes = [8, 512], strides = [1, 1]} : vector<64x512xf32> to vector<8x512xf32>
    %cst_41 = arith.constant dense<0.000000e+00> : vector<8x512xf32>
    %89 = tpu.matmul %78, %18, %cst_41 {dimension_numbers = #tpu.dot_dimension_numbers<[1], [0], [0], [1], [0, 0, 1, 1], [], []>} : vector<8x128xf32>, vector<128x512xf32>, vector<8x512xf32> -> vector<8x512xf32>
    %90 = arith.addf %88, %89 : vector<8x512xf32>
    %91 = vector.extract_strided_slice %87 {offsets = [0, 0], sizes = [8, 128], strides = [1, 1]} : vector<8x512xf32> to vector<8x128xf32>
    %92 = arith.negf %91 : vector<8x128xf32>
    %93 = math.exp %92 : vector<8x128xf32>
    %cst_42 = arith.constant 1.000000e+00 : f32
    %94 = vector.broadcast %cst_42 : f32 to vector<8x128xf32>
    %95 = arith.addf %94, %93 : vector<8x128xf32>
    %96 = arith.divf %94, %95 : vector<8x128xf32>
    %97 = vector.extract_strided_slice %87 {offsets = [0, 128], sizes = [8, 128], strides = [1, 1]} : vector<8x512xf32> to vector<8x128xf32>
    %98 = arith.negf %97 : vector<8x128xf32>
    %99 = math.exp %98 : vector<8x128xf32>
    %cst_43 = arith.constant 1.000000e+00 : f32
    %100 = vector.broadcast %cst_43 : f32 to vector<8x128xf32>
    %101 = arith.addf %100, %99 : vector<8x128xf32>
    %102 = arith.divf %100, %101 : vector<8x128xf32>
    %103 = vector.extract_strided_slice %87 {offsets = [0, 256], sizes = [8, 128], strides = [1, 1]} : vector<8x512xf32> to vector<8x128xf32>
    %104 = math.tanh %103 : vector<8x128xf32>
    %105 = vector.extract_strided_slice %87 {offsets = [0, 384], sizes = [8, 128], strides = [1, 1]} : vector<8x512xf32> to vector<8x128xf32>
    %106 = arith.negf %105 : vector<8x128xf32>
    %107 = math.exp %106 : vector<8x128xf32>
    %cst_44 = arith.constant 1.000000e+00 : f32
    %108 = vector.broadcast %cst_44 : f32 to vector<8x128xf32>
    %109 = arith.addf %108, %107 : vector<8x128xf32>
    %110 = arith.divf %108, %109 : vector<8x128xf32>
    %111 = arith.mulf %102, %51 : vector<8x128xf32>
    %112 = arith.mulf %96, %104 : vector<8x128xf32>
    %113 = arith.addf %111, %112 : vector<8x128xf32>
    %114 = math.tanh %113 : vector<8x128xf32>
    %115 = arith.mulf %110, %114 : vector<8x128xf32>
    %116 = vector.extract_strided_slice %90 {offsets = [0, 0], sizes = [8, 128], strides = [1, 1]} : vector<8x512xf32> to vector<8x128xf32>
    %117 = arith.negf %116 : vector<8x128xf32>
    %118 = math.exp %117 : vector<8x128xf32>
    %cst_45 = arith.constant 1.000000e+00 : f32
    %119 = vector.broadcast %cst_45 : f32 to vector<8x128xf32>
    %120 = arith.addf %119, %118 : vector<8x128xf32>
    %121 = arith.divf %119, %120 : vector<8x128xf32>
    %122 = vector.extract_strided_slice %90 {offsets = [0, 128], sizes = [8, 128], strides = [1, 1]} : vector<8x512xf32> to vector<8x128xf32>
    %123 = arith.negf %122 : vector<8x128xf32>
    %124 = math.exp %123 : vector<8x128xf32>
    %cst_46 = arith.constant 1.000000e+00 : f32
    %125 = vector.broadcast %cst_46 : f32 to vector<8x128xf32>
    %126 = arith.addf %125, %124 : vector<8x128xf32>
    %127 = arith.divf %125, %126 : vector<8x128xf32>
    %128 = vector.extract_strided_slice %90 {offsets = [0, 256], sizes = [8, 128], strides = [1, 1]} : vector<8x512xf32> to vector<8x128xf32>
    %129 = math.tanh %128 : vector<8x128xf32>
    %130 = vector.extract_strided_slice %90 {offsets = [0, 384], sizes = [8, 128], strides = [1, 1]} : vector<8x512xf32> to vector<8x128xf32>
    %131 = arith.negf %130 : vector<8x128xf32>
    %132 = math.exp %131 : vector<8x128xf32>
    %cst_47 = arith.constant 1.000000e+00 : f32
    %133 = vector.broadcast %cst_47 : f32 to vector<8x128xf32>
    %134 = arith.addf %133, %132 : vector<8x128xf32>
    %135 = arith.divf %133, %134 : vector<8x128xf32>
    %136 = arith.mulf %127, %76 : vector<8x128xf32>
    %137 = arith.mulf %121, %129 : vector<8x128xf32>
    %138 = arith.addf %136, %137 : vector<8x128xf32>
    %139 = math.tanh %138 : vector<8x128xf32>
    %140 = arith.mulf %135, %139 : vector<8x128xf32>
    %c1 = arith.constant 1 : index
    %c0_48 = arith.constant 0 : index
    %c0_49 = arith.constant 0 : index
    %141 = vector.load %arg9[%c1, %c0_48, %c0_49] : memref<8x8x128xf32, #tpu.memory_space<vmem>>, vector<1x8x128xf32>
    %142 = vector.shape_cast %141 : vector<1x8x128xf32> to vector<8x128xf32>
    %143 = vector.shape_cast %115 : vector<8x128xf32> to vector<1x8x128xf32>
    tpu.vector_store %arg9[%c1, %c0_48, %c0_49], %143 {strides = array<i32>} : memref<8x8x128xf32, #tpu.memory_space<vmem>>, vector<1x8x128xf32>,
    %c6 = arith.constant 6 : index
    %c0_50 = arith.constant 0 : index
    %c0_51 = arith.constant 0 : index
    %144 = vector.load %arg10[%c6, %c0_50, %c0_51] : memref<8x8x128xf32, #tpu.memory_space<vmem>>, vector<1x8x128xf32>
    %145 = vector.shape_cast %144 : vector<1x8x128xf32> to vector<8x128xf32>
    %146 = vector.shape_cast %140 : vector<8x128xf32> to vector<1x8x128xf32>
    tpu.vector_store %arg10[%c6, %c0_50, %c0_51], %146 {strides = array<i32>} : memref<8x8x128xf32, #tpu.memory_space<vmem>>, vector<1x8x128xf32>,
    %147 = vector.extract_strided_slice %9 {offsets = [16, 0], sizes = [8, 512], strides = [1, 1]} : vector<64x512xf32> to vector<8x512xf32>
    %cst_52 = arith.constant dense<0.000000e+00> : vector<8x512xf32>
    %148 = tpu.matmul %115, %17, %cst_52 {dimension_numbers = #tpu.dot_dimension_numbers<[1], [0], [0], [1], [0, 0, 1, 1], [], []>} : vector<8x128xf32>, vector<128x512xf32>, vector<8x512xf32> -> vector<8x512xf32>
    %149 = arith.addf %147, %148 : vector<8x512xf32>
    %150 = vector.extract_strided_slice %16 {offsets = [40, 0], sizes = [8, 512], strides = [1, 1]} : vector<64x512xf32> to vector<8x512xf32>
    %cst_53 = arith.constant dense<0.000000e+00> : vector<8x512xf32>
    %151 = tpu.matmul %140, %18, %cst_53 {dimension_numbers = #tpu.dot_dimension_numbers<[1], [0], [0], [1], [0, 0, 1, 1], [], []>} : vector<8x128xf32>, vector<128x512xf32>, vector<8x512xf32> -> vector<8x512xf32>
    %152 = arith.addf %150, %151 : vector<8x512xf32>
    %153 = vector.extract_strided_slice %149 {offsets = [0, 0], sizes = [8, 128], strides = [1, 1]} : vector<8x512xf32> to vector<8x128xf32>
    %154 = arith.negf %153 : vector<8x128xf32>
    %155 = math.exp %154 : vector<8x128xf32>
    %cst_54 = arith.constant 1.000000e+00 : f32
    %156 = vector.broadcast %cst_54 : f32 to vector<8x128xf32>
    %157 = arith.addf %156, %155 : vector<8x128xf32>
    %158 = arith.divf %156, %157 : vector<8x128xf32>
    %159 = vector.extract_strided_slice %149 {offsets = [0, 128], sizes = [8, 128], strides = [1, 1]} : vector<8x512xf32> to vector<8x128xf32>
    %160 = arith.negf %159 : vector<8x128xf32>
    %161 = math.exp %160 : vector<8x128xf32>
    %cst_55 = arith.constant 1.000000e+00 : f32
    %162 = vector.broadcast %cst_55 : f32 to vector<8x128xf32>
    %163 = arith.addf %162, %161 : vector<8x128xf32>
    %164 = arith.divf %162, %163 : vector<8x128xf32>
    %165 = vector.extract_strided_slice %149 {offsets = [0, 256], sizes = [8, 128], strides = [1, 1]} : vector<8x512xf32> to vector<8x128xf32>
    %166 = math.tanh %165 : vector<8x128xf32>
    %167 = vector.extract_strided_slice %149 {offsets = [0, 384], sizes = [8, 128], strides = [1, 1]} : vector<8x512xf32> to vector<8x128xf32>
    %168 = arith.negf %167 : vector<8x128xf32>
    %169 = math.exp %168 : vector<8x128xf32>
    %cst_56 = arith.constant 1.000000e+00 : f32
    %170 = vector.broadcast %cst_56 : f32 to vector<8x128xf32>
    %171 = arith.addf %170, %169 : vector<8x128xf32>
    %172 = arith.divf %170, %171 : vector<8x128xf32>
    %173 = arith.mulf %164, %113 : vector<8x128xf32>
    %174 = arith.mulf %158, %166 : vector<8x128xf32>
    %175 = arith.addf %173, %174 : vector<8x128xf32>
    %176 = math.tanh %175 : vector<8x128xf32>
    %177 = arith.mulf %172, %176 : vector<8x128xf32>
    %178 = vector.extract_strided_slice %152 {offsets = [0, 0], sizes = [8, 128], strides = [1, 1]} : vector<8x512xf32> to vector<8x128xf32>
    %179 = arith.negf %178 : vector<8x128xf32>
    %180 = math.exp %179 : vector<8x128xf32>
    %cst_57 = arith.constant 1.000000e+00 : f32
    %181 = vector.broadcast %cst_57 : f32 to vector<8x128xf32>
    %182 = arith.addf %181, %180 : vector<8x128xf32>
    %183 = arith.divf %181, %182 : vector<8x128xf32>
    %184 = vector.extract_strided_slice %152 {offsets = [0, 128], sizes = [8, 128], strides = [1, 1]} : vector<8x512xf32> to vector<8x128xf32>
    %185 = arith.negf %184 : vector<8x128xf32>
    %186 = math.exp %185 : vector<8x128xf32>
    %cst_58 = arith.constant 1.000000e+00 : f32
    %187 = vector.broadcast %cst_58 : f32 to vector<8x128xf32>
    %188 = arith.addf %187, %186 : vector<8x128xf32>
    %189 = arith.divf %187, %188 : vector<8x128xf32>
    %190 = vector.extract_strided_slice %152 {offsets = [0, 256], sizes = [8, 128], strides = [1, 1]} : vector<8x512xf32> to vector<8x128xf32>
    %191 = math.tanh %190 : vector<8x128xf32>
    %192 = vector.extract_strided_slice %152 {offsets = [0, 384], sizes = [8, 128], strides = [1, 1]} : vector<8x512xf32> to vector<8x128xf32>
    %193 = arith.negf %192 : vector<8x128xf32>
    %194 = math.exp %193 : vector<8x128xf32>
    %cst_59 = arith.constant 1.000000e+00 : f32
    %195 = vector.broadcast %cst_59 : f32 to vector<8x128xf32>
    %196 = arith.addf %195, %194 : vector<8x128xf32>
    %197 = arith.divf %195, %196 : vector<8x128xf32>
    %198 = arith.mulf %189, %138 : vector<8x128xf32>
    %199 = arith.mulf %183, %191 : vector<8x128xf32>
    %200 = arith.addf %198, %199 : vector<8x128xf32>
    %201 = math.tanh %200 : vector<8x128xf32>
    %202 = arith.mulf %197, %201 : vector<8x128xf32>
    %c2 = arith.constant 2 : index
    %c0_60 = arith.constant 0 : index
    %c0_61 = arith.constant 0 : index
    %203 = vector.load %arg9[%c2, %c0_60, %c0_61] : memref<8x8x128xf32, #tpu.memory_space<vmem>>, vector<1x8x128xf32>
    %204 = vector.shape_cast %203 : vector<1x8x128xf32> to vector<8x128xf32>
    %205 = vector.shape_cast %177 : vector<8x128xf32> to vector<1x8x128xf32>
    tpu.vector_store %arg9[%c2, %c0_60, %c0_61], %205 {strides = array<i32>} : memref<8x8x128xf32, #tpu.memory_space<vmem>>, vector<1x8x128xf32>,
    %c5 = arith.constant 5 : index
    %c0_62 = arith.constant 0 : index
    %c0_63 = arith.constant 0 : index
    %206 = vector.load %arg10[%c5, %c0_62, %c0_63] : memref<8x8x128xf32, #tpu.memory_space<vmem>>, vector<1x8x128xf32>
    %207 = vector.shape_cast %206 : vector<1x8x128xf32> to vector<8x128xf32>
    %208 = vector.shape_cast %202 : vector<8x128xf32> to vector<1x8x128xf32>
    tpu.vector_store %arg10[%c5, %c0_62, %c0_63], %208 {strides = array<i32>} : memref<8x8x128xf32, #tpu.memory_space<vmem>>, vector<1x8x128xf32>,
    %209 = vector.extract_strided_slice %9 {offsets = [24, 0], sizes = [8, 512], strides = [1, 1]} : vector<64x512xf32> to vector<8x512xf32>
    %cst_64 = arith.constant dense<0.000000e+00> : vector<8x512xf32>
    %210 = tpu.matmul %177, %17, %cst_64 {dimension_numbers = #tpu.dot_dimension_numbers<[1], [0], [0], [1], [0, 0, 1, 1], [], []>} : vector<8x128xf32>, vector<128x512xf32>, vector<8x512xf32> -> vector<8x512xf32>
    %211 = arith.addf %209, %210 : vector<8x512xf32>
    %212 = vector.extract_strided_slice %16 {offsets = [32, 0], sizes = [8, 512], strides = [1, 1]} : vector<64x512xf32> to vector<8x512xf32>
    %cst_65 = arith.constant dense<0.000000e+00> : vector<8x512xf32>
    %213 = tpu.matmul %202, %18, %cst_65 {dimension_numbers = #tpu.dot_dimension_numbers<[1], [0], [0], [1], [0, 0, 1, 1], [], []>} : vector<8x128xf32>, vector<128x512xf32>, vector<8x512xf32> -> vector<8x512xf32>
    %214 = arith.addf %212, %213 : vector<8x512xf32>
    %215 = vector.extract_strided_slice %211 {offsets = [0, 0], sizes = [8, 128], strides = [1, 1]} : vector<8x512xf32> to vector<8x128xf32>
    %216 = arith.negf %215 : vector<8x128xf32>
    %217 = math.exp %216 : vector<8x128xf32>
    %cst_66 = arith.constant 1.000000e+00 : f32
    %218 = vector.broadcast %cst_66 : f32 to vector<8x128xf32>
    %219 = arith.addf %218, %217 : vector<8x128xf32>
    %220 = arith.divf %218, %219 : vector<8x128xf32>
    %221 = vector.extract_strided_slice %211 {offsets = [0, 128], sizes = [8, 128], strides = [1, 1]} : vector<8x512xf32> to vector<8x128xf32>
    %222 = arith.negf %221 : vector<8x128xf32>
    %223 = math.exp %222 : vector<8x128xf32>
    %cst_67 = arith.constant 1.000000e+00 : f32
    %224 = vector.broadcast %cst_67 : f32 to vector<8x128xf32>
    %225 = arith.addf %224, %223 : vector<8x128xf32>
    %226 = arith.divf %224, %225 : vector<8x128xf32>
    %227 = vector.extract_strided_slice %211 {offsets = [0, 256], sizes = [8, 128], strides = [1, 1]} : vector<8x512xf32> to vector<8x128xf32>
    %228 = math.tanh %227 : vector<8x128xf32>
    %229 = vector.extract_strided_slice %211 {offsets = [0, 384], sizes = [8, 128], strides = [1, 1]} : vector<8x512xf32> to vector<8x128xf32>
    %230 = arith.negf %229 : vector<8x128xf32>
    %231 = math.exp %230 : vector<8x128xf32>
    %cst_68 = arith.constant 1.000000e+00 : f32
    %232 = vector.broadcast %cst_68 : f32 to vector<8x128xf32>
    %233 = arith.addf %232, %231 : vector<8x128xf32>
    %234 = arith.divf %232, %233 : vector<8x128xf32>
    %235 = arith.mulf %226, %175 : vector<8x128xf32>
    %236 = arith.mulf %220, %228 : vector<8x128xf32>
    %237 = arith.addf %235, %236 : vector<8x128xf32>
    %238 = math.tanh %237 : vector<8x128xf32>
    %239 = arith.mulf %234, %238 : vector<8x128xf32>
    %240 = vector.extract_strided_slice %214 {offsets = [0, 0], sizes = [8, 128], strides = [1, 1]} : vector<8x512xf32> to vector<8x128xf32>
    %241 = arith.negf %240 : vector<8x128xf32>
    %242 = math.exp %241 : vector<8x128xf32>
    %cst_69 = arith.constant 1.000000e+00 : f32
    %243 = vector.broadcast %cst_69 : f32 to vector<8x128xf32>
    %244 = arith.addf %243, %242 : vector<8x128xf32>
    %245 = arith.divf %243, %244 : vector<8x128xf32>
    %246 = vector.extract_strided_slice %214 {offsets = [0, 128], sizes = [8, 128], strides = [1, 1]} : vector<8x512xf32> to vector<8x128xf32>
    %247 = arith.negf %246 : vector<8x128xf32>
    %248 = math.exp %247 : vector<8x128xf32>
    %cst_70 = arith.constant 1.000000e+00 : f32
    %249 = vector.broadcast %cst_70 : f32 to vector<8x128xf32>
    %250 = arith.addf %249, %248 : vector<8x128xf32>
    %251 = arith.divf %249, %250 : vector<8x128xf32>
    %252 = vector.extract_strided_slice %214 {offsets = [0, 256], sizes = [8, 128], strides = [1, 1]} : vector<8x512xf32> to vector<8x128xf32>
    %253 = math.tanh %252 : vector<8x128xf32>
    %254 = vector.extract_strided_slice %214 {offsets = [0, 384], sizes = [8, 128], strides = [1, 1]} : vector<8x512xf32> to vector<8x128xf32>
    %255 = arith.negf %254 : vector<8x128xf32>
    %256 = math.exp %255 : vector<8x128xf32>
    %cst_71 = arith.constant 1.000000e+00 : f32
    %257 = vector.broadcast %cst_71 : f32 to vector<8x128xf32>
    %258 = arith.addf %257, %256 : vector<8x128xf32>
    %259 = arith.divf %257, %258 : vector<8x128xf32>
    %260 = arith.mulf %251, %200 : vector<8x128xf32>
    %261 = arith.mulf %245, %253 : vector<8x128xf32>
    %262 = arith.addf %260, %261 : vector<8x128xf32>
    %263 = math.tanh %262 : vector<8x128xf32>
    %264 = arith.mulf %259, %263 : vector<8x128xf32>
    %c3 = arith.constant 3 : index
    %c0_72 = arith.constant 0 : index
    %c0_73 = arith.constant 0 : index
    %265 = vector.load %arg9[%c3, %c0_72, %c0_73] : memref<8x8x128xf32, #tpu.memory_space<vmem>>, vector<1x8x128xf32>
    %266 = vector.shape_cast %265 : vector<1x8x128xf32> to vector<8x128xf32>
    %267 = vector.shape_cast %239 : vector<8x128xf32> to vector<1x8x128xf32>
    tpu.vector_store %arg9[%c3, %c0_72, %c0_73], %267 {strides = array<i32>} : memref<8x8x128xf32, #tpu.memory_space<vmem>>, vector<1x8x128xf32>,
    %c4 = arith.constant 4 : index
    %c0_74 = arith.constant 0 : index
    %c0_75 = arith.constant 0 : index
    %268 = vector.load %arg10[%c4, %c0_74, %c0_75] : memref<8x8x128xf32, #tpu.memory_space<vmem>>, vector<1x8x128xf32>
    %269 = vector.shape_cast %268 : vector<1x8x128xf32> to vector<8x128xf32>
    %270 = vector.shape_cast %264 : vector<8x128xf32> to vector<1x8x128xf32>
    tpu.vector_store %arg10[%c4, %c0_74, %c0_75], %270 {strides = array<i32>} : memref<8x8x128xf32, #tpu.memory_space<vmem>>, vector<1x8x128xf32>,
    %271 = vector.extract_strided_slice %9 {offsets = [32, 0], sizes = [8, 512], strides = [1, 1]} : vector<64x512xf32> to vector<8x512xf32>
    %cst_76 = arith.constant dense<0.000000e+00> : vector<8x512xf32>
    %272 = tpu.matmul %239, %17, %cst_76 {dimension_numbers = #tpu.dot_dimension_numbers<[1], [0], [0], [1], [0, 0, 1, 1], [], []>} : vector<8x128xf32>, vector<128x512xf32>, vector<8x512xf32> -> vector<8x512xf32>
    %273 = arith.addf %271, %272 : vector<8x512xf32>
    %274 = vector.extract_strided_slice %16 {offsets = [24, 0], sizes = [8, 512], strides = [1, 1]} : vector<64x512xf32> to vector<8x512xf32>
    %cst_77 = arith.constant dense<0.000000e+00> : vector<8x512xf32>
    %275 = tpu.matmul %264, %18, %cst_77 {dimension_numbers = #tpu.dot_dimension_numbers<[1], [0], [0], [1], [0, 0, 1, 1], [], []>} : vector<8x128xf32>, vector<128x512xf32>, vector<8x512xf32> -> vector<8x512xf32>
    %276 = arith.addf %274, %275 : vector<8x512xf32>
    %277 = vector.extract_strided_slice %273 {offsets = [0, 0], sizes = [8, 128], strides = [1, 1]} : vector<8x512xf32> to vector<8x128xf32>
    %278 = arith.negf %277 : vector<8x128xf32>
    %279 = math.exp %278 : vector<8x128xf32>
    %cst_78 = arith.constant 1.000000e+00 : f32
    %280 = vector.broadcast %cst_78 : f32 to vector<8x128xf32>
    %281 = arith.addf %280, %279 : vector<8x128xf32>
    %282 = arith.divf %280, %281 : vector<8x128xf32>
    %283 = vector.extract_strided_slice %273 {offsets = [0, 128], sizes = [8, 128], strides = [1, 1]} : vector<8x512xf32> to vector<8x128xf32>
    %284 = arith.negf %283 : vector<8x128xf32>
    %285 = math.exp %284 : vector<8x128xf32>
    %cst_79 = arith.constant 1.000000e+00 : f32
    %286 = vector.broadcast %cst_79 : f32 to vector<8x128xf32>
    %287 = arith.addf %286, %285 : vector<8x128xf32>
    %288 = arith.divf %286, %287 : vector<8x128xf32>
    %289 = vector.extract_strided_slice %273 {offsets = [0, 256], sizes = [8, 128], strides = [1, 1]} : vector<8x512xf32> to vector<8x128xf32>
    %290 = math.tanh %289 : vector<8x128xf32>
    %291 = vector.extract_strided_slice %273 {offsets = [0, 384], sizes = [8, 128], strides = [1, 1]} : vector<8x512xf32> to vector<8x128xf32>
    %292 = arith.negf %291 : vector<8x128xf32>
    %293 = math.exp %292 : vector<8x128xf32>
    %cst_80 = arith.constant 1.000000e+00 : f32
    %294 = vector.broadcast %cst_80 : f32 to vector<8x128xf32>
    %295 = arith.addf %294, %293 : vector<8x128xf32>
    %296 = arith.divf %294, %295 : vector<8x128xf32>
    %297 = arith.mulf %288, %237 : vector<8x128xf32>
    %298 = arith.mulf %282, %290 : vector<8x128xf32>
    %299 = arith.addf %297, %298 : vector<8x128xf32>
    %300 = math.tanh %299 : vector<8x128xf32>
    %301 = arith.mulf %296, %300 : vector<8x128xf32>
    %302 = vector.extract_strided_slice %276 {offsets = [0, 0], sizes = [8, 128], strides = [1, 1]} : vector<8x512xf32> to vector<8x128xf32>
    %303 = arith.negf %302 : vector<8x128xf32>
    %304 = math.exp %303 : vector<8x128xf32>
    %cst_81 = arith.constant 1.000000e+00 : f32
    %305 = vector.broadcast %cst_81 : f32 to vector<8x128xf32>
    %306 = arith.addf %305, %304 : vector<8x128xf32>
    %307 = arith.divf %305, %306 : vector<8x128xf32>
    %308 = vector.extract_strided_slice %276 {offsets = [0, 128], sizes = [8, 128], strides = [1, 1]} : vector<8x512xf32> to vector<8x128xf32>
    %309 = arith.negf %308 : vector<8x128xf32>
    %310 = math.exp %309 : vector<8x128xf32>
    %cst_82 = arith.constant 1.000000e+00 : f32
    %311 = vector.broadcast %cst_82 : f32 to vector<8x128xf32>
    %312 = arith.addf %311, %310 : vector<8x128xf32>
    %313 = arith.divf %311, %312 : vector<8x128xf32>
    %314 = vector.extract_strided_slice %276 {offsets = [0, 256], sizes = [8, 128], strides = [1, 1]} : vector<8x512xf32> to vector<8x128xf32>
    %315 = math.tanh %314 : vector<8x128xf32>
    %316 = vector.extract_strided_slice %276 {offsets = [0, 384], sizes = [8, 128], strides = [1, 1]} : vector<8x512xf32> to vector<8x128xf32>
    %317 = arith.negf %316 : vector<8x128xf32>
    %318 = math.exp %317 : vector<8x128xf32>
    %cst_83 = arith.constant 1.000000e+00 : f32
    %319 = vector.broadcast %cst_83 : f32 to vector<8x128xf32>
    %320 = arith.addf %319, %318 : vector<8x128xf32>
    %321 = arith.divf %319, %320 : vector<8x128xf32>
    %322 = arith.mulf %313, %262 : vector<8x128xf32>
    %323 = arith.mulf %307, %315 : vector<8x128xf32>
    %324 = arith.addf %322, %323 : vector<8x128xf32>
    %325 = math.tanh %324 : vector<8x128xf32>
    %326 = arith.mulf %321, %325 : vector<8x128xf32>
    %c4_84 = arith.constant 4 : index
    %c0_85 = arith.constant 0 : index
    %c0_86 = arith.constant 0 : index
    %327 = vector.load %arg9[%c4_84, %c0_85, %c0_86] : memref<8x8x128xf32, #tpu.memory_space<vmem>>, vector<1x8x128xf32>
    %328 = vector.shape_cast %327 : vector<1x8x128xf32> to vector<8x128xf32>
    %329 = vector.shape_cast %301 : vector<8x128xf32> to vector<1x8x128xf32>
    tpu.vector_store %arg9[%c4_84, %c0_85, %c0_86], %329 {strides = array<i32>} : memref<8x8x128xf32, #tpu.memory_space<vmem>>, vector<1x8x128xf32>,
    %c3_87 = arith.constant 3 : index
    %c0_88 = arith.constant 0 : index
    %c0_89 = arith.constant 0 : index
    %330 = vector.load %arg10[%c3_87, %c0_88, %c0_89] : memref<8x8x128xf32, #tpu.memory_space<vmem>>, vector<1x8x128xf32>
    %331 = vector.shape_cast %330 : vector<1x8x128xf32> to vector<8x128xf32>
    %332 = vector.shape_cast %326 : vector<8x128xf32> to vector<1x8x128xf32>
    tpu.vector_store %arg10[%c3_87, %c0_88, %c0_89], %332 {strides = array<i32>} : memref<8x8x128xf32, #tpu.memory_space<vmem>>, vector<1x8x128xf32>,
    %333 = vector.extract_strided_slice %9 {offsets = [40, 0], sizes = [8, 512], strides = [1, 1]} : vector<64x512xf32> to vector<8x512xf32>
    %cst_90 = arith.constant dense<0.000000e+00> : vector<8x512xf32>
    %334 = tpu.matmul %301, %17, %cst_90 {dimension_numbers = #tpu.dot_dimension_numbers<[1], [0], [0], [1], [0, 0, 1, 1], [], []>} : vector<8x128xf32>, vector<128x512xf32>, vector<8x512xf32> -> vector<8x512xf32>
    %335 = arith.addf %333, %334 : vector<8x512xf32>
    %336 = vector.extract_strided_slice %16 {offsets = [16, 0], sizes = [8, 512], strides = [1, 1]} : vector<64x512xf32> to vector<8x512xf32>
    %cst_91 = arith.constant dense<0.000000e+00> : vector<8x512xf32>
    %337 = tpu.matmul %326, %18, %cst_91 {dimension_numbers = #tpu.dot_dimension_numbers<[1], [0], [0], [1], [0, 0, 1, 1], [], []>} : vector<8x128xf32>, vector<128x512xf32>, vector<8x512xf32> -> vector<8x512xf32>
    %338 = arith.addf %336, %337 : vector<8x512xf32>
    %339 = vector.extract_strided_slice %335 {offsets = [0, 0], sizes = [8, 128], strides = [1, 1]} : vector<8x512xf32> to vector<8x128xf32>
    %340 = arith.negf %339 : vector<8x128xf32>
    %341 = math.exp %340 : vector<8x128xf32>
    %cst_92 = arith.constant 1.000000e+00 : f32
    %342 = vector.broadcast %cst_92 : f32 to vector<8x128xf32>
    %343 = arith.addf %342, %341 : vector<8x128xf32>
    %344 = arith.divf %342, %343 : vector<8x128xf32>
    %345 = vector.extract_strided_slice %335 {offsets = [0, 128], sizes = [8, 128], strides = [1, 1]} : vector<8x512xf32> to vector<8x128xf32>
    %346 = arith.negf %345 : vector<8x128xf32>
    %347 = math.exp %346 : vector<8x128xf32>
    %cst_93 = arith.constant 1.000000e+00 : f32
    %348 = vector.broadcast %cst_93 : f32 to vector<8x128xf32>
    %349 = arith.addf %348, %347 : vector<8x128xf32>
    %350 = arith.divf %348, %349 : vector<8x128xf32>
    %351 = vector.extract_strided_slice %335 {offsets = [0, 256], sizes = [8, 128], strides = [1, 1]} : vector<8x512xf32> to vector<8x128xf32>
    %352 = math.tanh %351 : vector<8x128xf32>
    %353 = vector.extract_strided_slice %335 {offsets = [0, 384], sizes = [8, 128], strides = [1, 1]} : vector<8x512xf32> to vector<8x128xf32>
    %354 = arith.negf %353 : vector<8x128xf32>
    %355 = math.exp %354 : vector<8x128xf32>
    %cst_94 = arith.constant 1.000000e+00 : f32
    %356 = vector.broadcast %cst_94 : f32 to vector<8x128xf32>
    %357 = arith.addf %356, %355 : vector<8x128xf32>
    %358 = arith.divf %356, %357 : vector<8x128xf32>
    %359 = arith.mulf %350, %299 : vector<8x128xf32>
    %360 = arith.mulf %344, %352 : vector<8x128xf32>
    %361 = arith.addf %359, %360 : vector<8x128xf32>
    %362 = math.tanh %361 : vector<8x128xf32>
    %363 = arith.mulf %358, %362 : vector<8x128xf32>
    %364 = vector.extract_strided_slice %338 {offsets = [0, 0], sizes = [8, 128], strides = [1, 1]} : vector<8x512xf32> to vector<8x128xf32>
    %365 = arith.negf %364 : vector<8x128xf32>
    %366 = math.exp %365 : vector<8x128xf32>
    %cst_95 = arith.constant 1.000000e+00 : f32
    %367 = vector.broadcast %cst_95 : f32 to vector<8x128xf32>
    %368 = arith.addf %367, %366 : vector<8x128xf32>
    %369 = arith.divf %367, %368 : vector<8x128xf32>
    %370 = vector.extract_strided_slice %338 {offsets = [0, 128], sizes = [8, 128], strides = [1, 1]} : vector<8x512xf32> to vector<8x128xf32>
    %371 = arith.negf %370 : vector<8x128xf32>
    %372 = math.exp %371 : vector<8x128xf32>
    %cst_96 = arith.constant 1.000000e+00 : f32
    %373 = vector.broadcast %cst_96 : f32 to vector<8x128xf32>
    %374 = arith.addf %373, %372 : vector<8x128xf32>
    %375 = arith.divf %373, %374 : vector<8x128xf32>
    %376 = vector.extract_strided_slice %338 {offsets = [0, 256], sizes = [8, 128], strides = [1, 1]} : vector<8x512xf32> to vector<8x128xf32>
    %377 = math.tanh %376 : vector<8x128xf32>
    %378 = vector.extract_strided_slice %338 {offsets = [0, 384], sizes = [8, 128], strides = [1, 1]} : vector<8x512xf32> to vector<8x128xf32>
    %379 = arith.negf %378 : vector<8x128xf32>
    %380 = math.exp %379 : vector<8x128xf32>
    %cst_97 = arith.constant 1.000000e+00 : f32
    %381 = vector.broadcast %cst_97 : f32 to vector<8x128xf32>
    %382 = arith.addf %381, %380 : vector<8x128xf32>
    %383 = arith.divf %381, %382 : vector<8x128xf32>
    %384 = arith.mulf %375, %324 : vector<8x128xf32>
    %385 = arith.mulf %369, %377 : vector<8x128xf32>
    %386 = arith.addf %384, %385 : vector<8x128xf32>
    %387 = math.tanh %386 : vector<8x128xf32>
    %388 = arith.mulf %383, %387 : vector<8x128xf32>
    %c5_98 = arith.constant 5 : index
    %c0_99 = arith.constant 0 : index
    %c0_100 = arith.constant 0 : index
    %389 = vector.load %arg9[%c5_98, %c0_99, %c0_100] : memref<8x8x128xf32, #tpu.memory_space<vmem>>, vector<1x8x128xf32>
    %390 = vector.shape_cast %389 : vector<1x8x128xf32> to vector<8x128xf32>
    %391 = vector.shape_cast %363 : vector<8x128xf32> to vector<1x8x128xf32>
    tpu.vector_store %arg9[%c5_98, %c0_99, %c0_100], %391 {strides = array<i32>} : memref<8x8x128xf32, #tpu.memory_space<vmem>>, vector<1x8x128xf32>,
    %c2_101 = arith.constant 2 : index
    %c0_102 = arith.constant 0 : index
    %c0_103 = arith.constant 0 : index
    %392 = vector.load %arg10[%c2_101, %c0_102, %c0_103] : memref<8x8x128xf32, #tpu.memory_space<vmem>>, vector<1x8x128xf32>
    %393 = vector.shape_cast %392 : vector<1x8x128xf32> to vector<8x128xf32>
    %394 = vector.shape_cast %388 : vector<8x128xf32> to vector<1x8x128xf32>
    tpu.vector_store %arg10[%c2_101, %c0_102, %c0_103], %394 {strides = array<i32>} : memref<8x8x128xf32, #tpu.memory_space<vmem>>, vector<1x8x128xf32>,
    %395 = vector.extract_strided_slice %9 {offsets = [48, 0], sizes = [8, 512], strides = [1, 1]} : vector<64x512xf32> to vector<8x512xf32>
    %cst_104 = arith.constant dense<0.000000e+00> : vector<8x512xf32>
    %396 = tpu.matmul %363, %17, %cst_104 {dimension_numbers = #tpu.dot_dimension_numbers<[1], [0], [0], [1], [0, 0, 1, 1], [], []>} : vector<8x128xf32>, vector<128x512xf32>, vector<8x512xf32> -> vector<8x512xf32>
    %397 = arith.addf %395, %396 : vector<8x512xf32>
    %398 = vector.extract_strided_slice %16 {offsets = [8, 0], sizes = [8, 512], strides = [1, 1]} : vector<64x512xf32> to vector<8x512xf32>
    %cst_105 = arith.constant dense<0.000000e+00> : vector<8x512xf32>
    %399 = tpu.matmul %388, %18, %cst_105 {dimension_numbers = #tpu.dot_dimension_numbers<[1], [0], [0], [1], [0, 0, 1, 1], [], []>} : vector<8x128xf32>, vector<128x512xf32>, vector<8x512xf32> -> vector<8x512xf32>
    %400 = arith.addf %398, %399 : vector<8x512xf32>
    %401 = vector.extract_strided_slice %397 {offsets = [0, 0], sizes = [8, 128], strides = [1, 1]} : vector<8x512xf32> to vector<8x128xf32>
    %402 = arith.negf %401 : vector<8x128xf32>
    %403 = math.exp %402 : vector<8x128xf32>
    %cst_106 = arith.constant 1.000000e+00 : f32
    %404 = vector.broadcast %cst_106 : f32 to vector<8x128xf32>
    %405 = arith.addf %404, %403 : vector<8x128xf32>
    %406 = arith.divf %404, %405 : vector<8x128xf32>
    %407 = vector.extract_strided_slice %397 {offsets = [0, 128], sizes = [8, 128], strides = [1, 1]} : vector<8x512xf32> to vector<8x128xf32>
    %408 = arith.negf %407 : vector<8x128xf32>
    %409 = math.exp %408 : vector<8x128xf32>
    %cst_107 = arith.constant 1.000000e+00 : f32
    %410 = vector.broadcast %cst_107 : f32 to vector<8x128xf32>
    %411 = arith.addf %410, %409 : vector<8x128xf32>
    %412 = arith.divf %410, %411 : vector<8x128xf32>
    %413 = vector.extract_strided_slice %397 {offsets = [0, 256], sizes = [8, 128], strides = [1, 1]} : vector<8x512xf32> to vector<8x128xf32>
    %414 = math.tanh %413 : vector<8x128xf32>
    %415 = vector.extract_strided_slice %397 {offsets = [0, 384], sizes = [8, 128], strides = [1, 1]} : vector<8x512xf32> to vector<8x128xf32>
    %416 = arith.negf %415 : vector<8x128xf32>
    %417 = math.exp %416 : vector<8x128xf32>
    %cst_108 = arith.constant 1.000000e+00 : f32
    %418 = vector.broadcast %cst_108 : f32 to vector<8x128xf32>
    %419 = arith.addf %418, %417 : vector<8x128xf32>
    %420 = arith.divf %418, %419 : vector<8x128xf32>
    %421 = arith.mulf %412, %361 : vector<8x128xf32>
    %422 = arith.mulf %406, %414 : vector<8x128xf32>
    %423 = arith.addf %421, %422 : vector<8x128xf32>
    %424 = math.tanh %423 : vector<8x128xf32>
    %425 = arith.mulf %420, %424 : vector<8x128xf32>
    %426 = vector.extract_strided_slice %400 {offsets = [0, 0], sizes = [8, 128], strides = [1, 1]} : vector<8x512xf32> to vector<8x128xf32>
    %427 = arith.negf %426 : vector<8x128xf32>
    %428 = math.exp %427 : vector<8x128xf32>
    %cst_109 = arith.constant 1.000000e+00 : f32
    %429 = vector.broadcast %cst_109 : f32 to vector<8x128xf32>
    %430 = arith.addf %429, %428 : vector<8x128xf32>
    %431 = arith.divf %429, %430 : vector<8x128xf32>
    %432 = vector.extract_strided_slice %400 {offsets = [0, 128], sizes = [8, 128], strides = [1, 1]} : vector<8x512xf32> to vector<8x128xf32>
    %433 = arith.negf %432 : vector<8x128xf32>
    %434 = math.exp %433 : vector<8x128xf32>
    %cst_110 = arith.constant 1.000000e+00 : f32
    %435 = vector.broadcast %cst_110 : f32 to vector<8x128xf32>
    %436 = arith.addf %435, %434 : vector<8x128xf32>
    %437 = arith.divf %435, %436 : vector<8x128xf32>
    %438 = vector.extract_strided_slice %400 {offsets = [0, 256], sizes = [8, 128], strides = [1, 1]} : vector<8x512xf32> to vector<8x128xf32>
    %439 = math.tanh %438 : vector<8x128xf32>
    %440 = vector.extract_strided_slice %400 {offsets = [0, 384], sizes = [8, 128], strides = [1, 1]} : vector<8x512xf32> to vector<8x128xf32>
    %441 = arith.negf %440 : vector<8x128xf32>
    %442 = math.exp %441 : vector<8x128xf32>
    %cst_111 = arith.constant 1.000000e+00 : f32
    %443 = vector.broadcast %cst_111 : f32 to vector<8x128xf32>
    %444 = arith.addf %443, %442 : vector<8x128xf32>
    %445 = arith.divf %443, %444 : vector<8x128xf32>
    %446 = arith.mulf %437, %386 : vector<8x128xf32>
    %447 = arith.mulf %431, %439 : vector<8x128xf32>
    %448 = arith.addf %446, %447 : vector<8x128xf32>
    %449 = math.tanh %448 : vector<8x128xf32>
    %450 = arith.mulf %445, %449 : vector<8x128xf32>
    %c6_112 = arith.constant 6 : index
    %c0_113 = arith.constant 0 : index
    %c0_114 = arith.constant 0 : index
    %451 = vector.load %arg9[%c6_112, %c0_113, %c0_114] : memref<8x8x128xf32, #tpu.memory_space<vmem>>, vector<1x8x128xf32>
    %452 = vector.shape_cast %451 : vector<1x8x128xf32> to vector<8x128xf32>
    %453 = vector.shape_cast %425 : vector<8x128xf32> to vector<1x8x128xf32>
    tpu.vector_store %arg9[%c6_112, %c0_113, %c0_114], %453 {strides = array<i32>} : memref<8x8x128xf32, #tpu.memory_space<vmem>>, vector<1x8x128xf32>,
    %c1_115 = arith.constant 1 : index
    %c0_116 = arith.constant 0 : index
    %c0_117 = arith.constant 0 : index
    %454 = vector.load %arg10[%c1_115, %c0_116, %c0_117] : memref<8x8x128xf32, #tpu.memory_space<vmem>>, vector<1x8x128xf32>
    %455 = vector.shape_cast %454 : vector<1x8x128xf32> to vector<8x128xf32>
    %456 = vector.shape_cast %450 : vector<8x128xf32> to vector<1x8x128xf32>
    tpu.vector_store %arg10[%c1_115, %c0_116, %c0_117], %456 {strides = array<i32>} : memref<8x8x128xf32, #tpu.memory_space<vmem>>, vector<1x8x128xf32>,
    %457 = vector.extract_strided_slice %9 {offsets = [56, 0], sizes = [8, 512], strides = [1, 1]} : vector<64x512xf32> to vector<8x512xf32>
    %cst_118 = arith.constant dense<0.000000e+00> : vector<8x512xf32>
    %458 = tpu.matmul %425, %17, %cst_118 {dimension_numbers = #tpu.dot_dimension_numbers<[1], [0], [0], [1], [0, 0, 1, 1], [], []>} : vector<8x128xf32>, vector<128x512xf32>, vector<8x512xf32> -> vector<8x512xf32>
    %459 = arith.addf %457, %458 : vector<8x512xf32>
    %460 = vector.extract_strided_slice %16 {offsets = [0, 0], sizes = [8, 512], strides = [1, 1]} : vector<64x512xf32> to vector<8x512xf32>
    %cst_119 = arith.constant dense<0.000000e+00> : vector<8x512xf32>
    %461 = tpu.matmul %450, %18, %cst_119 {dimension_numbers = #tpu.dot_dimension_numbers<[1], [0], [0], [1], [0, 0, 1, 1], [], []>} : vector<8x128xf32>, vector<128x512xf32>, vector<8x512xf32> -> vector<8x512xf32>
    %462 = arith.addf %460, %461 : vector<8x512xf32>
    %463 = vector.extract_strided_slice %459 {offsets = [0, 0], sizes = [8, 128], strides = [1, 1]} : vector<8x512xf32> to vector<8x128xf32>
    %464 = arith.negf %463 : vector<8x128xf32>
    %465 = math.exp %464 : vector<8x128xf32>
    %cst_120 = arith.constant 1.000000e+00 : f32
    %466 = vector.broadcast %cst_120 : f32 to vector<8x128xf32>
    %467 = arith.addf %466, %465 : vector<8x128xf32>
    %468 = arith.divf %466, %467 : vector<8x128xf32>
    %469 = vector.extract_strided_slice %459 {offsets = [0, 128], sizes = [8, 128], strides = [1, 1]} : vector<8x512xf32> to vector<8x128xf32>
    %470 = arith.negf %469 : vector<8x128xf32>
    %471 = math.exp %470 : vector<8x128xf32>
    %cst_121 = arith.constant 1.000000e+00 : f32
    %472 = vector.broadcast %cst_121 : f32 to vector<8x128xf32>
    %473 = arith.addf %472, %471 : vector<8x128xf32>
    %474 = arith.divf %472, %473 : vector<8x128xf32>
    %475 = vector.extract_strided_slice %459 {offsets = [0, 256], sizes = [8, 128], strides = [1, 1]} : vector<8x512xf32> to vector<8x128xf32>
    %476 = math.tanh %475 : vector<8x128xf32>
    %477 = vector.extract_strided_slice %459 {offsets = [0, 384], sizes = [8, 128], strides = [1, 1]} : vector<8x512xf32> to vector<8x128xf32>
    %478 = arith.negf %477 : vector<8x128xf32>
    %479 = math.exp %478 : vector<8x128xf32>
    %cst_122 = arith.constant 1.000000e+00 : f32
    %480 = vector.broadcast %cst_122 : f32 to vector<8x128xf32>
    %481 = arith.addf %480, %479 : vector<8x128xf32>
    %482 = arith.divf %480, %481 : vector<8x128xf32>
    %483 = arith.mulf %474, %423 : vector<8x128xf32>
    %484 = arith.mulf %468, %476 : vector<8x128xf32>
    %485 = arith.addf %483, %484 : vector<8x128xf32>
    %486 = math.tanh %485 : vector<8x128xf32>
    %487 = arith.mulf %482, %486 : vector<8x128xf32>
    %488 = vector.extract_strided_slice %462 {offsets = [0, 0], sizes = [8, 128], strides = [1, 1]} : vector<8x512xf32> to vector<8x128xf32>
    %489 = arith.negf %488 : vector<8x128xf32>
    %490 = math.exp %489 : vector<8x128xf32>
    %cst_123 = arith.constant 1.000000e+00 : f32
    %491 = vector.broadcast %cst_123 : f32 to vector<8x128xf32>
    %492 = arith.addf %491, %490 : vector<8x128xf32>
    %493 = arith.divf %491, %492 : vector<8x128xf32>
    %494 = vector.extract_strided_slice %462 {offsets = [0, 128], sizes = [8, 128], strides = [1, 1]} : vector<8x512xf32> to vector<8x128xf32>
    %495 = arith.negf %494 : vector<8x128xf32>
    %496 = math.exp %495 : vector<8x128xf32>
    %cst_124 = arith.constant 1.000000e+00 : f32
    %497 = vector.broadcast %cst_124 : f32 to vector<8x128xf32>
    %498 = arith.addf %497, %496 : vector<8x128xf32>
    %499 = arith.divf %497, %498 : vector<8x128xf32>
    %500 = vector.extract_strided_slice %462 {offsets = [0, 256], sizes = [8, 128], strides = [1, 1]} : vector<8x512xf32> to vector<8x128xf32>
    %501 = math.tanh %500 : vector<8x128xf32>
    %502 = vector.extract_strided_slice %462 {offsets = [0, 384], sizes = [8, 128], strides = [1, 1]} : vector<8x512xf32> to vector<8x128xf32>
    %503 = arith.negf %502 : vector<8x128xf32>
    %504 = math.exp %503 : vector<8x128xf32>
    %cst_125 = arith.constant 1.000000e+00 : f32
    %505 = vector.broadcast %cst_125 : f32 to vector<8x128xf32>
    %506 = arith.addf %505, %504 : vector<8x128xf32>
    %507 = arith.divf %505, %506 : vector<8x128xf32>
    %508 = arith.mulf %499, %448 : vector<8x128xf32>
    %509 = arith.mulf %493, %501 : vector<8x128xf32>
    %510 = arith.addf %508, %509 : vector<8x128xf32>
    %511 = math.tanh %510 : vector<8x128xf32>
    %512 = arith.mulf %507, %511 : vector<8x128xf32>
    %c7_126 = arith.constant 7 : index
    %c0_127 = arith.constant 0 : index
    %c0_128 = arith.constant 0 : index
    %513 = vector.load %arg9[%c7_126, %c0_127, %c0_128] : memref<8x8x128xf32, #tpu.memory_space<vmem>>, vector<1x8x128xf32>
    %514 = vector.shape_cast %513 : vector<1x8x128xf32> to vector<8x128xf32>
    %515 = vector.shape_cast %487 : vector<8x128xf32> to vector<1x8x128xf32>
    tpu.vector_store %arg9[%c7_126, %c0_127, %c0_128], %515 {strides = array<i32>} : memref<8x8x128xf32, #tpu.memory_space<vmem>>, vector<1x8x128xf32>,
    %c0_129 = arith.constant 0 : index
    %c0_130 = arith.constant 0 : index
    %c0_131 = arith.constant 0 : index
    %516 = vector.load %arg10[%c0_129, %c0_130, %c0_131] : memref<8x8x128xf32, #tpu.memory_space<vmem>>, vector<1x8x128xf32>
    %517 = vector.shape_cast %516 : vector<1x8x128xf32> to vector<8x128xf32>
    %518 = vector.shape_cast %512 : vector<8x128xf32> to vector<1x8x128xf32>
    tpu.vector_store %arg10[%c0_129, %c0_130, %c0_131], %518 {strides = array<i32>} : memref<8x8x128xf32, #tpu.memory_space<vmem>>, vector<1x8x128xf32>,
    %c0_132 = arith.constant 0 : index
    %c0_133 = arith.constant 0 : index
    %519 = vector.load %arg13[%c0_132, %c0_133] : memref<8x128xf32, #tpu.memory_space<vmem>>, vector<8x128xf32>
    tpu.vector_store %arg13[%c0_132, %c0_133], %487 {strides = array<i32>} : memref<8x128xf32, #tpu.memory_space<vmem>>, vector<8x128xf32>,
    %c0_134 = arith.constant 0 : index
    %c0_135 = arith.constant 0 : index
    %520 = vector.load %arg14[%c0_134, %c0_135] : memref<8x128xf32, #tpu.memory_space<vmem>>, vector<8x128xf32>
    tpu.vector_store %arg14[%c0_134, %c0_135], %485 {strides = array<i32>} : memref<8x128xf32, #tpu.memory_space<vmem>>, vector<8x128xf32>,
    %c0_136 = arith.constant 0 : index
    %c0_137 = arith.constant 0 : index
    %521 = vector.load %arg15[%c0_136, %c0_137] : memref<8x128xf32, #tpu.memory_space<vmem>>, vector<8x128xf32>
    tpu.vector_store %arg15[%c0_136, %c0_137], %512 {strides = array<i32>} : memref<8x128xf32, #tpu.memory_space<vmem>>, vector<8x128xf32>,
    %c0_138 = arith.constant 0 : index
    %c0_139 = arith.constant 0 : index
    %522 = vector.load %arg16[%c0_138, %c0_139] : memref<8x128xf32, #tpu.memory_space<vmem>>, vector<8x128xf32>
    tpu.vector_store %arg16[%c0_138, %c0_139], %510 {strides = array<i32>} : memref<8x128xf32, #tpu.memory_space<vmem>>, vector<8x128xf32>,
    %c0_i32_140 = arith.constant 0 : i32
    %523 = arith.cmpi eq, %arg0, %c0_i32_140 : i32
    %524 = arith.extui %523 : i1 to i32
    %c0_i32_141 = arith.constant 0 : i32
    %525 = arith.cmpi ne, %524, %c0_i32_141 : i32
    scf.if %525 {
      %c0_142 = arith.constant 0 : index
      %c0_143 = arith.constant 0 : index
      %c0_144 = arith.constant 0 : index
      %526 = vector.load %arg11[%c0_142, %c0_143, %c0_144] : memref<2x8x128xf32, #tpu.memory_space<vmem>>, vector<1x8x128xf32>
      %527 = vector.shape_cast %526 : vector<1x8x128xf32> to vector<8x128xf32>
      %528 = vector.shape_cast %487 : vector<8x128xf32> to vector<1x8x128xf32>
      tpu.vector_store %arg11[%c0_142, %c0_143, %c0_144], %528 {strides = array<i32>} : memref<2x8x128xf32, #tpu.memory_space<vmem>>, vector<1x8x128xf32>,
      %c1_145 = arith.constant 1 : index
      %c0_146 = arith.constant 0 : index
      %c0_147 = arith.constant 0 : index
      %529 = vector.load %arg11[%c1_145, %c0_146, %c0_147] : memref<2x8x128xf32, #tpu.memory_space<vmem>>, vector<1x8x128xf32>
      %530 = vector.shape_cast %529 : vector<1x8x128xf32> to vector<8x128xf32>
      %531 = vector.shape_cast %512 : vector<8x128xf32> to vector<1x8x128xf32>
      tpu.vector_store %arg11[%c1_145, %c0_146, %c0_147], %531 {strides = array<i32>} : memref<2x8x128xf32, #tpu.memory_space<vmem>>, vector<1x8x128xf32>,
      %c0_148 = arith.constant 0 : index
      %c0_149 = arith.constant 0 : index
      %c0_150 = arith.constant 0 : index
      %532 = vector.load %arg12[%c0_148, %c0_149, %c0_150] : memref<2x8x128xf32, #tpu.memory_space<vmem>>, vector<1x8x128xf32>
      %533 = vector.shape_cast %532 : vector<1x8x128xf32> to vector<8x128xf32>
      %534 = vector.shape_cast %485 : vector<8x128xf32> to vector<1x8x128xf32>
      tpu.vector_store %arg12[%c0_148, %c0_149, %c0_150], %534 {strides = array<i32>} : memref<2x8x128xf32, #tpu.memory_space<vmem>>, vector<1x8x128xf32>,
      %c1_151 = arith.constant 1 : index
      %c0_152 = arith.constant 0 : index
      %c0_153 = arith.constant 0 : index
      %535 = vector.load %arg12[%c1_151, %c0_152, %c0_153] : memref<2x8x128xf32, #tpu.memory_space<vmem>>, vector<1x8x128xf32>
      %536 = vector.shape_cast %535 : vector<1x8x128xf32> to vector<8x128xf32>
      %537 = vector.shape_cast %510 : vector<8x128xf32> to vector<1x8x128xf32>
      tpu.vector_store %arg12[%c1_151, %c0_152, %c0_153], %537 {strides = array<i32>} : memref<2x8x128xf32, #tpu.memory_space<vmem>>, vector<1x8x128xf32>,
    } else {
    }
    return
  }
  func.func @transform_0(%arg0: i32) -> (i32, i32, i32) {
    %c0_i32 = arith.constant 0 : i32
    %c0_i32_0 = arith.constant 0 : i32
    %c0_i32_1 = arith.constant 0 : i32
    return %arg0, %c0_i32, %c0_i32_0 : i32, i32, i32
  }
  func.func @transform_1(%arg0: i32) -> (i32, i32, i32) {
    %c0_i32 = arith.constant 0 : i32
    %0 = arith.subi %c0_i32, %arg0 : i32
    %c0_i32_0 = arith.constant 0 : i32
    %c0_i32_1 = arith.constant 0 : i32
    %c0_i32_2 = arith.constant 0 : i32
    return %0, %c0_i32_0, %c0_i32_1 : i32, i32, i32
  }
  func.func @transform_2(%arg0: i32) -> (i32, i32) {
    %c0_i32 = arith.constant 0 : i32
    %c0_i32_0 = arith.constant 0 : i32
    %c0_i32_1 = arith.constant 0 : i32
    return %c0_i32, %c0_i32_0 : i32, i32
  }
  func.func @transform_3(%arg0: i32) -> (i32, i32) {
    %c0_i32 = arith.constant 0 : i32
    %c0_i32_0 = arith.constant 0 : i32
    %c0_i32_1 = arith.constant 0 : i32
    return %c0_i32, %c0_i32_0 : i32, i32
  }
  func.func @transform_4(%arg0: i32) -> (i32, i32) {
    %c0_i32 = arith.constant 0 : i32
    %c0_i32_0 = arith.constant 0 : i32
    %c0_i32_1 = arith.constant 0 : i32
    return %c0_i32, %c0_i32_0 : i32, i32
  }
  func.func @transform_5(%arg0: i32) -> (i32, i32) {
    %c0_i32 = arith.constant 0 : i32
    %c0_i32_0 = arith.constant 0 : i32
    %c0_i32_1 = arith.constant 0 : i32
    return %c0_i32, %c0_i32_0 : i32, i32
  }
  func.func @transform_6(%arg0: i32) -> (i32, i32) {
    %c0_i32 = arith.constant 0 : i32
    %c0_i32_0 = arith.constant 0 : i32
    %c0_i32_1 = arith.constant 0 : i32
    return %c0_i32, %c0_i32_0 : i32, i32
  }
  func.func @transform_7(%arg0: i32) -> (i32, i32) {
    %c0_i32 = arith.constant 0 : i32
    %c0_i32_0 = arith.constant 0 : i32
    %c0_i32_1 = arith.constant 0 : i32
    return %c0_i32, %c0_i32_0 : i32, i32
  }
  func.func @transform_8(%arg0: i32) -> (i32, i32, i32) {
    %c0_i32 = arith.constant 0 : i32
    %c0_i32_0 = arith.constant 0 : i32
    %c0_i32_1 = arith.constant 0 : i32
    return %arg0, %c0_i32, %c0_i32_0 : i32, i32, i32
  }
  func.func @transform_9(%arg0: i32) -> (i32, i32, i32) {
    %c0_i32 = arith.constant 0 : i32
    %0 = arith.subi %c0_i32, %arg0 : i32
    %c0_i32_0 = arith.constant 0 : i32
    %c0_i32_1 = arith.constant 0 : i32
    %c0_i32_2 = arith.constant 0 : i32
    return %0, %c0_i32_0, %c0_i32_1 : i32, i32, i32
  }
  func.func @transform_10(%arg0: i32) -> (i32, i32, i32) {
    %c0_i32 = arith.constant 0 : i32
    %c0_i32_0 = arith.constant 0 : i32
    %c0_i32_1 = arith.constant 0 : i32
    %c0_i32_2 = arith.constant 0 : i32
    return %c0_i32, %c0_i32_0, %c0_i32_1 : i32, i32, i32
  }
  func.func @transform_11(%arg0: i32) -> (i32, i32, i32) {
    %c0_i32 = arith.constant 0 : i32
    %c0_i32_0 = arith.constant 0 : i32
    %c0_i32_1 = arith.constant 0 : i32
    %c0_i32_2 = arith.constant 0 : i32
    return %c0_i32, %c0_i32_0, %c0_i32_1 : i32, i32, i32
  }
}

</mosaic_0001>

<llo_original>
// kernel: encoder_forward.1
$region0: #{encoder_forward.1}
  #allocation0 [shape = 'u32[]', space=smem, size = 0x4, offset = 0x4, fixed_abs, tag = 'smem constant byte address 0x4 - core index']
  #allocation1 [shape = 'u32[72,128]{1,0:T(1,128)}', space=vmem, size = 0x9000, scoped, tag = 'internal scratch']
  #allocation2 [shape = 'f32[8,128]{1,0:T(8,128)}', space=vmem, size = 0x1000, scoped, tag = 'scratch operand']
  #allocation3 [shape = 'f32[8,128]{1,0:T(8,128)}', space=vmem, size = 0x1000, scoped, tag = 'scratch operand']
  #allocation4 [shape = 'f32[8,128]{1,0:T(8,128)}', space=vmem, size = 0x1000, scoped, tag = 'scratch operand']
  #allocation5 [shape = 'f32[8,128]{1,0:T(8,128)}', space=vmem, size = 0x1000, scoped, tag = 'scratch operand']
  %s0 = inlined_call_operand.vmem [shape: f32[8,8,128], index: 0, kind: input, shape index: {}, may-alias: {0,1}]
  %s1 = inlined_call_operand.vmem [shape: f32[8,8,128], index: 1, kind: input, shape index: {}, may-alias: {0,1}]
  %s2 = inlined_call_operand.vmem [shape: f32[128,512], index: 2, kind: input, shape index: {}]
  %s3 = inlined_call_operand.vmem [shape: f32[128,512], index: 3, kind: input, shape index: {}]
  %s4 = inlined_call_operand.vmem [shape: f32[128,512], index: 4, kind: input, shape index: {}]
  %s5 = inlined_call_operand.vmem [shape: f32[128,512], index: 5, kind: input, shape index: {}]
  %s6 = inlined_call_operand.vmem [shape: f32[1,512], index: 6, kind: input, shape index: {}]
  %s7 = inlined_call_operand.vmem [shape: f32[1,512], index: 7, kind: input, shape index: {}]
  %s8 = inlined_call_operand.vmem [shape: f32[8,8,128], index: 8, kind: output, shape index: {0}]
  %s9 = inlined_call_operand.vmem [shape: f32[8,8,128], index: 9, kind: output, shape index: {1}]
  %s10 = inlined_call_operand.vmem [shape: f32[2,8,128], index: 10, kind: output, shape index: {2}]
  %s11 = inlined_call_operand.vmem [shape: f32[2,8,128], index: 11, kind: output, shape index: {3}]
  %12 = xla_tuple %s8, %s9, %s10, %s11
  %s13 = sld [smem:[#allocation0]]
  $region74: #{encoder_forward.1} parent=0
    _
  %s15 = ssub.s32 1, %s13
  %s16 = scalar_select 0, %s15, %s13
  // Predicated region
  $region2: #{encoder_forward.1} parent=0 // pred_check
    _
  $region3: #{encoder_forward.1} parent=0 // pred_check_branch
    %18 = sbr.rel (0) target = $region5
  $region4: #{encoder_forward.1} parent=0 // pred_region
    _
  $region5: #{encoder_forward.1} parent=0 // pred_fallthru
    _
  // Predicated region
  $region6: #{encoder_forward.1} parent=0 // pred_check
    _
  $region7: #{encoder_forward.1} parent=0 // pred_check_branch
    %20 = sbr.rel (0) target = $region9
  $region8: #{encoder_forward.1} parent=0 // pred_region
    %s21 = ssub.s32 0, 0
    %s22 = smul.u32 8, %s21
    %p23 = scmp.lt.s32.totalorder %s22, 7
    %s24 = scalar_select %p23, %s22, 7
    %s25 = smul.addr %s24, 8
    %s26 = scalar_lea.vmem %s1, %s25
    %s27 = ssub.s32 0, 0
    %s28 = smul.u32 8, %s27
  $region9: #{encoder_forward.1} parent=0 // pred_fallthru
    _
  // Predicated region
  $region10: #{encoder_forward.1} parent=0 // pred_check
    _
  $region11: #{encoder_forward.1} parent=0 // pred_check_branch
    %30 = sbr.rel (0) target = $region13
  $region12: #{encoder_forward.1} parent=0 // pred_region
    _
  $region13: #{encoder_forward.1} parent=0 // pred_fallthru
    _
  // Predicated region
  $region14: #{encoder_forward.1} parent=0 // pred_check
    _
  $region15: #{encoder_forward.1} parent=0 // pred_check_branch
    %32 = sbr.rel (0) target = $region17
  $region16: #{encoder_forward.1} parent=0 // pred_region
    _
  $region17: #{encoder_forward.1} parent=0 // pred_fallthru
    _
  // Predicated region
  $region18: #{encoder_forward.1} parent=0 // pred_check
    _
  $region19: #{encoder_forward.1} parent=0 // pred_check_branch
    %34 = sbr.rel (0) target = $region21
  $region20: #{encoder_forward.1} parent=0 // pred_region
    _
  $region21: #{encoder_forward.1} parent=0 // pred_fallthru
    _
  // Predicated region
  $region22: #{encoder_forward.1} parent=0 // pred_check
    _
  $region23: #{encoder_forward.1} parent=0 // pred_check_branch
    %36 = sbr.rel (0) target = $region25
  $region24: #{encoder_forward.1} parent=0 // pred_region
    _
  $region25: #{encoder_forward.1} parent=0 // pred_fallthru
    _
  // Predicated region
  $region26: #{encoder_forward.1} parent=0 // pred_check
    _
  $region27: #{encoder_forward.1} parent=0 // pred_check_branch
    %38 = sbr.rel (0) target = $region29
  $region28: #{encoder_forward.1} parent=0 // pred_region
    _
  $region29: #{encoder_forward.1} parent=0 // pred_fallthru
    _
  // Predicated region
  $region30: #{encoder_forward.1} parent=0 // pred_check
    _
  $region31: #{encoder_forward.1} parent=0 // pred_check_branch
    %40 = sbr.rel (0) target = $region33
  $region32: #{encoder_forward.1} parent=0 // pred_region
    _
  $region33: #{encoder_forward.1} parent=0 // pred_fallthru
    _
  %s41 = ssub.s32 0, 0
  %s42 = smul.u32 8, %s41
  %p43 = scmp.lt.s32.totalorder %s42, 7
  %s44 = scalar_select %p43, %s42, 7
  %s45 = smul.addr %s44, 8
  %s46 = scalar_lea.vmem %s1, %s45
  %s47 = ssub.s32 0, 0
  %s48 = smul.u32 8, %s47
  %p49 = scmp.lt.s32.totalorder %s48, 7
  %s50 = scalar_select %p49, %s48, 7
  %s51 = smul.addr %s50, 8
  %s52 = scalar_lea.vmem %s9, %s51
  %s53 = ssub.s32 0, 0
  %s54 = smul.u32 8, %s53
  %p55 = scmp.lt.s32.totalorder %s54, 7
  %s56 = scalar_select %p55, %s54, 7
  %s57 = smul.addr %s56, 8
  %s58 = scalar_lea.vmem %s1, %s57
  %s59 = ssub.s32 0, 0
  %s60 = smul.u32 8, %s59
  %s61 = ssub.s32 0, 0
  %s62 = smul.u32 8, %s61
  %p63 = scmp.lt.s32.totalorder %s62, 7
  %s64 = scalar_select %p63, %s62, 7
  %s65 = smul.addr %s64, 8
  %s66 = scalar_lea.vmem %s9, %s65
  %s67 = ssub.s32 0, 0
  %s68 = smul.u32 8, %s67
  %p69 = scmp.eq.s32.totalorder 0, 0
  // Predicated region
  $region34: #{encoder_forward.1} parent=0 // pred_check
    %p70 = pneg %p69
  $region35: #{encoder_forward.1} parent=0 // pred_check_branch
    %72 = sbr.rel (%p70) target = $region37
  $region36: #{encoder_forward.1} parent=0 // pred_region
    %73 = vst [vmem:[#allocation2] sm:$0xff] 0.0
    %74 = vst [vmem:[#allocation3] sm:$0xff] 0.0
    %75 = vst [vmem:[#allocation4] sm:$0xff] 0.0
    %76 = vst [vmem:[#allocation5] sm:$0xff] 0.0
  $region37: #{encoder_forward.1} parent=0 // pred_fallthru
    _
  %v77 = vld [vmem:[%s0] sm:$0xff]
  %v78 = vld [vmem:[%s0 + $0x8] sm:$0xff]
  %v79 = vld [vmem:[%s0 + $0x10] sm:$0xff]
  %v80 = vld [vmem:[%s0 + $0x18] sm:$0xff]
  %v81 = vld [vmem:[%s0 + $0x20] sm:$0xff]
  %v82 = vld [vmem:[%s0 + $0x28] sm:$0xff]
  %v83 = vld [vmem:[%s0 + $0x30] sm:$0xff]
  %v84 = vld [vmem:[%s0 + $0x38] sm:$0xff]
  %v85 = vld [vmem:[%s2] sm:$0xff]
  %v86 = vld [vmem:[%s2 + $0x8] sm:$0xff]
  %v87 = vld [vmem:[%s2 + $0x10] sm:$0xff]
  %v88 = vld [vmem:[%s2 + $0x18] sm:$0xff]
  %v89 = vld [vmem:[%s2 + $0x20] sm:$0xff]
  %v90 = vld [vmem:[%s2 + $0x28] sm:$0xff]
  %v91 = vld [vmem:[%s2 + $0x30] sm:$0xff]
  %v92 = vld [vmem:[%s2 + $0x38] sm:$0xff]
  %v93 = vld [vmem:[%s2 + $0x40] sm:$0xff]
  %v94 = vld [vmem:[%s2 + $0x48] sm:$0xff]
  %v95 = vld [vmem:[%s2 + $0x50] sm:$0xff]
  %v96 = vld [vmem:[%s2 + $0x58] sm:$0xff]
  %v97 = vld [vmem:[%s2 + $0x60] sm:$0xff]
  %v98 = vld [vmem:[%s2 + $0x68] sm:$0xff]
  %v99 = vld [vmem:[%s2 + $0x70] sm:$0xff]
  %v100 = vld [vmem:[%s2 + $0x78] sm:$0xff]
  %v101 = vld [vmem:[%s2 + $0x80] sm:$0xff]
  %v102 = vld [vmem:[%s2 + $0x88] sm:$0xff]
  %v103 = vld [vmem:[%s2 + $0x90] sm:$0xff]
  %v104 = vld [vmem:[%s2 + $0x98] sm:$0xff]
  %v105 = vld [vmem:[%s2 + $0xa0] sm:$0xff]
  %v106 = vld [vmem:[%s2 + $0xa8] sm:$0xff]
  %v107 = vld [vmem:[%s2 + $0xb0] sm:$0xff]
  %v108 = vld [vmem:[%s2 + $0xb8] sm:$0xff]
  %v109 = vld [vmem:[%s2 + $0xc0] sm:$0xff]
  %v110 = vld [vmem:[%s2 + $0xc8] sm:$0xff]
  %v111 = vld [vmem:[%s2 + $0xd0] sm:$0xff]
  %v112 = vld [vmem:[%s2 + $0xd8] sm:$0xff]
  %v113 = vld [vmem:[%s2 + $0xe0] sm:$0xff]
  %v114 = vld [vmem:[%s2 + $0xe8] sm:$0xff]
  %v115 = vld [vmem:[%s2 + $0xf0] sm:$0xff]
  %v116 = vld [vmem:[%s2 + $0xf8] sm:$0xff]
  %v117 = vld [vmem:[%s2 + $0x100] sm:$0xff]
  %v118 = vld [vmem:[%s2 + $0x108] sm:$0xff]
  %v119 = vld [vmem:[%s2 + $0x110] sm:$0xff]
  %v120 = vld [vmem:[%s2 + $0x118] sm:$0xff]
  %v121 = vld [vmem:[%s2 + $0x120] sm:$0xff]
  %v122 = vld [vmem:[%s2 + $0x128] sm:$0xff]
  %v123 = vld [vmem:[%s2 + $0x130] sm:$0xff]
  %v124 = vld [vmem:[%s2 + $0x138] sm:$0xff]
  %v125 = vld [vmem:[%s2 + $0x140] sm:$0xff]
  %v126 = vld [vmem:[%s2 + $0x148] sm:$0xff]
  %v127 = vld [vmem:[%s2 + $0x150] sm:$0xff]
  %v128 = vld [vmem:[%s2 + $0x158] sm:$0xff]
  %v129 = vld [vmem:[%s2 + $0x160] sm:$0xff]
  %v130 = vld [vmem:[%s2 + $0x168] sm:$0xff]
  %v131 = vld [vmem:[%s2 + $0x170] sm:$0xff]
  %v132 = vld [vmem:[%s2 + $0x178] sm:$0xff]
  %v133 = vld [vmem:[%s2 + $0x180] sm:$0xff]
  %v134 = vld [vmem:[%s2 + $0x188] sm:$0xff]
  %v135 = vld [vmem:[%s2 + $0x190] sm:$0xff]
  %v136 = vld [vmem:[%s2 + $0x198] sm:$0xff]
  %v137 = vld [vmem:[%s2 + $0x1a0] sm:$0xff]
  %v138 = vld [vmem:[%s2 + $0x1a8] sm:$0xff]
  %v139 = vld [vmem:[%s2 + $0x1b0] sm:$0xff]
  %v140 = vld [vmem:[%s2 + $0x1b8] sm:$0xff]
  %v141 = vld [vmem:[%s2 + $0x1c0] sm:$0xff]
  %v142 = vld [vmem:[%s2 + $0x1c8] sm:$0xff]
  %v143 = vld [vmem:[%s2 + $0x1d0] sm:$0xff]
  %v144 = vld [vmem:[%s2 + $0x1d8] sm:$0xff]
  %v145 = vld [vmem:[%s2 + $0x1e0] sm:$0xff]
  %v146 = vld [vmem:[%s2 + $0x1e8] sm:$0xff]
  %v147 = vld [vmem:[%s2 + $0x1f0] sm:$0xff]
  %v148 = vld [vmem:[%s2 + $0x1f8] sm:$0xff]
  %v149 = vld [vmem:[%s6] sm:$0xf]
  %v151 = vperm.slane %v149, 0
  %v152 = vperm.slane %v149, 1
  %v153 = vperm.slane %v149, 2
  %v154 = vperm.slane %v149, 3
  %159 = vmatpush.msra.mxu0 %v145
  %160 = vmatpush.msra.mxu0 %v141
  %161 = vmatpush.msra.mxu0 %v137
  %162 = vmatpush.msra.mxu0 %v133
  %163 = vmatpush.msra.mxu0 %v129
  %164 = vmatpush.msra.mxu0 %v125
  %165 = vmatpush.msra.mxu0 %v121
  %166 = vmatpush.msra.mxu0 %v117
  %167 = vmatpush.msra.mxu0 %v113
  %168 = vmatpush.msra.mxu0 %v109
  %169 = vmatpush.msra.mxu0 %v105
  %170 = vmatpush.msra.mxu0 %v101
  %171 = vmatpush.msra.mxu0 %v97
  %172 = vmatpush.msra.mxu0 %v93
  %173 = vmatpush.msra.mxu0 %v89
  %174 = vmatpush.msra.mxu0 %v85
  %175 = vmatmul.f32.gmra.mxu0 %v77
  %v176 = vpop.f32.mrf.mxu0
  %v177 = vadd.f32 %v151, %v176
  %178 = vmatmul.f32.gmra.mxu0 %v78
  %v179 = vpop.f32.mrf.mxu0
  %v180 = vadd.f32 %v151, %v179
  %181 = vmatmul.f32.gmra.mxu0 %v79
  %v182 = vpop.f32.mrf.mxu0
  %v183 = vadd.f32 %v151, %v182
  %184 = vmatmul.f32.gmra.mxu0 %v80
  %v185 = vpop.f32.mrf.mxu0
  %v186 = vadd.f32 %v151, %v185
  %187 = vmatmul.f32.gmra.mxu0 %v81
  %v188 = vpop.f32.mrf.mxu0
  %v189 = vadd.f32 %v151, %v188
  %190 = vmatmul.f32.gmra.mxu0 %v82
  %v191 = vpop.f32.mrf.mxu0
  %v192 = vadd.f32 %v151, %v191
  %193 = vmatmul.f32.gmra.mxu0 %v83
  %v194 = vpop.f32.mrf.mxu0
  %v195 = vadd.f32 %v151, %v194
  %196 = vmatmul.f32.gmra.mxu0 %v84
  %v197 = vpop.f32.mrf.mxu0
  %v198 = vadd.f32 %v151, %v197
  %199 = vdwg.mxu0
  %200 = vmatpush.msra.mxu0 %v146
  %201 = vmatpush.msra.mxu0 %v142
  %202 = vmatpush.msra.mxu0 %v138
  %203 = vmatpush.msra.mxu0 %v134
  %204 = vmatpush.msra.mxu0 %v130
  %205 = vmatpush.msra.mxu0 %v126
  %206 = vmatpush.msra.mxu0 %v122
  %207 = vmatpush.msra.mxu0 %v118
  %208 = vmatpush.msra.mxu0 %v114
  %209 = vmatpush.msra.mxu0 %v110
  %210 = vmatpush.msra.mxu0 %v106
  %211 = vmatpush.msra.mxu0 %v102
  %212 = vmatpush.msra.mxu0 %v98
  %213 = vmatpush.msra.mxu0 %v94
  %214 = vmatpush.msra.mxu0 %v90
  %215 = vmatpush.msra.mxu0 %v86
  %216 = vmatmul.f32.gmra.mxu0 %v77
  %v217 = vpop.f32.mrf.mxu0
  %v218 = vadd.f32 %v152, %v217
  %219 = vmatmul.f32.gmra.mxu0 %v78
  %v220 = vpop.f32.mrf.mxu0
  %v221 = vadd.f32 %v152, %v220
  %222 = vmatmul.f32.gmra.mxu0 %v79
  %v223 = vpop.f32.mrf.mxu0
  %v224 = vadd.f32 %v152, %v223
  %225 = vmatmul.f32.gmra.mxu0 %v80
  %v226 = vpop.f32.mrf.mxu0
  %v227 = vadd.f32 %v152, %v226
  %228 = vmatmul.f32.gmra.mxu0 %v81
  %v229 = vpop.f32.mrf.mxu0
  %v230 = vadd.f32 %v152, %v229
  %231 = vmatmul.f32.gmra.mxu0 %v82
  %v232 = vpop.f32.mrf.mxu0
  %v233 = vadd.f32 %v152, %v232
  %234 = vmatmul.f32.gmra.mxu0 %v83
  %v235 = vpop.f32.mrf.mxu0
  %v236 = vadd.f32 %v152, %v235
  %237 = vmatmul.f32.gmra.mxu0 %v84
  %v238 = vpop.f32.mrf.mxu0
  %v239 = vadd.f32 %v152, %v238
  %240 = vdwg.mxu0
  %241 = vmatpush.msra.mxu0 %v147
  %242 = vmatpush.msra.mxu0 %v143
  %243 = vmatpush.msra.mxu0 %v139
  %244 = vmatpush.msra.mxu0 %v135
  %245 = vmatpush.msra.mxu0 %v131
  %246 = vmatpush.msra.mxu0 %v127
  %247 = vmatpush.msra.mxu0 %v123
  %248 = vmatpush.msra.mxu0 %v119
  %249 = vmatpush.msra.mxu0 %v115
  %250 = vmatpush.msra.mxu0 %v111
  %251 = vmatpush.msra.mxu0 %v107
  %252 = vmatpush.msra.mxu0 %v103
  %253 = vmatpush.msra.mxu0 %v99
  %254 = vmatpush.msra.mxu0 %v95
  %255 = vmatpush.msra.mxu0 %v91
  %256 = vmatpush.msra.mxu0 %v87
  %257 = vmatmul.f32.gmra.mxu0 %v77
  %v258 = vpop.f32.mrf.mxu0
  %v259 = vadd.f32 %v153, %v258
  %260 = vmatmul.f32.gmra.mxu0 %v78
  %v261 = vpop.f32.mrf.mxu0
  %v262 = vadd.f32 %v153, %v261
  %263 = vmatmul.f32.gmra.mxu0 %v79
  %v264 = vpop.f32.mrf.mxu0
  %v265 = vadd.f32 %v153, %v264
  %266 = vmatmul.f32.gmra.mxu0 %v80
  %v267 = vpop.f32.mrf.mxu0
  %v268 = vadd.f32 %v153, %v267
  %269 = vmatmul.f32.gmra.mxu0 %v81
  %v270 = vpop.f32.mrf.mxu0
  %v271 = vadd.f32 %v153, %v270
  %272 = vmatmul.f32.gmra.mxu0 %v82
  %v273 = vpop.f32.mrf.mxu0
  %v274 = vadd.f32 %v153, %v273
  %275 = vmatmul.f32.gmra.mxu0 %v83
  %v276 = vpop.f32.mrf.mxu0
  %v277 = vadd.f32 %v153, %v276
  %278 = vmatmul.f32.gmra.mxu0 %v84
  %v279 = vpop.f32.mrf.mxu0
  %v280 = vadd.f32 %v153, %v279
  %281 = vdwg.mxu0
  %282 = vmatpush.msra.mxu0 %v148
  %283 = vmatpush.msra.mxu0 %v144
  %284 = vmatpush.msra.mxu0 %v140
  %285 = vmatpush.msra.mxu0 %v136
  %286 = vmatpush.msra.mxu0 %v132
  %287 = vmatpush.msra.mxu0 %v128
  %288 = vmatpush.msra.mxu0 %v124
  %289 = vmatpush.msra.mxu0 %v120
  %290 = vmatpush.msra.mxu0 %v116
  %291 = vmatpush.msra.mxu0 %v112
  %292 = vmatpush.msra.mxu0 %v108
  %293 = vmatpush.msra.mxu0 %v104
  %294 = vmatpush.msra.mxu0 %v100
  %295 = vmatpush.msra.mxu0 %v96
  %296 = vmatpush.msra.mxu0 %v92
  %297 = vmatpush.msra.mxu0 %v88
  %298 = vmatmul.f32.gmra.mxu0 %v77
  %v299 = vpop.f32.mrf.mxu0
  %v300 = vadd.f32 %v154, %v299
  %301 = vmatmul.f32.gmra.mxu0 %v78
  %v302 = vpop.f32.mrf.mxu0
  %v303 = vadd.f32 %v154, %v302
  %304 = vmatmul.f32.gmra.mxu0 %v79
  %v305 = vpop.f32.mrf.mxu0
  %v306 = vadd.f32 %v154, %v305
  %307 = vmatmul.f32.gmra.mxu0 %v80
  %v308 = vpop.f32.mrf.mxu0
  %v309 = vadd.f32 %v154, %v308
  %310 = vmatmul.f32.gmra.mxu0 %v81
  %v311 = vpop.f32.mrf.mxu0
  %v312 = vadd.f32 %v154, %v311
  %313 = vmatmul.f32.gmra.mxu0 %v82
  %v314 = vpop.f32.mrf.mxu0
  %v315 = vadd.f32 %v154, %v314
  %316 = vmatmul.f32.gmra.mxu0 %v83
  %v317 = vpop.f32.mrf.mxu0
  %v318 = vadd.f32 %v154, %v317
  %319 = vmatmul.f32.gmra.mxu0 %v84
  %v320 = vpop.f32.mrf.mxu0
  %v321 = vadd.f32 %v154, %v320
  %322 = vdwg.mxu0
  %v323 = vld [vmem:[%s58] sm:$0xff]
  %v324 = vld [vmem:[%s58 + $0x8] sm:$0xff]
  %v325 = vld [vmem:[%s58 + $0x10] sm:$0xff]
  %v326 = vld [vmem:[%s58 + $0x18] sm:$0xff]
  %v327 = vld [vmem:[%s58 + $0x20] sm:$0xff]
  %v328 = vld [vmem:[%s58 + $0x28] sm:$0xff]
  %v329 = vld [vmem:[%s58 + $0x30] sm:$0xff]
  %v330 = vld [vmem:[%s58 + $0x38] sm:$0xff]
  %v331 = vld [vmem:[%s3] sm:$0xff]
  %v332 = vld [vmem:[%s3 + $0x8] sm:$0xff]
  %v333 = vld [vmem:[%s3 + $0x10] sm:$0xff]
  %v334 = vld [vmem:[%s3 + $0x18] sm:$0xff]
  %v335 = vld [vmem:[%s3 + $0x20] sm:$0xff]
  %v336 = vld [vmem:[%s3 + $0x28] sm:$0xff]
  %v337 = vld [vmem:[%s3 + $0x30] sm:$0xff]
  %v338 = vld [vmem:[%s3 + $0x38] sm:$0xff]
  %v339 = vld [vmem:[%s3 + $0x40] sm:$0xff]
  %v340 = vld [vmem:[%s3 + $0x48] sm:$0xff]
  %v341 = vld [vmem:[%s3 + $0x50] sm:$0xff]
  %v342 = vld [vmem:[%s3 + $0x58] sm:$0xff]
  %v343 = vld [vmem:[%s3 + $0x60] sm:$0xff]
  %v344 = vld [vmem:[%s3 + $0x68] sm:$0xff]
  %v345 = vld [vmem:[%s3 + $0x70] sm:$0xff]
  %v346 = vld [vmem:[%s3 + $0x78] sm:$0xff]
  %v347 = vld [vmem:[%s3 + $0x80] sm:$0xff]
  %v348 = vld [vmem:[%s3 + $0x88] sm:$0xff]
  %v349 = vld [vmem:[%s3 + $0x90] sm:$0xff]
  %v350 = vld [vmem:[%s3 + $0x98] sm:$0xff]
  %v351 = vld [vmem:[%s3 + $0xa0] sm:$0xff]
  %v352 = vld [vmem:[%s3 + $0xa8] sm:$0xff]
  %v353 = vld [vmem:[%s3 + $0xb0] sm:$0xff]
  %v354 = vld [vmem:[%s3 + $0xb8] sm:$0xff]
  %v355 = vld [vmem:[%s3 + $0xc0] sm:$0xff]
  %v356 = vld [vmem:[%s3 + $0xc8] sm:$0xff]
  %v357 = vld [vmem:[%s3 + $0xd0] sm:$0xff]
  %v358 = vld [vmem:[%s3 + $0xd8] sm:$0xff]
  %v359 = vld [vmem:[%s3 + $0xe0] sm:$0xff]
  %v360 = vld [vmem:[%s3 + $0xe8] sm:$0xff]
  %v361 = vld [vmem:[%s3 + $0xf0] sm:$0xff]
  %v362 = vld [vmem:[%s3 + $0xf8] sm:$0xff]
  %v363 = vld [vmem:[%s3 + $0x100] sm:$0xff]
  %v364 = vld [vmem:[%s3 + $0x108] sm:$0xff]
  %v365 = vld [vmem:[%s3 + $0x110] sm:$0xff]
  %v366 = vld [vmem:[%s3 + $0x118] sm:$0xff]
  %v367 = vld [vmem:[%s3 + $0x120] sm:$0xff]
  %v368 = vld [vmem:[%s3 + $0x128] sm:$0xff]
  %v369 = vld [vmem:[%s3 + $0x130] sm:$0xff]
  %v370 = vld [vmem:[%s3 + $0x138] sm:$0xff]
  %v371 = vld [vmem:[%s3 + $0x140] sm:$0xff]
  %v372 = vld [vmem:[%s3 + $0x148] sm:$0xff]
  %v373 = vld [vmem:[%s3 + $0x150] sm:$0xff]
  %v374 = vld [vmem:[%s3 + $0x158] sm:$0xff]
  %v375 = vld [vmem:[%s3 + $0x160] sm:$0xff]
  %v376 = vld [vmem:[%s3 + $0x168] sm:$0xff]
  %v377 = vld [vmem:[%s3 + $0x170] sm:$0xff]
  %v378 = vld [vmem:[%s3 + $0x178] sm:$0xff]
  %v379 = vld [vmem:[%s3 + $0x180] sm:$0xff]
  %v380 = vld [vmem:[%s3 + $0x188] sm:$0xff]
  %v381 = vld [vmem:[%s3 + $0x190] sm:$0xff]
  %v382 = vld [vmem:[%s3 + $0x198] sm:$0xff]
  %v383 = vld [vmem:[%s3 + $0x1a0] sm:$0xff]
  %v384 = vld [vmem:[%s3 + $0x1a8] sm:$0xff]
  %v385 = vld [vmem:[%s3 + $0x1b0] sm:$0xff]
  %v386 = vld [vmem:[%s3 + $0x1b8] sm:$0xff]
  %v387 = vld [vmem:[%s3 + $0x1c0] sm:$0xff]
  %v388 = vld [vmem:[%s3 + $0x1c8] sm:$0xff]
  %v389 = vld [vmem:[%s3 + $0x1d0] sm:$0xff]
  %v390 = vld [vmem:[%s3 + $0x1d8] sm:$0xff]
  %v391 = vld [vmem:[%s3 + $0x1e0] sm:$0xff]
  %v392 = vld [vmem:[%s3 + $0x1e8] sm:$0xff]
  %v393 = vld [vmem:[%s3 + $0x1f0] sm:$0xff]
  %v394 = vld [vmem:[%s3 + $0x1f8] sm:$0xff]
  %v395 = vld [vmem:[%s7] sm:$0xf]
  %v397 = vperm.slane %v395, 0
  %v398 = vperm.slane %v395, 1
  %v399 = vperm.slane %v395, 2
  %v400 = vperm.slane %v395, 3
  %405 = vmatpush.msra.mxu0 %v391
  %406 = vmatpush.msra.mxu0 %v387
  %407 = vmatpush.msra.mxu0 %v383
  %408 = vmatpush.msra.mxu0 %v379
  %409 = vmatpush.msra.mxu0 %v375
  %410 = vmatpush.msra.mxu0 %v371
  %411 = vmatpush.msra.mxu0 %v367
  %412 = vmatpush.msra.mxu0 %v363
  %413 = vmatpush.msra.mxu0 %v359
  %414 = vmatpush.msra.mxu0 %v355
  %415 = vmatpush.msra.mxu0 %v351
  %416 = vmatpush.msra.mxu0 %v347
  %417 = vmatpush.msra.mxu0 %v343
  %418 = vmatpush.msra.mxu0 %v339
  %419 = vmatpush.msra.mxu0 %v335
  %420 = vmatpush.msra.mxu0 %v331
  %421 = vmatmul.f32.gmra.mxu0 %v323
  %v422 = vpop.f32.mrf.mxu0
  %v423 = vadd.f32 %v397, %v422
  %424 = vmatmul.f32.gmra.mxu0 %v324
  %v425 = vpop.f32.mrf.mxu0
  %v426 = vadd.f32 %v397, %v425
  %427 = vmatmul.f32.gmra.mxu0 %v325
  %v428 = vpop.f32.mrf.mxu0
  %v429 = vadd.f32 %v397, %v428
  %430 = vmatmul.f32.gmra.mxu0 %v326
  %v431 = vpop.f32.mrf.mxu0
  %v432 = vadd.f32 %v397, %v431
  %433 = vmatmul.f32.gmra.mxu0 %v327
  %v434 = vpop.f32.mrf.mxu0
  %v435 = vadd.f32 %v397, %v434
  %436 = vmatmul.f32.gmra.mxu0 %v328
  %v437 = vpop.f32.mrf.mxu0
  %v438 = vadd.f32 %v397, %v437
  %439 = vmatmul.f32.gmra.mxu0 %v329
  %v440 = vpop.f32.mrf.mxu0
  %v441 = vadd.f32 %v397, %v440
  %442 = vmatmul.f32.gmra.mxu0 %v330
  %v443 = vpop.f32.mrf.mxu0
  %v444 = vadd.f32 %v397, %v443
  %445 = vdwg.mxu0
  %446 = vmatpush.msra.mxu0 %v392
  %447 = vmatpush.msra.mxu0 %v388
  %448 = vmatpush.msra.mxu0 %v384
  %449 = vmatpush.msra.mxu0 %v380
  %450 = vmatpush.msra.mxu0 %v376
  %451 = vmatpush.msra.mxu0 %v372
  %452 = vmatpush.msra.mxu0 %v368
  %453 = vmatpush.msra.mxu0 %v364
  %454 = vmatpush.msra.mxu0 %v360
  %455 = vmatpush.msra.mxu0 %v356
  %456 = vmatpush.msra.mxu0 %v352
  %457 = vmatpush.msra.mxu0 %v348
  %458 = vmatpush.msra.mxu0 %v344
  %459 = vmatpush.msra.mxu0 %v340
  %460 = vmatpush.msra.mxu0 %v336
  %461 = vmatpush.msra.mxu0 %v332
  %462 = vmatmul.f32.gmra.mxu0 %v323
  %v463 = vpop.f32.mrf.mxu0
  %v464 = vadd.f32 %v398, %v463
  %465 = vmatmul.f32.gmra.mxu0 %v324
  %v466 = vpop.f32.mrf.mxu0
  %v467 = vadd.f32 %v398, %v466
  %468 = vmatmul.f32.gmra.mxu0 %v325
  %v469 = vpop.f32.mrf.mxu0
  %v470 = vadd.f32 %v398, %v469
  %471 = vmatmul.f32.gmra.mxu0 %v326
  %v472 = vpop.f32.mrf.mxu0
  %v473 = vadd.f32 %v398, %v472
  %474 = vmatmul.f32.gmra.mxu0 %v327
  %v475 = vpop.f32.mrf.mxu0
  %v476 = vadd.f32 %v398, %v475
  %477 = vmatmul.f32.gmra.mxu0 %v328
  %v478 = vpop.f32.mrf.mxu0
  %v479 = vadd.f32 %v398, %v478
  %480 = vmatmul.f32.gmra.mxu0 %v329
  %v481 = vpop.f32.mrf.mxu0
  %v482 = vadd.f32 %v398, %v481
  %483 = vmatmul.f32.gmra.mxu0 %v330
  %v484 = vpop.f32.mrf.mxu0
  %v485 = vadd.f32 %v398, %v484
  %486 = vdwg.mxu0
  %487 = vmatpush.msra.mxu0 %v393
  %488 = vmatpush.msra.mxu0 %v389
  %489 = vmatpush.msra.mxu0 %v385
  %490 = vmatpush.msra.mxu0 %v381
  %491 = vmatpush.msra.mxu0 %v377
  %492 = vmatpush.msra.mxu0 %v373
  %493 = vmatpush.msra.mxu0 %v369
  %494 = vmatpush.msra.mxu0 %v365
  %495 = vmatpush.msra.mxu0 %v361
  %496 = vmatpush.msra.mxu0 %v357
  %497 = vmatpush.msra.mxu0 %v353
  %498 = vmatpush.msra.mxu0 %v349
  %499 = vmatpush.msra.mxu0 %v345
  %500 = vmatpush.msra.mxu0 %v341
  %501 = vmatpush.msra.mxu0 %v337
  %502 = vmatpush.msra.mxu0 %v333
  %503 = vmatmul.f32.gmra.mxu0 %v323
  %v504 = vpop.f32.mrf.mxu0
  %v505 = vadd.f32 %v399, %v504
  %506 = vmatmul.f32.gmra.mxu0 %v324
  %v507 = vpop.f32.mrf.mxu0
  %v508 = vadd.f32 %v399, %v507
  %509 = vmatmul.f32.gmra.mxu0 %v325
  %v510 = vpop.f32.mrf.mxu0
  %v511 = vadd.f32 %v399, %v510
  %512 = vmatmul.f32.gmra.mxu0 %v326
  %v513 = vpop.f32.mrf.mxu0
  %v514 = vadd.f32 %v399, %v513
  %515 = vmatmul.f32.gmra.mxu0 %v327
  %v516 = vpop.f32.mrf.mxu0
  %v517 = vadd.f32 %v399, %v516
  %518 = vmatmul.f32.gmra.mxu0 %v328
  %v519 = vpop.f32.mrf.mxu0
  %v520 = vadd.f32 %v399, %v519
  %521 = vmatmul.f32.gmra.mxu0 %v329
  %v522 = vpop.f32.mrf.mxu0
  %v523 = vadd.f32 %v399, %v522
  %524 = vmatmul.f32.gmra.mxu0 %v330
  %v525 = vpop.f32.mrf.mxu0
  %v526 = vadd.f32 %v399, %v525
  %527 = vdwg.mxu0
  %528 = vmatpush.msra.mxu0 %v394
  %529 = vmatpush.msra.mxu0 %v390
  %530 = vmatpush.msra.mxu0 %v386
  %531 = vmatpush.msra.mxu0 %v382
  %532 = vmatpush.msra.mxu0 %v378
  %533 = vmatpush.msra.mxu0 %v374
  %534 = vmatpush.msra.mxu0 %v370
  %535 = vmatpush.msra.mxu0 %v366
  %536 = vmatpush.msra.mxu0 %v362
  %537 = vmatpush.msra.mxu0 %v358
  %538 = vmatpush.msra.mxu0 %v354
  %539 = vmatpush.msra.mxu0 %v350
  %540 = vmatpush.msra.mxu0 %v346
  %541 = vmatpush.msra.mxu0 %v342
  %542 = vmatpush.msra.mxu0 %v338
  %543 = vmatpush.msra.mxu0 %v334
  %544 = vmatmul.f32.gmra.mxu0 %v323
  %v545 = vpop.f32.mrf.mxu0
  %v546 = vadd.f32 %v400, %v545
  %547 = vmatmul.f32.gmra.mxu0 %v324
  %v548 = vpop.f32.mrf.mxu0
  %v549 = vadd.f32 %v400, %v548
  %550 = vmatmul.f32.gmra.mxu0 %v325
  %v551 = vpop.f32.mrf.mxu0
  %v552 = vadd.f32 %v400, %v551
  %553 = vmatmul.f32.gmra.mxu0 %v326
  %v554 = vpop.f32.mrf.mxu0
  %v555 = vadd.f32 %v400, %v554
  %556 = vmatmul.f32.gmra.mxu0 %v327
  %v557 = vpop.f32.mrf.mxu0
  %v558 = vadd.f32 %v400, %v557
  %559 = vmatmul.f32.gmra.mxu0 %v328
  %v560 = vpop.f32.mrf.mxu0
  %v561 = vadd.f32 %v400, %v560
  %562 = vmatmul.f32.gmra.mxu0 %v329
  %v563 = vpop.f32.mrf.mxu0
  %v564 = vadd.f32 %v400, %v563
  %565 = vmatmul.f32.gmra.mxu0 %v330
  %v566 = vpop.f32.mrf.mxu0
  %v567 = vadd.f32 %v400, %v566
  %568 = vdwg.mxu0
  %v569 = vld [vmem:[%s4] sm:$0xff]
  %v570 = vld [vmem:[%s4 + $0x8] sm:$0xff]
  %v571 = vld [vmem:[%s4 + $0x10] sm:$0xff]
  %v572 = vld [vmem:[%s4 + $0x18] sm:$0xff]
  %v573 = vld [vmem:[%s4 + $0x20] sm:$0xff]
  %v574 = vld [vmem:[%s4 + $0x28] sm:$0xff]
  %v575 = vld [vmem:[%s4 + $0x30] sm:$0xff]
  %v576 = vld [vmem:[%s4 + $0x38] sm:$0xff]
  %v577 = vld [vmem:[%s4 + $0x40] sm:$0xff]
  %v578 = vld [vmem:[%s4 + $0x48] sm:$0xff]
  %v579 = vld [vmem:[%s4 + $0x50] sm:$0xff]
  %v580 = vld [vmem:[%s4 + $0x58] sm:$0xff]
  %v581 = vld [vmem:[%s4 + $0x60] sm:$0xff]
  %v582 = vld [vmem:[%s4 + $0x68] sm:$0xff]
  %v583 = vld [vmem:[%s4 + $0x70] sm:$0xff]
  %v584 = vld [vmem:[%s4 + $0x78] sm:$0xff]
  %v585 = vld [vmem:[%s4 + $0x80] sm:$0xff]
  %v586 = vld [vmem:[%s4 + $0x88] sm:$0xff]
  %v587 = vld [vmem:[%s4 + $0x90] sm:$0xff]
  %v588 = vld [vmem:[%s4 + $0x98] sm:$0xff]
  %v589 = vld [vmem:[%s4 + $0xa0] sm:$0xff]
  %v590 = vld [vmem:[%s4 + $0xa8] sm:$0xff]
  %v591 = vld [vmem:[%s4 + $0xb0] sm:$0xff]
  %v592 = vld [vmem:[%s4 + $0xb8] sm:$0xff]
  %v593 = vld [vmem:[%s4 + $0xc0] sm:$0xff]
  %v594 = vld [vmem:[%s4 + $0xc8] sm:$0xff]
  %v595 = vld [vmem:[%s4 + $0xd0] sm:$0xff]
  %v596 = vld [vmem:[%s4 + $0xd8] sm:$0xff]
  %v597 = vld [vmem:[%s4 + $0xe0] sm:$0xff]
  %v598 = vld [vmem:[%s4 + $0xe8] sm:$0xff]
  %v599 = vld [vmem:[%s4 + $0xf0] sm:$0xff]
  %v600 = vld [vmem:[%s4 + $0xf8] sm:$0xff]
  %v601 = vld [vmem:[%s4 + $0x100] sm:$0xff]
  %v602 = vld [vmem:[%s4 + $0x108] sm:$0xff]
  %v603 = vld [vmem:[%s4 + $0x110] sm:$0xff]
  %v604 = vld [vmem:[%s4 + $0x118] sm:$0xff]
  %v605 = vld [vmem:[%s4 + $0x120] sm:$0xff]
  %v606 = vld [vmem:[%s4 + $0x128] sm:$0xff]
  %v607 = vld [vmem:[%s4 + $0x130] sm:$0xff]
  %v608 = vld [vmem:[%s4 + $0x138] sm:$0xff]
  %v609 = vld [vmem:[%s4 + $0x140] sm:$0xff]
  %v610 = vld [vmem:[%s4 + $0x148] sm:$0xff]
  %v611 = vld [vmem:[%s4 + $0x150] sm:$0xff]
  %v612 = vld [vmem:[%s4 + $0x158] sm:$0xff]
  %v613 = vld [vmem:[%s4 + $0x160] sm:$0xff]
  %v614 = vld [vmem:[%s4 + $0x168] sm:$0xff]
  %v615 = vld [vmem:[%s4 + $0x170] sm:$0xff]
  %v616 = vld [vmem:[%s4 + $0x178] sm:$0xff]
  %v617 = vld [vmem:[%s4 + $0x180] sm:$0xff]
  %v618 = vld [vmem:[%s4 + $0x188] sm:$0xff]
  %v619 = vld [vmem:[%s4 + $0x190] sm:$0xff]
  %v620 = vld [vmem:[%s4 + $0x198] sm:$0xff]
  %v621 = vld [vmem:[%s4 + $0x1a0] sm:$0xff]
  %v622 = vld [vmem:[%s4 + $0x1a8] sm:$0xff]
  %v623 = vld [vmem:[%s4 + $0x1b0] sm:$0xff]
  %v624 = vld [vmem:[%s4 + $0x1b8] sm:$0xff]
  %v625 = vld [vmem:[%s4 + $0x1c0] sm:$0xff]
  %v626 = vld [vmem:[%s4 + $0x1c8] sm:$0xff]
  %v627 = vld [vmem:[%s4 + $0x1d0] sm:$0xff]
  %v628 = vld [vmem:[%s4 + $0x1d8] sm:$0xff]
  %v629 = vld [vmem:[%s4 + $0x1e0] sm:$0xff]
  %v630 = vld [vmem:[%s4 + $0x1e8] sm:$0xff]
  %v631 = vld [vmem:[%s4 + $0x1f0] sm:$0xff]
  %v632 = vld [vmem:[%s4 + $0x1f8] sm:$0xff]
  %v633 = vld [vmem:[%s5] sm:$0xff]
  %v634 = vld [vmem:[%s5 + $0x8] sm:$0xff]
  %v635 = vld [vmem:[%s5 + $0x10] sm:$0xff]
  %v636 = vld [vmem:[%s5 + $0x18] sm:$0xff]
  %v637 = vld [vmem:[%s5 + $0x20] sm:$0xff]
  %v638 = vld [vmem:[%s5 + $0x28] sm:$0xff]
  %v639 = vld [vmem:[%s5 + $0x30] sm:$0xff]
  %v640 = vld [vmem:[%s5 + $0x38] sm:$0xff]
  %v641 = vld [vmem:[%s5 + $0x40] sm:$0xff]
  %v642 = vld [vmem:[%s5 + $0x48] sm:$0xff]
  %v643 = vld [vmem:[%s5 + $0x50] sm:$0xff]
  %v644 = vld [vmem:[%s5 + $0x58] sm:$0xff]
  %v645 = vld [vmem:[%s5 + $0x60] sm:$0xff]
  %v646 = vld [vmem:[%s5 + $0x68] sm:$0xff]
  %v647 = vld [vmem:[%s5 + $0x70] sm:$0xff]
  %v648 = vld [vmem:[%s5 + $0x78] sm:$0xff]
  %v649 = vld [vmem:[%s5 + $0x80] sm:$0xff]
  %v650 = vld [vmem:[%s5 + $0x88] sm:$0xff]
  %v651 = vld [vmem:[%s5 + $0x90] sm:$0xff]
  %v652 = vld [vmem:[%s5 + $0x98] sm:$0xff]
  %v653 = vld [vmem:[%s5 + $0xa0] sm:$0xff]
  %v654 = vld [vmem:[%s5 + $0xa8] sm:$0xff]
  %v655 = vld [vmem:[%s5 + $0xb0] sm:$0xff]
  %v656 = vld [vmem:[%s5 + $0xb8] sm:$0xff]
  %v657 = vld [vmem:[%s5 + $0xc0] sm:$0xff]
  %v658 = vld [vmem:[%s5 + $0xc8] sm:$0xff]
  %v659 = vld [vmem:[%s5 + $0xd0] sm:$0xff]
  %v660 = vld [vmem:[%s5 + $0xd8] sm:$0xff]
  %v661 = vld [vmem:[%s5 + $0xe0] sm:$0xff]
  %v662 = vld [vmem:[%s5 + $0xe8] sm:$0xff]
  %v663 = vld [vmem:[%s5 + $0xf0] sm:$0xff]
  %v664 = vld [vmem:[%s5 + $0xf8] sm:$0xff]
  %v665 = vld [vmem:[%s5 + $0x100] sm:$0xff]
  %v666 = vld [vmem:[%s5 + $0x108] sm:$0xff]
  %v667 = vld [vmem:[%s5 + $0x110] sm:$0xff]
  %v668 = vld [vmem:[%s5 + $0x118] sm:$0xff]
  %v669 = vld [vmem:[%s5 + $0x120] sm:$0xff]
  %v670 = vld [vmem:[%s5 + $0x128] sm:$0xff]
  %v671 = vld [vmem:[%s5 + $0x130] sm:$0xff]
  %v672 = vld [vmem:[%s5 + $0x138] sm:$0xff]
  %v673 = vld [vmem:[%s5 + $0x140] sm:$0xff]
  %v674 = vld [vmem:[%s5 + $0x148] sm:$0xff]
  %v675 = vld [vmem:[%s5 + $0x150] sm:$0xff]
  %v676 = vld [vmem:[%s5 + $0x158] sm:$0xff]
  %v677 = vld [vmem:[%s5 + $0x160] sm:$0xff]
  %v678 = vld [vmem:[%s5 + $0x168] sm:$0xff]
  %v679 = vld [vmem:[%s5 + $0x170] sm:$0xff]
  %v680 = vld [vmem:[%s5 + $0x178] sm:$0xff]
  %v681 = vld [vmem:[%s5 + $0x180] sm:$0xff]
  %v682 = vld [vmem:[%s5 + $0x188] sm:$0xff]
  %v683 = vld [vmem:[%s5 + $0x190] sm:$0xff]
  %v684 = vld [vmem:[%s5 + $0x198] sm:$0xff]
  %v685 = vld [vmem:[%s5 + $0x1a0] sm:$0xff]
  %v686 = vld [vmem:[%s5 + $0x1a8] sm:$0xff]
  %v687 = vld [vmem:[%s5 + $0x1b0] sm:$0xff]
  %v688 = vld [vmem:[%s5 + $0x1b8] sm:$0xff]
  %v689 = vld [vmem:[%s5 + $0x1c0] sm:$0xff]
  %v690 = vld [vmem:[%s5 + $0x1c8] sm:$0xff]
  %v691 = vld [vmem:[%s5 + $0x1d0] sm:$0xff]
  %v692 = vld [vmem:[%s5 + $0x1d8] sm:$0xff]
  %v693 = vld [vmem:[%s5 + $0x1e0] sm:$0xff]
  %v694 = vld [vmem:[%s5 + $0x1e8] sm:$0xff]
  %v695 = vld [vmem:[%s5 + $0x1f0] sm:$0xff]
  %v696 = vld [vmem:[%s5 + $0x1f8] sm:$0xff]
  %v697 = vld [vmem:[#allocation2] sm:$0xff]
  %v698 = vld [vmem:[#allocation3] sm:$0xff]
  %v699 = vld [vmem:[#allocation4] sm:$0xff]
  %v700 = vld [vmem:[#allocation5] sm:$0xff]
  %701 = vmatpush.msra.mxu0 %v629
  %702 = vmatpush.msra.mxu0 %v625
  %703 = vmatpush.msra.mxu0 %v621
  %704 = vmatpush.msra.mxu0 %v617
  %705 = vmatpush.msra.mxu0 %v613
  %706 = vmatpush.msra.mxu0 %v609
  %707 = vmatpush.msra.mxu0 %v605
  %708 = vmatpush.msra.mxu0 %v601
  %709 = vmatpush.msra.mxu0 %v597
  %710 = vmatpush.msra.mxu0 %v593
  %711 = vmatpush.msra.mxu0 %v589
  %712 = vmatpush.msra.mxu0 %v585
  %713 = vmatpush.msra.mxu0 %v581
  %714 = vmatpush.msra.mxu0 %v577
  %715 = vmatpush.msra.mxu0 %v573
  %716 = vmatpush.msra.mxu0 %v569
  %717 = vmatmul.f32.gmra.mxu0 %v697
  %v718 = vpop.f32.mrf.mxu0
  %v719 = vadd.f32 0.0, %v718
  %720 = vdwg.mxu0
  %721 = vmatpush.msra.mxu0 %v630
  %722 = vmatpush.msra.mxu0 %v626
  %723 = vmatpush.msra.mxu0 %v622
  %724 = vmatpush.msra.mxu0 %v618
  %725 = vmatpush.msra.mxu0 %v614
  %726 = vmatpush.msra.mxu0 %v610
  %727 = vmatpush.msra.mxu0 %v606
  %728 = vmatpush.msra.mxu0 %v602
  %729 = vmatpush.msra.mxu0 %v598
  %730 = vmatpush.msra.mxu0 %v594
  %731 = vmatpush.msra.mxu0 %v590
  %732 = vmatpush.msra.mxu0 %v586
  %733 = vmatpush.msra.mxu0 %v582
  %734 = vmatpush.msra.mxu0 %v578
  %735 = vmatpush.msra.mxu0 %v574
  %736 = vmatpush.msra.mxu0 %v570
  %737 = vmatmul.f32.gmra.mxu0 %v697
  %v738 = vpop.f32.mrf.mxu0
  %v739 = vadd.f32 0.0, %v738
  %740 = vdwg.mxu0
  %741 = vmatpush.msra.mxu0 %v631
  %742 = vmatpush.msra.mxu0 %v627
  %743 = vmatpush.msra.mxu0 %v623
  %744 = vmatpush.msra.mxu0 %v619
  %745 = vmatpush.msra.mxu0 %v615
  %746 = vmatpush.msra.mxu0 %v611
  %747 = vmatpush.msra.mxu0 %v607
  %748 = vmatpush.msra.mxu0 %v603
  %749 = vmatpush.msra.mxu0 %v599
  %750 = vmatpush.msra.mxu0 %v595
  %751 = vmatpush.msra.mxu0 %v591
  %752 = vmatpush.msra.mxu0 %v587
  %753 = vmatpush.msra.mxu0 %v583
  %754 = vmatpush.msra.mxu0 %v579
  %755 = vmatpush.msra.mxu0 %v575
  %756 = vmatpush.msra.mxu0 %v571
  %757 = vmatmul.f32.gmra.mxu0 %v697
  %v758 = vpop.f32.mrf.mxu0
  %v759 = vadd.f32 0.0, %v758
  %760 = vdwg.mxu0
  %761 = vmatpush.msra.mxu0 %v632
  %762 = vmatpush.msra.mxu0 %v628
  %763 = vmatpush.msra.mxu0 %v624
  %764 = vmatpush.msra.mxu0 %v620
  %765 = vmatpush.msra.mxu0 %v616
  %766 = vmatpush.msra.mxu0 %v612
  %767 = vmatpush.msra.mxu0 %v608
  %768 = vmatpush.msra.mxu0 %v604
  %769 = vmatpush.msra.mxu0 %v600
  %770 = vmatpush.msra.mxu0 %v596
  %771 = vmatpush.msra.mxu0 %v592
  %772 = vmatpush.msra.mxu0 %v588
  %773 = vmatpush.msra.mxu0 %v584
  %774 = vmatpush.msra.mxu0 %v580
  %775 = vmatpush.msra.mxu0 %v576
  %776 = vmatpush.msra.mxu0 %v572
  %777 = vmatmul.f32.gmra.mxu0 %v697
  %v778 = vpop.f32.mrf.mxu0
  %v779 = vadd.f32 0.0, %v778
  %780 = vdwg.mxu0
  %v781 = vadd.f32 %v177, %v719
  %v782 = vadd.f32 %v218, %v739
  %v783 = vadd.f32 %v259, %v759
  %v784 = vadd.f32 %v300, %v779
  %785 = vmatpush.msra.mxu0 %v693
  %786 = vmatpush.msra.mxu0 %v689
  %787 = vmatpush.msra.mxu0 %v685
  %788 = vmatpush.msra.mxu0 %v681
  %789 = vmatpush.msra.mxu0 %v677
  %790 = vmatpush.msra.mxu0 %v673
  %791 = vmatpush.msra.mxu0 %v669
  %792 = vmatpush.msra.mxu0 %v665
  %793 = vmatpush.msra.mxu0 %v661
  %794 = vmatpush.msra.mxu0 %v657
  %795 = vmatpush.msra.mxu0 %v653
  %796 = vmatpush.msra.mxu0 %v649
  %797 = vmatpush.msra.mxu0 %v645
  %798 = vmatpush.msra.mxu0 %v641
  %799 = vmatpush.msra.mxu0 %v637
  %800 = vmatpush.msra.mxu0 %v633
  %801 = vmatmul.f32.gmra.mxu0 %v699
  %v802 = vpop.f32.mrf.mxu0
  %v803 = vadd.f32 0.0, %v802
  %804 = vdwg.mxu0
  %805 = vmatpush.msra.mxu0 %v694
  %806 = vmatpush.msra.mxu0 %v690
  %807 = vmatpush.msra.mxu0 %v686
  %808 = vmatpush.msra.mxu0 %v682
  %809 = vmatpush.msra.mxu0 %v678
  %810 = vmatpush.msra.mxu0 %v674
  %811 = vmatpush.msra.mxu0 %v670
  %812 = vmatpush.msra.mxu0 %v666
  %813 = vmatpush.msra.mxu0 %v662
  %814 = vmatpush.msra.mxu0 %v658
  %815 = vmatpush.msra.mxu0 %v654
  %816 = vmatpush.msra.mxu0 %v650
  %817 = vmatpush.msra.mxu0 %v646
  %818 = vmatpush.msra.mxu0 %v642
  %819 = vmatpush.msra.mxu0 %v638
  %820 = vmatpush.msra.mxu0 %v634
  %821 = vmatmul.f32.gmra.mxu0 %v699
  %v822 = vpop.f32.mrf.mxu0
  %v823 = vadd.f32 0.0, %v822
  %824 = vdwg.mxu0
  %825 = vmatpush.msra.mxu0 %v695
  %826 = vmatpush.msra.mxu0 %v691
  %827 = vmatpush.msra.mxu0 %v687
  %828 = vmatpush.msra.mxu0 %v683
  %829 = vmatpush.msra.mxu0 %v679
  %830 = vmatpush.msra.mxu0 %v675
  %831 = vmatpush.msra.mxu0 %v671
  %832 = vmatpush.msra.mxu0 %v667
  %833 = vmatpush.msra.mxu0 %v663
  %834 = vmatpush.msra.mxu0 %v659
  %835 = vmatpush.msra.mxu0 %v655
  %836 = vmatpush.msra.mxu0 %v651
  %837 = vmatpush.msra.mxu0 %v647
  %838 = vmatpush.msra.mxu0 %v643
  %839 = vmatpush.msra.mxu0 %v639
  %840 = vmatpush.msra.mxu0 %v635
  %841 = vmatmul.f32.gmra.mxu0 %v699
  %v842 = vpop.f32.mrf.mxu0
  %v843 = vadd.f32 0.0, %v842
  %844 = vdwg.mxu0
  %845 = vmatpush.msra.mxu0 %v696
  %846 = vmatpush.msra.mxu0 %v692
  %847 = vmatpush.msra.mxu0 %v688
  %848 = vmatpush.msra.mxu0 %v684
  %849 = vmatpush.msra.mxu0 %v680
  %850 = vmatpush.msra.mxu0 %v676
  %851 = vmatpush.msra.mxu0 %v672
  %852 = vmatpush.msra.mxu0 %v668
  %853 = vmatpush.msra.mxu0 %v664
  %854 = vmatpush.msra.mxu0 %v660
  %855 = vmatpush.msra.mxu0 %v656
  %856 = vmatpush.msra.mxu0 %v652
  %857 = vmatpush.msra.mxu0 %v648
  %858 = vmatpush.msra.mxu0 %v644
  %859 = vmatpush.msra.mxu0 %v640
  %860 = vmatpush.msra.mxu0 %v636
  %861 = vmatmul.f32.gmra.mxu0 %v699
  %v862 = vpop.f32.mrf.mxu0
  %v863 = vadd.f32 0.0, %v862
  %864 = vdwg.mxu0
  %v865 = vadd.f32 %v444, %v803
  %v866 = vadd.f32 %v485, %v823
  %v867 = vadd.f32 %v526, %v843
  %v868 = vadd.f32 %v567, %v863
  %v869 = vxor.u32 %v781, 2147483648
  %v870 = vmul.f32 %v869, 1.442695
  %v871 = vpow.pop %v870
  %v872 = vadd.f32 %v871, 1.0
  %v873 = vrcp.pop %v872
  %v874 = vmul.f32 %v872, %v873
  %v875 = vsub.f32 1.0, %v874
  %v876 = vmul.f32 %v873, %v875
  %v877 = vadd.f32 %v873, %v876
  %vm878 = vweird.f32 %v872
  %vm879 = vweird.f32 %v873
  %vm880 = vmor %vm878, %vm879
  %v881 = vsel %vm880, %v873, %v877
  %v882 = vand.u32 2147483647, %v872
  %vm883 = vcmp.eq.f32.partialorder %v882, 8.507059e+37
  %v884 = vand.u32 %v872, 2147483648
  %v885 = vor.u32 1.1754944e-38, %v884
  %v886 = vsel %vm883, %v885, %v881
  %v887 = vmul.f32 1.0, %v886
  %v888 = vxor.u32 %v782, 2147483648
  %v889 = vmul.f32 %v888, 1.442695
  %v890 = vpow.pop %v889
  %v891 = vadd.f32 %v890, 1.0
  %v892 = vrcp.pop %v891
  %v893 = vmul.f32 %v891, %v892
  %v894 = vsub.f32 1.0, %v893
  %v895 = vmul.f32 %v892, %v894
  %v896 = vadd.f32 %v892, %v895
  %vm897 = vweird.f32 %v891
  %vm898 = vweird.f32 %v892
  %vm899 = vmor %vm897, %vm898
  %v900 = vsel %vm899, %v892, %v896
  %v901 = vand.u32 2147483647, %v891
  %vm902 = vcmp.eq.f32.partialorder %v901, 8.507059e+37
  %v903 = vand.u32 %v891, 2147483648
  %v904 = vor.u32 1.1754944e-38, %v903
  %v905 = vsel %vm902, %v904, %v900
  %v906 = vmul.f32 1.0, %v905
  %v907 = vtanh.pop %v783
  %v908 = vxor.u32 %v784, 2147483648
  %v909 = vmul.f32 %v908, 1.442695
  %v910 = vpow.pop %v909
  %v911 = vadd.f32 %v910, 1.0
  %v912 = vrcp.pop %v911
  %v913 = vmul.f32 %v911, %v912
  %v914 = vsub.f32 1.0, %v913
  %v915 = vmul.f32 %v912, %v914
  %v916 = vadd.f32 %v912, %v915
  %vm917 = vweird.f32 %v911
  %vm918 = vweird.f32 %v912
  %vm919 = vmor %vm917, %vm918
  %v920 = vsel %vm919, %v912, %v916
  %v921 = vand.u32 2147483647, %v911
  %vm922 = vcmp.eq.f32.partialorder %v921, 8.507059e+37
  %v923 = vand.u32 %v911, 2147483648
  %v924 = vor.u32 1.1754944e-38, %v923
  %v925 = vsel %vm922, %v924, %v920
  %v926 = vmul.f32 1.0, %v925
  %v927 = vmul.f32 %v906, %v698
  %v928 = vmul.f32 %v887, %v907
  %v929 = vadd.f32 %v927, %v928
  %v930 = vtanh.pop %v929
  %v931 = vmul.f32 %v926, %v930
  %v932 = vxor.u32 %v865, 2147483648
  %v933 = vmul.f32 %v932, 1.442695
  %v934 = vpow.pop %v933
  %v935 = vadd.f32 %v934, 1.0
  %v936 = vrcp.pop %v935
  %v937 = vmul.f32 %v935, %v936
  %v938 = vsub.f32 1.0, %v937
  %v939 = vmul.f32 %v936, %v938
  %v940 = vadd.f32 %v936, %v939
  %vm941 = vweird.f32 %v935
  %vm942 = vweird.f32 %v936
  %vm943 = vmor %vm941, %vm942
  %v944 = vsel %vm943, %v936, %v940
  %v945 = vand.u32 2147483647, %v935
  %vm946 = vcmp.eq.f32.partialorder %v945, 8.507059e+37
  %v947 = vand.u32 %v935, 2147483648
  %v948 = vor.u32 1.1754944e-38, %v947
  %v949 = vsel %vm946, %v948, %v944
  %v950 = vmul.f32 1.0, %v949
  %v951 = vxor.u32 %v866, 2147483648
  %v952 = vmul.f32 %v951, 1.442695
  %v953 = vpow.pop %v952
  %v954 = vadd.f32 %v953, 1.0
  %v955 = vrcp.pop %v954
  %v956 = vmul.f32 %v954, %v955
  %v957 = vsub.f32 1.0, %v956
  %v958 = vmul.f32 %v955, %v957
  %v959 = vadd.f32 %v955, %v958
  %vm960 = vweird.f32 %v954
  %vm961 = vweird.f32 %v955
  %vm962 = vmor %vm960, %vm961
  %v963 = vsel %vm962, %v955, %v959
  %v964 = vand.u32 2147483647, %v954
  %vm965 = vcmp.eq.f32.partialorder %v964, 8.507059e+37
  %v966 = vand.u32 %v954, 2147483648
  %v967 = vor.u32 1.1754944e-38, %v966
  %v968 = vsel %vm965, %v967, %v963
  %v969 = vmul.f32 1.0, %v968
  %v970 = vtanh.pop %v867
  %v971 = vxor.u32 %v868, 2147483648
  %v972 = vmul.f32 %v971, 1.442695
  %v973 = vpow.pop %v972
  %v974 = vadd.f32 %v973, 1.0
  %v975 = vrcp.pop %v974
  %v976 = vmul.f32 %v974, %v975
  %v977 = vsub.f32 1.0, %v976
  %v978 = vmul.f32 %v975, %v977
  %v979 = vadd.f32 %v975, %v978
  %vm980 = vweird.f32 %v974
  %vm981 = vweird.f32 %v975
  %vm982 = vmor %vm980, %vm981
  %v983 = vsel %vm982, %v975, %v979
  %v984 = vand.u32 2147483647, %v974
  %vm985 = vcmp.eq.f32.partialorder %v984, 8.507059e+37
  %v986 = vand.u32 %v974, 2147483648
  %v987 = vor.u32 1.1754944e-38, %v986
  %v988 = vsel %vm985, %v987, %v983
  %v989 = vmul.f32 1.0, %v988
  %v990 = vmul.f32 %v969, %v700
  %v991 = vmul.f32 %v950, %v970
  %v992 = vadd.f32 %v990, %v991
  %v993 = vtanh.pop %v992
  %v994 = vmul.f32 %v989, %v993
  %995 = vst [vmem:[%s8] sm:$0xff] %v931
  %s996 = scalar_lea.vmem %s66, 56
  %997 = vst [vmem:[%s996] sm:$0xff] %v994
  %998 = vmatpush.msra.mxu0 %v629
  %999 = vmatpush.msra.mxu0 %v625
  %1000 = vmatpush.msra.mxu0 %v621
  %1001 = vmatpush.msra.mxu0 %v617
  %1002 = vmatpush.msra.mxu0 %v613
  %1003 = vmatpush.msra.mxu0 %v609
  %1004 = vmatpush.msra.mxu0 %v605
  %1005 = vmatpush.msra.mxu0 %v601
  %1006 = vmatpush.msra.mxu0 %v597
  %1007 = vmatpush.msra.mxu0 %v593
  %1008 = vmatpush.msra.mxu0 %v589
  %1009 = vmatpush.msra.mxu0 %v585
  %1010 = vmatpush.msra.mxu0 %v581
  %1011 = vmatpush.msra.mxu0 %v577
  %1012 = vmatpush.msra.mxu0 %v573
  %1013 = vmatpush.msra.mxu0 %v569
  %1014 = vmatmul.f32.gmra.mxu0 %v931
  %v1015 = vpop.f32.mrf.mxu0
  %v1016 = vadd.f32 0.0, %v1015
  %1017 = vdwg.mxu0
  %1018 = vmatpush.msra.mxu0 %v630
  %1019 = vmatpush.msra.mxu0 %v626
  %1020 = vmatpush.msra.mxu0 %v622
  %1021 = vmatpush.msra.mxu0 %v618
  %1022 = vmatpush.msra.mxu0 %v614
  %1023 = vmatpush.msra.mxu0 %v610
  %1024 = vmatpush.msra.mxu0 %v606
  %1025 = vmatpush.msra.mxu0 %v602
  %1026 = vmatpush.msra.mxu0 %v598
  %1027 = vmatpush.msra.mxu0 %v594
  %1028 = vmatpush.msra.mxu0 %v590
  %1029 = vmatpush.msra.mxu0 %v586
  %1030 = vmatpush.msra.mxu0 %v582
  %1031 = vmatpush.msra.mxu0 %v578
  %1032 = vmatpush.msra.mxu0 %v574
  %1033 = vmatpush.msra.mxu0 %v570
  %1034 = vmatmul.f32.gmra.mxu0 %v931
  %v1035 = vpop.f32.mrf.mxu0
  %v1036 = vadd.f32 0.0, %v1035
  %1037 = vdwg.mxu0
  %1038 = vmatpush.msra.mxu0 %v631
  %1039 = vmatpush.msra.mxu0 %v627
  %1040 = vmatpush.msra.mxu0 %v623
  %1041 = vmatpush.msra.mxu0 %v619
  %1042 = vmatpush.msra.mxu0 %v615
  %1043 = vmatpush.msra.mxu0 %v611
  %1044 = vmatpush.msra.mxu0 %v607
  %1045 = vmatpush.msra.mxu0 %v603
  %1046 = vmatpush.msra.mxu0 %v599
  %1047 = vmatpush.msra.mxu0 %v595
  %1048 = vmatpush.msra.mxu0 %v591
  %1049 = vmatpush.msra.mxu0 %v587
  %1050 = vmatpush.msra.mxu0 %v583
  %1051 = vmatpush.msra.mxu0 %v579
  %1052 = vmatpush.msra.mxu0 %v575
  %1053 = vmatpush.msra.mxu0 %v571
  %1054 = vmatmul.f32.gmra.mxu0 %v931
  %v1055 = vpop.f32.mrf.mxu0
  %v1056 = vadd.f32 0.0, %v1055
  %1057 = vdwg.mxu0
  %1058 = vmatpush.msra.mxu0 %v632
  %1059 = vmatpush.msra.mxu0 %v628
  %1060 = vmatpush.msra.mxu0 %v624
  %1061 = vmatpush.msra.mxu0 %v620
  %1062 = vmatpush.msra.mxu0 %v616
  %1063 = vmatpush.msra.mxu0 %v612
  %1064 = vmatpush.msra.mxu0 %v608
  %1065 = vmatpush.msra.mxu0 %v604
  %1066 = vmatpush.msra.mxu0 %v600
  %1067 = vmatpush.msra.mxu0 %v596
  %1068 = vmatpush.msra.mxu0 %v592
  %1069 = vmatpush.msra.mxu0 %v588
  %1070 = vmatpush.msra.mxu0 %v584
  %1071 = vmatpush.msra.mxu0 %v580
  %1072 = vmatpush.msra.mxu0 %v576
  %1073 = vmatpush.msra.mxu0 %v572
  %1074 = vmatmul.f32.gmra.mxu0 %v931
  %v1075 = vpop.f32.mrf.mxu0
  %v1076 = vadd.f32 0.0, %v1075
  %1077 = vdwg.mxu0
  %v1078 = vadd.f32 %v180, %v1016
  %v1079 = vadd.f32 %v221, %v1036
  %v1080 = vadd.f32 %v262, %v1056
  %v1081 = vadd.f32 %v303, %v1076
  %1082 = vmatpush.msra.mxu0 %v693
  %1083 = vmatpush.msra.mxu0 %v689
  %1084 = vmatpush.msra.mxu0 %v685
  %1085 = vmatpush.msra.mxu0 %v681
  %1086 = vmatpush.msra.mxu0 %v677
  %1087 = vmatpush.msra.mxu0 %v673
  %1088 = vmatpush.msra.mxu0 %v669
  %1089 = vmatpush.msra.mxu0 %v665
  %1090 = vmatpush.msra.mxu0 %v661
  %1091 = vmatpush.msra.mxu0 %v657
  %1092 = vmatpush.msra.mxu0 %v653
  %1093 = vmatpush.msra.mxu0 %v649
  %1094 = vmatpush.msra.mxu0 %v645
  %1095 = vmatpush.msra.mxu0 %v641
  %1096 = vmatpush.msra.mxu0 %v637
  %1097 = vmatpush.msra.mxu0 %v633
  %1098 = vmatmul.f32.gmra.mxu0 %v994
  %v1099 = vpop.f32.mrf.mxu0
  %v1100 = vadd.f32 0.0, %v1099
  %1101 = vdwg.mxu0
  %1102 = vmatpush.msra.mxu0 %v694
  %1103 = vmatpush.msra.mxu0 %v690
  %1104 = vmatpush.msra.mxu0 %v686
  %1105 = vmatpush.msra.mxu0 %v682
  %1106 = vmatpush.msra.mxu0 %v678
  %1107 = vmatpush.msra.mxu0 %v674
  %1108 = vmatpush.msra.mxu0 %v670
  %1109 = vmatpush.msra.mxu0 %v666
  %1110 = vmatpush.msra.mxu0 %v662
  %1111 = vmatpush.msra.mxu0 %v658
  %1112 = vmatpush.msra.mxu0 %v654
  %1113 = vmatpush.msra.mxu0 %v650
  %1114 = vmatpush.msra.mxu0 %v646
  %1115 = vmatpush.msra.mxu0 %v642
  %1116 = vmatpush.msra.mxu0 %v638
  %1117 = vmatpush.msra.mxu0 %v634
  %1118 = vmatmul.f32.gmra.mxu0 %v994
  %v1119 = vpop.f32.mrf.mxu0
  %v1120 = vadd.f32 0.0, %v1119
  %1121 = vdwg.mxu0
  %1122 = vmatpush.msra.mxu0 %v695
  %1123 = vmatpush.msra.mxu0 %v691
  %1124 = vmatpush.msra.mxu0 %v687
  %1125 = vmatpush.msra.mxu0 %v683
  %1126 = vmatpush.msra.mxu0 %v679
  %1127 = vmatpush.msra.mxu0 %v675
  %1128 = vmatpush.msra.mxu0 %v671
  %1129 = vmatpush.msra.mxu0 %v667
  %1130 = vmatpush.msra.mxu0 %v663
  %1131 = vmatpush.msra.mxu0 %v659
  %1132 = vmatpush.msra.mxu0 %v655
  %1133 = vmatpush.msra.mxu0 %v651
  %1134 = vmatpush.msra.mxu0 %v647
  %1135 = vmatpush.msra.mxu0 %v643
  %1136 = vmatpush.msra.mxu0 %v639
  %1137 = vmatpush.msra.mxu0 %v635
  %1138 = vmatmul.f32.gmra.mxu0 %v994
  %v1139 = vpop.f32.mrf.mxu0
  %v1140 = vadd.f32 0.0, %v1139
  %1141 = vdwg.mxu0
  %1142 = vmatpush.msra.mxu0 %v696
  %1143 = vmatpush.msra.mxu0 %v692
  %1144 = vmatpush.msra.mxu0 %v688
  %1145 = vmatpush.msra.mxu0 %v684
  %1146 = vmatpush.msra.mxu0 %v680
  %1147 = vmatpush.msra.mxu0 %v676
  %1148 = vmatpush.msra.mxu0 %v672
  %1149 = vmatpush.msra.mxu0 %v668
  %1150 = vmatpush.msra.mxu0 %v664
  %1151 = vmatpush.msra.mxu0 %v660
  %1152 = vmatpush.msra.mxu0 %v656
  %1153 = vmatpush.msra.mxu0 %v652
  %1154 = vmatpush.msra.mxu0 %v648
  %1155 = vmatpush.msra.mxu0 %v644
  %1156 = vmatpush.msra.mxu0 %v640
  %1157 = vmatpush.msra.mxu0 %v636
  %1158 = vmatmul.f32.gmra.mxu0 %v994
  %v1159 = vpop.f32.mrf.mxu0
  %v1160 = vadd.f32 0.0, %v1159
  %1161 = vdwg.mxu0
  %v1162 = vadd.f32 %v441, %v1100
  %v1163 = vadd.f32 %v482, %v1120
  %v1164 = vadd.f32 %v523, %v1140
  %v1165 = vadd.f32 %v564, %v1160
  %v1166 = vxor.u32 %v1078, 2147483648
  %v1167 = vmul.f32 %v1166, 1.442695
  %v1168 = vpow.pop %v1167
  %v1169 = vadd.f32 %v1168, 1.0
  %v1170 = vrcp.pop %v1169
  %v1171 = vmul.f32 %v1169, %v1170
  %v1172 = vsub.f32 1.0, %v1171
  %v1173 = vmul.f32 %v1170, %v1172
  %v1174 = vadd.f32 %v1170, %v1173
  %vm1175 = vweird.f32 %v1169
  %vm1176 = vweird.f32 %v1170
  %vm1177 = vmor %vm1175, %vm1176
  %v1178 = vsel %vm1177, %v1170, %v1174
  %v1179 = vand.u32 2147483647, %v1169
  %vm1180 = vcmp.eq.f32.partialorder %v1179, 8.507059e+37
  %v1181 = vand.u32 %v1169, 2147483648
  %v1182 = vor.u32 1.1754944e-38, %v1181
  %v1183 = vsel %vm1180, %v1182, %v1178
  %v1184 = vmul.f32 1.0, %v1183
  %v1185 = vxor.u32 %v1079, 2147483648
  %v1186 = vmul.f32 %v1185, 1.442695
  %v1187 = vpow.pop %v1186
  %v1188 = vadd.f32 %v1187, 1.0
  %v1189 = vrcp.pop %v1188
  %v1190 = vmul.f32 %v1188, %v1189
  %v1191 = vsub.f32 1.0, %v1190
  %v1192 = vmul.f32 %v1189, %v1191
  %v1193 = vadd.f32 %v1189, %v1192
  %vm1194 = vweird.f32 %v1188
  %vm1195 = vweird.f32 %v1189
  %vm1196 = vmor %vm1194, %vm1195
  %v1197 = vsel %vm1196, %v1189, %v1193
  %v1198 = vand.u32 2147483647, %v1188
  %vm1199 = vcmp.eq.f32.partialorder %v1198, 8.507059e+37
  %v1200 = vand.u32 %v1188, 2147483648
  %v1201 = vor.u32 1.1754944e-38, %v1200
  %v1202 = vsel %vm1199, %v1201, %v1197
  %v1203 = vmul.f32 1.0, %v1202
  %v1204 = vtanh.pop %v1080
  %v1205 = vxor.u32 %v1081, 2147483648
  %v1206 = vmul.f32 %v1205, 1.442695
  %v1207 = vpow.pop %v1206
  %v1208 = vadd.f32 %v1207, 1.0
  %v1209 = vrcp.pop %v1208
  %v1210 = vmul.f32 %v1208, %v1209
  %v1211 = vsub.f32 1.0, %v1210
  %v1212 = vmul.f32 %v1209, %v1211
  %v1213 = vadd.f32 %v1209, %v1212
  %vm1214 = vweird.f32 %v1208
  %vm1215 = vweird.f32 %v1209
  %vm1216 = vmor %vm1214, %vm1215
  %v1217 = vsel %vm1216, %v1209, %v1213
  %v1218 = vand.u32 2147483647, %v1208
  %vm1219 = vcmp.eq.f32.partialorder %v1218, 8.507059e+37
  %v1220 = vand.u32 %v1208, 2147483648
  %v1221 = vor.u32 1.1754944e-38, %v1220
  %v1222 = vsel %vm1219, %v1221, %v1217
  %v1223 = vmul.f32 1.0, %v1222
  %v1224 = vmul.f32 %v1203, %v929
  %v1225 = vmul.f32 %v1184, %v1204
  %v1226 = vadd.f32 %v1224, %v1225
  %v1227 = vtanh.pop %v1226
  %v1228 = vmul.f32 %v1223, %v1227
  %v1229 = vxor.u32 %v1162, 2147483648
  %v1230 = vmul.f32 %v1229, 1.442695
  %v1231 = vpow.pop %v1230
  %v1232 = vadd.f32 %v1231, 1.0
  %v1233 = vrcp.pop %v1232
  %v1234 = vmul.f32 %v1232, %v1233
  %v1235 = vsub.f32 1.0, %v1234
  %v1236 = vmul.f32 %v1233, %v1235
  %v1237 = vadd.f32 %v1233, %v1236
  %vm1238 = vweird.f32 %v1232
  %vm1239 = vweird.f32 %v1233
  %vm1240 = vmor %vm1238, %vm1239
  %v1241 = vsel %vm1240, %v1233, %v1237
  %v1242 = vand.u32 2147483647, %v1232
  %vm1243 = vcmp.eq.f32.partialorder %v1242, 8.507059e+37
  %v1244 = vand.u32 %v1232, 2147483648
  %v1245 = vor.u32 1.1754944e-38, %v1244
  %v1246 = vsel %vm1243, %v1245, %v1241
  %v1247 = vmul.f32 1.0, %v1246
  %v1248 = vxor.u32 %v1163, 2147483648
  %v1249 = vmul.f32 %v1248, 1.442695
  %v1250 = vpow.pop %v1249
  %v1251 = vadd.f32 %v1250, 1.0
  %v1252 = vrcp.pop %v1251
  %v1253 = vmul.f32 %v1251, %v1252
  %v1254 = vsub.f32 1.0, %v1253
  %v1255 = vmul.f32 %v1252, %v1254
  %v1256 = vadd.f32 %v1252, %v1255
  %vm1257 = vweird.f32 %v1251
  %vm1258 = vweird.f32 %v1252
  %vm1259 = vmor %vm1257, %vm1258
  %v1260 = vsel %vm1259, %v1252, %v1256
  %v1261 = vand.u32 2147483647, %v1251
  %vm1262 = vcmp.eq.f32.partialorder %v1261, 8.507059e+37
  %v1263 = vand.u32 %v1251, 2147483648
  %v1264 = vor.u32 1.1754944e-38, %v1263
  %v1265 = vsel %vm1262, %v1264, %v1260
  %v1266 = vmul.f32 1.0, %v1265
  %v1267 = vtanh.pop %v1164
  %v1268 = vxor.u32 %v1165, 2147483648
  %v1269 = vmul.f32 %v1268, 1.442695
  %v1270 = vpow.pop %v1269
  %v1271 = vadd.f32 %v1270, 1.0
  %v1272 = vrcp.pop %v1271
  %v1273 = vmul.f32 %v1271, %v1272
  %v1274 = vsub.f32 1.0, %v1273
  %v1275 = vmul.f32 %v1272, %v1274
  %v1276 = vadd.f32 %v1272, %v1275
  %vm1277 = vweird.f32 %v1271
  %vm1278 = vweird.f32 %v1272
  %vm1279 = vmor %vm1277, %vm1278
  %v1280 = vsel %vm1279, %v1272, %v1276
  %v1281 = vand.u32 2147483647, %v1271
  %vm1282 = vcmp.eq.f32.partialorder %v1281, 8.507059e+37
  %v1283 = vand.u32 %v1271, 2147483648
  %v1284 = vor.u32 1.1754944e-38, %v1283
  %v1285 = vsel %vm1282, %v1284, %v1280
  %v1286 = vmul.f32 1.0, %v1285
  %v1287 = vmul.f32 %v1266, %v992
  %v1288 = vmul.f32 %v1247, %v1267
  %v1289 = vadd.f32 %v1287, %v1288
  %v1290 = vtanh.pop %v1289
  %v1291 = vmul.f32 %v1286, %v1290
  %s1292 = scalar_lea.vmem %s8, 8
  %1293 = vst [vmem:[%s1292] sm:$0xff] %v1228
  %s1294 = scalar_lea.vmem %s66, 48
  %1295 = vst [vmem:[%s1294] sm:$0xff] %v1291
  %1296 = vmatpush.msra.mxu0 %v629
  %1297 = vmatpush.msra.mxu0 %v625
  %1298 = vmatpush.msra.mxu0 %v621
  %1299 = vmatpush.msra.mxu0 %v617
  %1300 = vmatpush.msra.mxu0 %v613
  %1301 = vmatpush.msra.mxu0 %v609
  %1302 = vmatpush.msra.mxu0 %v605
  %1303 = vmatpush.msra.mxu0 %v601
  %1304 = vmatpush.msra.mxu0 %v597
  %1305 = vmatpush.msra.mxu0 %v593
  %1306 = vmatpush.msra.mxu0 %v589
  %1307 = vmatpush.msra.mxu0 %v585
  %1308 = vmatpush.msra.mxu0 %v581
  %1309 = vmatpush.msra.mxu0 %v577
  %1310 = vmatpush.msra.mxu0 %v573
  %1311 = vmatpush.msra.mxu0 %v569
  %1312 = vmatmul.f32.gmra.mxu0 %v1228
  %v1313 = vpop.f32.mrf.mxu0
  %v1314 = vadd.f32 0.0, %v1313
  %1315 = vdwg.mxu0
  %1316 = vmatpush.msra.mxu0 %v630
  %1317 = vmatpush.msra.mxu0 %v626
  %1318 = vmatpush.msra.mxu0 %v622
  %1319 = vmatpush.msra.mxu0 %v618
  %1320 = vmatpush.msra.mxu0 %v614
  %1321 = vmatpush.msra.mxu0 %v610
  %1322 = vmatpush.msra.mxu0 %v606
  %1323 = vmatpush.msra.mxu0 %v602
  %1324 = vmatpush.msra.mxu0 %v598
  %1325 = vmatpush.msra.mxu0 %v594
  %1326 = vmatpush.msra.mxu0 %v590
  %1327 = vmatpush.msra.mxu0 %v586
  %1328 = vmatpush.msra.mxu0 %v582
  %1329 = vmatpush.msra.mxu0 %v578
  %1330 = vmatpush.msra.mxu0 %v574
  %1331 = vmatpush.msra.mxu0 %v570
  %1332 = vmatmul.f32.gmra.mxu0 %v1228
  %v1333 = vpop.f32.mrf.mxu0
  %v1334 = vadd.f32 0.0, %v1333
  %1335 = vdwg.mxu0
  %1336 = vmatpush.msra.mxu0 %v631
  %1337 = vmatpush.msra.mxu0 %v627
  %1338 = vmatpush.msra.mxu0 %v623
  %1339 = vmatpush.msra.mxu0 %v619
  %1340 = vmatpush.msra.mxu0 %v615
  %1341 = vmatpush.msra.mxu0 %v611
  %1342 = vmatpush.msra.mxu0 %v607
  %1343 = vmatpush.msra.mxu0 %v603
  %1344 = vmatpush.msra.mxu0 %v599
  %1345 = vmatpush.msra.mxu0 %v595
  %1346 = vmatpush.msra.mxu0 %v591
  %1347 = vmatpush.msra.mxu0 %v587
  %1348 = vmatpush.msra.mxu0 %v583
  %1349 = vmatpush.msra.mxu0 %v579
  %1350 = vmatpush.msra.mxu0 %v575
  %1351 = vmatpush.msra.mxu0 %v571
  %1352 = vmatmul.f32.gmra.mxu0 %v1228
  %v1353 = vpop.f32.mrf.mxu0
  %v1354 = vadd.f32 0.0, %v1353
  %1355 = vdwg.mxu0
  %1356 = vmatpush.msra.mxu0 %v632
  %1357 = vmatpush.msra.mxu0 %v628
  %1358 = vmatpush.msra.mxu0 %v624
  %1359 = vmatpush.msra.mxu0 %v620
  %1360 = vmatpush.msra.mxu0 %v616
  %1361 = vmatpush.msra.mxu0 %v612
  %1362 = vmatpush.msra.mxu0 %v608
  %1363 = vmatpush.msra.mxu0 %v604
  %1364 = vmatpush.msra.mxu0 %v600
  %1365 = vmatpush.msra.mxu0 %v596
  %1366 = vmatpush.msra.mxu0 %v592
  %1367 = vmatpush.msra.mxu0 %v588
  %1368 = vmatpush.msra.mxu0 %v584
  %1369 = vmatpush.msra.mxu0 %v580
  %1370 = vmatpush.msra.mxu0 %v576
  %1371 = vmatpush.msra.mxu0 %v572
  %1372 = vmatmul.f32.gmra.mxu0 %v1228
  %v1373 = vpop.f32.mrf.mxu0
  %v1374 = vadd.f32 0.0, %v1373
  %1375 = vdwg.mxu0
  %v1376 = vadd.f32 %v183, %v1314
  %v1377 = vadd.f32 %v224, %v1334
  %v1378 = vadd.f32 %v265, %v1354
  %v1379 = vadd.f32 %v306, %v1374
  %1380 = vmatpush.msra.mxu0 %v693
  %1381 = vmatpush.msra.mxu0 %v689
  %1382 = vmatpush.msra.mxu0 %v685
  %1383 = vmatpush.msra.mxu0 %v681
  %1384 = vmatpush.msra.mxu0 %v677
  %1385 = vmatpush.msra.mxu0 %v673
  %1386 = vmatpush.msra.mxu0 %v669
  %1387 = vmatpush.msra.mxu0 %v665
  %1388 = vmatpush.msra.mxu0 %v661
  %1389 = vmatpush.msra.mxu0 %v657
  %1390 = vmatpush.msra.mxu0 %v653
  %1391 = vmatpush.msra.mxu0 %v649
  %1392 = vmatpush.msra.mxu0 %v645
  %1393 = vmatpush.msra.mxu0 %v641
  %1394 = vmatpush.msra.mxu0 %v637
  %1395 = vmatpush.msra.mxu0 %v633
  %1396 = vmatmul.f32.gmra.mxu0 %v1291
  %v1397 = vpop.f32.mrf.mxu0
  %v1398 = vadd.f32 0.0, %v1397
  %1399 = vdwg.mxu0
  %1400 = vmatpush.msra.mxu0 %v694
  %1401 = vmatpush.msra.mxu0 %v690
  %1402 = vmatpush.msra.mxu0 %v686
  %1403 = vmatpush.msra.mxu0 %v682
  %1404 = vmatpush.msra.mxu0 %v678
  %1405 = vmatpush.msra.mxu0 %v674
  %1406 = vmatpush.msra.mxu0 %v670
  %1407 = vmatpush.msra.mxu0 %v666
  %1408 = vmatpush.msra.mxu0 %v662
  %1409 = vmatpush.msra.mxu0 %v658
  %1410 = vmatpush.msra.mxu0 %v654
  %1411 = vmatpush.msra.mxu0 %v650
  %1412 = vmatpush.msra.mxu0 %v646
  %1413 = vmatpush.msra.mxu0 %v642
  %1414 = vmatpush.msra.mxu0 %v638
  %1415 = vmatpush.msra.mxu0 %v634
  %1416 = vmatmul.f32.gmra.mxu0 %v1291
  %v1417 = vpop.f32.mrf.mxu0
  %v1418 = vadd.f32 0.0, %v1417
  %1419 = vdwg.mxu0
  %1420 = vmatpush.msra.mxu0 %v695
  %1421 = vmatpush.msra.mxu0 %v691
  %1422 = vmatpush.msra.mxu0 %v687
  %1423 = vmatpush.msra.mxu0 %v683
  %1424 = vmatpush.msra.mxu0 %v679
  %1425 = vmatpush.msra.mxu0 %v675
  %1426 = vmatpush.msra.mxu0 %v671
  %1427 = vmatpush.msra.mxu0 %v667
  %1428 = vmatpush.msra.mxu0 %v663
  %1429 = vmatpush.msra.mxu0 %v659
  %1430 = vmatpush.msra.mxu0 %v655
  %1431 = vmatpush.msra.mxu0 %v651
  %1432 = vmatpush.msra.mxu0 %v647
  %1433 = vmatpush.msra.mxu0 %v643
  %1434 = vmatpush.msra.mxu0 %v639
  %1435 = vmatpush.msra.mxu0 %v635
  %1436 = vmatmul.f32.gmra.mxu0 %v1291
  %v1437 = vpop.f32.mrf.mxu0
  %v1438 = vadd.f32 0.0, %v1437
  %1439 = vdwg.mxu0
  %1440 = vmatpush.msra.mxu0 %v696
  %1441 = vmatpush.msra.mxu0 %v692
  %1442 = vmatpush.msra.mxu0 %v688
  %1443 = vmatpush.msra.mxu0 %v684
  %1444 = vmatpush.msra.mxu0 %v680
  %1445 = vmatpush.msra.mxu0 %v676
  %1446 = vmatpush.msra.mxu0 %v672
  %1447 = vmatpush.msra.mxu0 %v668
  %1448 = vmatpush.msra.mxu0 %v664
  %1449 = vmatpush.msra.mxu0 %v660
  %1450 = vmatpush.msra.mxu0 %v656
  %1451 = vmatpush.msra.mxu0 %v652
  %1452 = vmatpush.msra.mxu0 %v648
  %1453 = vmatpush.msra.mxu0 %v644
  %1454 = vmatpush.msra.mxu0 %v640
  %1455 = vmatpush.msra.mxu0 %v636
  %1456 = vmatmul.f32.gmra.mxu0 %v1291
  %v1457 = vpop.f32.mrf.mxu0
  %v1458 = vadd.f32 0.0, %v1457
  %1459 = vdwg.mxu0
  %v1460 = vadd.f32 %v438, %v1398
  %v1461 = vadd.f32 %v479, %v1418
  %v1462 = vadd.f32 %v520, %v1438
  %v1463 = vadd.f32 %v561, %v1458
  %v1464 = vxor.u32 %v1376, 2147483648
  %v1465 = vmul.f32 %v1464, 1.442695
  %v1466 = vpow.pop %v1465
  %v1467 = vadd.f32 %v1466, 1.0
  %v1468 = vrcp.pop %v1467
  %v1469 = vmul.f32 %v1467, %v1468
  %v1470 = vsub.f32 1.0, %v1469
  %v1471 = vmul.f32 %v1468, %v1470
  %v1472 = vadd.f32 %v1468, %v1471
  %vm1473 = vweird.f32 %v1467
  %vm1474 = vweird.f32 %v1468
  %vm1475 = vmor %vm1473, %vm1474
  %v1476 = vsel %vm1475, %v1468, %v1472
  %v1477 = vand.u32 2147483647, %v1467
  %vm1478 = vcmp.eq.f32.partialorder %v1477, 8.507059e+37
  %v1479 = vand.u32 %v1467, 2147483648
  %v1480 = vor.u32 1.1754944e-38, %v1479
  %v1481 = vsel %vm1478, %v1480, %v1476
  %v1482 = vmul.f32 1.0, %v1481
  %v1483 = vxor.u32 %v1377, 2147483648
  %v1484 = vmul.f32 %v1483, 1.442695
  %v1485 = vpow.pop %v1484
  %v1486 = vadd.f32 %v1485, 1.0
  %v1487 = vrcp.pop %v1486
  %v1488 = vmul.f32 %v1486, %v1487
  %v1489 = vsub.f32 1.0, %v1488
  %v1490 = vmul.f32 %v1487, %v1489
  %v1491 = vadd.f32 %v1487, %v1490
  %vm1492 = vweird.f32 %v1486
  %vm1493 = vweird.f32 %v1487
  %vm1494 = vmor %vm1492, %vm1493
  %v1495 = vsel %vm1494, %v1487, %v1491
  %v1496 = vand.u32 2147483647, %v1486
  %vm1497 = vcmp.eq.f32.partialorder %v1496, 8.507059e+37
  %v1498 = vand.u32 %v1486, 2147483648
  %v1499 = vor.u32 1.1754944e-38, %v1498
  %v1500 = vsel %vm1497, %v1499, %v1495
  %v1501 = vmul.f32 1.0, %v1500
  %v1502 = vtanh.pop %v1378
  %v1503 = vxor.u32 %v1379, 2147483648
  %v1504 = vmul.f32 %v1503, 1.442695
  %v1505 = vpow.pop %v1504
  %v1506 = vadd.f32 %v1505, 1.0
  %v1507 = vrcp.pop %v1506
  %v1508 = vmul.f32 %v1506, %v1507
  %v1509 = vsub.f32 1.0, %v1508
  %v1510 = vmul.f32 %v1507, %v1509
  %v1511 = vadd.f32 %v1507, %v1510
  %vm1512 = vweird.f32 %v1506
  %vm1513 = vweird.f32 %v1507
  %vm1514 = vmor %vm1512, %vm1513
  %v1515 = vsel %vm1514, %v1507, %v1511
  %v1516 = vand.u32 2147483647, %v1506
  %vm1517 = vcmp.eq.f32.partialorder %v1516, 8.507059e+37
  %v1518 = vand.u32 %v1506, 2147483648
  %v1519 = vor.u32 1.1754944e-38, %v1518
  %v1520 = vsel %vm1517, %v1519, %v1515
  %v1521 = vmul.f32 1.0, %v1520
  %v1522 = vmul.f32 %v1501, %v1226
  %v1523 = vmul.f32 %v1482, %v1502
  %v1524 = vadd.f32 %v1522, %v1523
  %v1525 = vtanh.pop %v1524
  %v1526 = vmul.f32 %v1521, %v1525
  %v1527 = vxor.u32 %v1460, 2147483648
  %v1528 = vmul.f32 %v1527, 1.442695
  %v1529 = vpow.pop %v1528
  %v1530 = vadd.f32 %v1529, 1.0
  %v1531 = vrcp.pop %v1530
  %v1532 = vmul.f32 %v1530, %v1531
  %v1533 = vsub.f32 1.0, %v1532
  %v1534 = vmul.f32 %v1531, %v1533
  %v1535 = vadd.f32 %v1531, %v1534
  %vm1536 = vweird.f32 %v1530
  %vm1537 = vweird.f32 %v1531
  %vm1538 = vmor %vm1536, %vm1537
  %v1539 = vsel %vm1538, %v1531, %v1535
  %v1540 = vand.u32 2147483647, %v1530
  %vm1541 = vcmp.eq.f32.partialorder %v1540, 8.507059e+37
  %v1542 = vand.u32 %v1530, 2147483648
  %v1543 = vor.u32 1.1754944e-38, %v1542
  %v1544 = vsel %vm1541, %v1543, %v1539
  %v1545 = vmul.f32 1.0, %v1544
  %v1546 = vxor.u32 %v1461, 2147483648
  %v1547 = vmul.f32 %v1546, 1.442695
  %v1548 = vpow.pop %v1547
  %v1549 = vadd.f32 %v1548, 1.0
  %v1550 = vrcp.pop %v1549
  %v1551 = vmul.f32 %v1549, %v1550
  %v1552 = vsub.f32 1.0, %v1551
  %v1553 = vmul.f32 %v1550, %v1552
  %v1554 = vadd.f32 %v1550, %v1553
  %vm1555 = vweird.f32 %v1549
  %vm1556 = vweird.f32 %v1550
  %vm1557 = vmor %vm1555, %vm1556
  %v1558 = vsel %vm1557, %v1550, %v1554
  %v1559 = vand.u32 2147483647, %v1549
  %vm1560 = vcmp.eq.f32.partialorder %v1559, 8.507059e+37
  %v1561 = vand.u32 %v1549, 2147483648
  %v1562 = vor.u32 1.1754944e-38, %v1561
  %v1563 = vsel %vm1560, %v1562, %v1558
  %v1564 = vmul.f32 1.0, %v1563
  %v1565 = vtanh.pop %v1462
  %v1566 = vxor.u32 %v1463, 2147483648
  %v1567 = vmul.f32 %v1566, 1.442695
  %v1568 = vpow.pop %v1567
  %v1569 = vadd.f32 %v1568, 1.0
  %v1570 = vrcp.pop %v1569
  %v1571 = vmul.f32 %v1569, %v1570
  %v1572 = vsub.f32 1.0, %v1571
  %v1573 = vmul.f32 %v1570, %v1572
  %v1574 = vadd.f32 %v1570, %v1573
  %vm1575 = vweird.f32 %v1569
  %vm1576 = vweird.f32 %v1570
  %vm1577 = vmor %vm1575, %vm1576
  %v1578 = vsel %vm1577, %v1570, %v1574
  %v1579 = vand.u32 2147483647, %v1569
  %vm1580 = vcmp.eq.f32.partialorder %v1579, 8.507059e+37
  %v1581 = vand.u32 %v1569, 2147483648
  %v1582 = vor.u32 1.1754944e-38, %v1581
  %v1583 = vsel %vm1580, %v1582, %v1578
  %v1584 = vmul.f32 1.0, %v1583
  %v1585 = vmul.f32 %v1564, %v1289
  %v1586 = vmul.f32 %v1545, %v1565
  %v1587 = vadd.f32 %v1585, %v1586
  %v1588 = vtanh.pop %v1587
  %v1589 = vmul.f32 %v1584, %v1588
  %s1590 = scalar_lea.vmem %s8, 16
  %1591 = vst [vmem:[%s1590] sm:$0xff] %v1526
  %s1592 = scalar_lea.vmem %s66, 40
  %1593 = vst [vmem:[%s1592] sm:$0xff] %v1589
  %1594 = vmatpush.msra.mxu0 %v629
  %1595 = vmatpush.msra.mxu0 %v625
  %1596 = vmatpush.msra.mxu0 %v621
  %1597 = vmatpush.msra.mxu0 %v617
  %1598 = vmatpush.msra.mxu0 %v613
  %1599 = vmatpush.msra.mxu0 %v609
  %1600 = vmatpush.msra.mxu0 %v605
  %1601 = vmatpush.msra.mxu0 %v601
  %1602 = vmatpush.msra.mxu0 %v597
  %1603 = vmatpush.msra.mxu0 %v593
  %1604 = vmatpush.msra.mxu0 %v589
  %1605 = vmatpush.msra.mxu0 %v585
  %1606 = vmatpush.msra.mxu0 %v581
  %1607 = vmatpush.msra.mxu0 %v577
  %1608 = vmatpush.msra.mxu0 %v573
  %1609 = vmatpush.msra.mxu0 %v569
  %1610 = vmatmul.f32.gmra.mxu0 %v1526
  %v1611 = vpop.f32.mrf.mxu0
  %v1612 = vadd.f32 0.0, %v1611
  %1613 = vdwg.mxu0
  %1614 = vmatpush.msra.mxu0 %v630
  %1615 = vmatpush.msra.mxu0 %v626
  %1616 = vmatpush.msra.mxu0 %v622
  %1617 = vmatpush.msra.mxu0 %v618
  %1618 = vmatpush.msra.mxu0 %v614
  %1619 = vmatpush.msra.mxu0 %v610
  %1620 = vmatpush.msra.mxu0 %v606
  %1621 = vmatpush.msra.mxu0 %v602
  %1622 = vmatpush.msra.mxu0 %v598
  %1623 = vmatpush.msra.mxu0 %v594
  %1624 = vmatpush.msra.mxu0 %v590
  %1625 = vmatpush.msra.mxu0 %v586
  %1626 = vmatpush.msra.mxu0 %v582
  %1627 = vmatpush.msra.mxu0 %v578
  %1628 = vmatpush.msra.mxu0 %v574
  %1629 = vmatpush.msra.mxu0 %v570
  %1630 = vmatmul.f32.gmra.mxu0 %v1526
  %v1631 = vpop.f32.mrf.mxu0
  %v1632 = vadd.f32 0.0, %v1631
  %1633 = vdwg.mxu0
  %1634 = vmatpush.msra.mxu0 %v631
  %1635 = vmatpush.msra.mxu0 %v627
  %1636 = vmatpush.msra.mxu0 %v623
  %1637 = vmatpush.msra.mxu0 %v619
  %1638 = vmatpush.msra.mxu0 %v615
  %1639 = vmatpush.msra.mxu0 %v611
  %1640 = vmatpush.msra.mxu0 %v607
  %1641 = vmatpush.msra.mxu0 %v603
  %1642 = vmatpush.msra.mxu0 %v599
  %1643 = vmatpush.msra.mxu0 %v595
  %1644 = vmatpush.msra.mxu0 %v591
  %1645 = vmatpush.msra.mxu0 %v587
  %1646 = vmatpush.msra.mxu0 %v583
  %1647 = vmatpush.msra.mxu0 %v579
  %1648 = vmatpush.msra.mxu0 %v575
  %1649 = vmatpush.msra.mxu0 %v571
  %1650 = vmatmul.f32.gmra.mxu0 %v1526
  %v1651 = vpop.f32.mrf.mxu0
  %v1652 = vadd.f32 0.0, %v1651
  %1653 = vdwg.mxu0
  %1654 = vmatpush.msra.mxu0 %v632
  %1655 = vmatpush.msra.mxu0 %v628
  %1656 = vmatpush.msra.mxu0 %v624
  %1657 = vmatpush.msra.mxu0 %v620
  %1658 = vmatpush.msra.mxu0 %v616
  %1659 = vmatpush.msra.mxu0 %v612
  %1660 = vmatpush.msra.mxu0 %v608
  %1661 = vmatpush.msra.mxu0 %v604
  %1662 = vmatpush.msra.mxu0 %v600
  %1663 = vmatpush.msra.mxu0 %v596
  %1664 = vmatpush.msra.mxu0 %v592
  %1665 = vmatpush.msra.mxu0 %v588
  %1666 = vmatpush.msra.mxu0 %v584
  %1667 = vmatpush.msra.mxu0 %v580
  %1668 = vmatpush.msra.mxu0 %v576
  %1669 = vmatpush.msra.mxu0 %v572
  %1670 = vmatmul.f32.gmra.mxu0 %v1526
  %v1671 = vpop.f32.mrf.mxu0
  %v1672 = vadd.f32 0.0, %v1671
  %1673 = vdwg.mxu0
  %v1674 = vadd.f32 %v186, %v1612
  %v1675 = vadd.f32 %v227, %v1632
  %v1676 = vadd.f32 %v268, %v1652
  %v1677 = vadd.f32 %v309, %v1672
  %1678 = vmatpush.msra.mxu0 %v693
  %1679 = vmatpush.msra.mxu0 %v689
  %1680 = vmatpush.msra.mxu0 %v685
  %1681 = vmatpush.msra.mxu0 %v681
  %1682 = vmatpush.msra.mxu0 %v677
  %1683 = vmatpush.msra.mxu0 %v673
  %1684 = vmatpush.msra.mxu0 %v669
  %1685 = vmatpush.msra.mxu0 %v665
  %1686 = vmatpush.msra.mxu0 %v661
  %1687 = vmatpush.msra.mxu0 %v657
  %1688 = vmatpush.msra.mxu0 %v653
  %1689 = vmatpush.msra.mxu0 %v649
  %1690 = vmatpush.msra.mxu0 %v645
  %1691 = vmatpush.msra.mxu0 %v641
  %1692 = vmatpush.msra.mxu0 %v637
  %1693 = vmatpush.msra.mxu0 %v633
  %1694 = vmatmul.f32.gmra.mxu0 %v1589
  %v1695 = vpop.f32.mrf.mxu0
  %v1696 = vadd.f32 0.0, %v1695
  %1697 = vdwg.mxu0
  %1698 = vmatpush.msra.mxu0 %v694
  %1699 = vmatpush.msra.mxu0 %v690
  %1700 = vmatpush.msra.mxu0 %v686
  %1701 = vmatpush.msra.mxu0 %v682
  %1702 = vmatpush.msra.mxu0 %v678
  %1703 = vmatpush.msra.mxu0 %v674
  %1704 = vmatpush.msra.mxu0 %v670
  %1705 = vmatpush.msra.mxu0 %v666
  %1706 = vmatpush.msra.mxu0 %v662
  %1707 = vmatpush.msra.mxu0 %v658
  %1708 = vmatpush.msra.mxu0 %v654
  %1709 = vmatpush.msra.mxu0 %v650
  %1710 = vmatpush.msra.mxu0 %v646
  %1711 = vmatpush.msra.mxu0 %v642
  %1712 = vmatpush.msra.mxu0 %v638
  %1713 = vmatpush.msra.mxu0 %v634
  %1714 = vmatmul.f32.gmra.mxu0 %v1589
  %v1715 = vpop.f32.mrf.mxu0
  %v1716 = vadd.f32 0.0, %v1715
  %1717 = vdwg.mxu0
  %1718 = vmatpush.msra.mxu0 %v695
  %1719 = vmatpush.msra.mxu0 %v691
  %1720 = vmatpush.msra.mxu0 %v687
  %1721 = vmatpush.msra.mxu0 %v683
  %1722 = vmatpush.msra.mxu0 %v679
  %1723 = vmatpush.msra.mxu0 %v675
  %1724 = vmatpush.msra.mxu0 %v671
  %1725 = vmatpush.msra.mxu0 %v667
  %1726 = vmatpush.msra.mxu0 %v663
  %1727 = vmatpush.msra.mxu0 %v659
  %1728 = vmatpush.msra.mxu0 %v655
  %1729 = vmatpush.msra.mxu0 %v651
  %1730 = vmatpush.msra.mxu0 %v647
  %1731 = vmatpush.msra.mxu0 %v643
  %1732 = vmatpush.msra.mxu0 %v639
  %1733 = vmatpush.msra.mxu0 %v635
  %1734 = vmatmul.f32.gmra.mxu0 %v1589
  %v1735 = vpop.f32.mrf.mxu0
  %v1736 = vadd.f32 0.0, %v1735
  %1737 = vdwg.mxu0
  %1738 = vmatpush.msra.mxu0 %v696
  %1739 = vmatpush.msra.mxu0 %v692
  %1740 = vmatpush.msra.mxu0 %v688
  %1741 = vmatpush.msra.mxu0 %v684
  %1742 = vmatpush.msra.mxu0 %v680
  %1743 = vmatpush.msra.mxu0 %v676
  %1744 = vmatpush.msra.mxu0 %v672
  %1745 = vmatpush.msra.mxu0 %v668
  %1746 = vmatpush.msra.mxu0 %v664
  %1747 = vmatpush.msra.mxu0 %v660
  %1748 = vmatpush.msra.mxu0 %v656
  %1749 = vmatpush.msra.mxu0 %v652
  %1750 = vmatpush.msra.mxu0 %v648
  %1751 = vmatpush.msra.mxu0 %v644
  %1752 = vmatpush.msra.mxu0 %v640
  %1753 = vmatpush.msra.mxu0 %v636
  %1754 = vmatmul.f32.gmra.mxu0 %v1589
  %v1755 = vpop.f32.mrf.mxu0
  %v1756 = vadd.f32 0.0, %v1755
  %1757 = vdwg.mxu0
  %v1758 = vadd.f32 %v435, %v1696
  %v1759 = vadd.f32 %v476, %v1716
  %v1760 = vadd.f32 %v517, %v1736
  %v1761 = vadd.f32 %v558, %v1756
  %v1762 = vxor.u32 %v1674, 2147483648
  %v1763 = vmul.f32 %v1762, 1.442695
  %v1764 = vpow.pop %v1763
  %v1765 = vadd.f32 %v1764, 1.0
  %v1766 = vrcp.pop %v1765
  %v1767 = vmul.f32 %v1765, %v1766
  %v1768 = vsub.f32 1.0, %v1767
  %v1769 = vmul.f32 %v1766, %v1768
  %v1770 = vadd.f32 %v1766, %v1769
  %vm1771 = vweird.f32 %v1765
  %vm1772 = vweird.f32 %v1766
  %vm1773 = vmor %vm1771, %vm1772
  %v1774 = vsel %vm1773, %v1766, %v1770
  %v1775 = vand.u32 2147483647, %v1765
  %vm1776 = vcmp.eq.f32.partialorder %v1775, 8.507059e+37
  %v1777 = vand.u32 %v1765, 2147483648
  %v1778 = vor.u32 1.1754944e-38, %v1777
  %v1779 = vsel %vm1776, %v1778, %v1774
  %v1780 = vmul.f32 1.0, %v1779
  %v1781 = vxor.u32 %v1675, 2147483648
  %v1782 = vmul.f32 %v1781, 1.442695
  %v1783 = vpow.pop %v1782
  %v1784 = vadd.f32 %v1783, 1.0
  %v1785 = vrcp.pop %v1784
  %v1786 = vmul.f32 %v1784, %v1785
  %v1787 = vsub.f32 1.0, %v1786
  %v1788 = vmul.f32 %v1785, %v1787
  %v1789 = vadd.f32 %v1785, %v1788
  %vm1790 = vweird.f32 %v1784
  %vm1791 = vweird.f32 %v1785
  %vm1792 = vmor %vm1790, %vm1791
  %v1793 = vsel %vm1792, %v1785, %v1789
  %v1794 = vand.u32 2147483647, %v1784
  %vm1795 = vcmp.eq.f32.partialorder %v1794, 8.507059e+37
  %v1796 = vand.u32 %v1784, 2147483648
  %v1797 = vor.u32 1.1754944e-38, %v1796
  %v1798 = vsel %vm1795, %v1797, %v1793
  %v1799 = vmul.f32 1.0, %v1798
  %v1800 = vtanh.pop %v1676
  %v1801 = vxor.u32 %v1677, 2147483648
  %v1802 = vmul.f32 %v1801, 1.442695
  %v1803 = vpow.pop %v1802
  %v1804 = vadd.f32 %v1803, 1.0
  %v1805 = vrcp.pop %v1804
  %v1806 = vmul.f32 %v1804, %v1805
  %v1807 = vsub.f32 1.0, %v1806
  %v1808 = vmul.f32 %v1805, %v1807
  %v1809 = vadd.f32 %v1805, %v1808
  %vm1810 = vweird.f32 %v1804
  %vm1811 = vweird.f32 %v1805
  %vm1812 = vmor %vm1810, %vm1811
  %v1813 = vsel %vm1812, %v1805, %v1809
  %v1814 = vand.u32 2147483647, %v1804
  %vm1815 = vcmp.eq.f32.partialorder %v1814, 8.507059e+37
  %v1816 = vand.u32 %v1804, 2147483648
  %v1817 = vor.u32 1.1754944e-38, %v1816
  %v1818 = vsel %vm1815, %v1817, %v1813
  %v1819 = vmul.f32 1.0, %v1818
  %v1820 = vmul.f32 %v1799, %v1524
  %v1821 = vmul.f32 %v1780, %v1800
  %v1822 = vadd.f32 %v1820, %v1821
  %v1823 = vtanh.pop %v1822
  %v1824 = vmul.f32 %v1819, %v1823
  %v1825 = vxor.u32 %v1758, 2147483648
  %v1826 = vmul.f32 %v1825, 1.442695
  %v1827 = vpow.pop %v1826
  %v1828 = vadd.f32 %v1827, 1.0
  %v1829 = vrcp.pop %v1828
  %v1830 = vmul.f32 %v1828, %v1829
  %v1831 = vsub.f32 1.0, %v1830
  %v1832 = vmul.f32 %v1829, %v1831
  %v1833 = vadd.f32 %v1829, %v1832
  %vm1834 = vweird.f32 %v1828
  %vm1835 = vweird.f32 %v1829
  %vm1836 = vmor %vm1834, %vm1835
  %v1837 = vsel %vm1836, %v1829, %v1833
  %v1838 = vand.u32 2147483647, %v1828
  %vm1839 = vcmp.eq.f32.partialorder %v1838, 8.507059e+37
  %v1840 = vand.u32 %v1828, 2147483648
  %v1841 = vor.u32 1.1754944e-38, %v1840
  %v1842 = vsel %vm1839, %v1841, %v1837
  %v1843 = vmul.f32 1.0, %v1842
  %v1844 = vxor.u32 %v1759, 2147483648
  %v1845 = vmul.f32 %v1844, 1.442695
  %v1846 = vpow.pop %v1845
  %v1847 = vadd.f32 %v1846, 1.0
  %v1848 = vrcp.pop %v1847
  %v1849 = vmul.f32 %v1847, %v1848
  %v1850 = vsub.f32 1.0, %v1849
  %v1851 = vmul.f32 %v1848, %v1850
  %v1852 = vadd.f32 %v1848, %v1851
  %vm1853 = vweird.f32 %v1847
  %vm1854 = vweird.f32 %v1848
  %vm1855 = vmor %vm1853, %vm1854
  %v1856 = vsel %vm1855, %v1848, %v1852
  %v1857 = vand.u32 2147483647, %v1847
  %vm1858 = vcmp.eq.f32.partialorder %v1857, 8.507059e+37
  %v1859 = vand.u32 %v1847, 2147483648
  %v1860 = vor.u32 1.1754944e-38, %v1859
  %v1861 = vsel %vm1858, %v1860, %v1856
  %v1862 = vmul.f32 1.0, %v1861
  %v1863 = vtanh.pop %v1760
  %v1864 = vxor.u32 %v1761, 2147483648
  %v1865 = vmul.f32 %v1864, 1.442695
  %v1866 = vpow.pop %v1865
  %v1867 = vadd.f32 %v1866, 1.0
  %v1868 = vrcp.pop %v1867
  %v1869 = vmul.f32 %v1867, %v1868
  %v1870 = vsub.f32 1.0, %v1869
  %v1871 = vmul.f32 %v1868, %v1870
  %v1872 = vadd.f32 %v1868, %v1871
  %vm1873 = vweird.f32 %v1867
  %vm1874 = vweird.f32 %v1868
  %vm1875 = vmor %vm1873, %vm1874
  %v1876 = vsel %vm1875, %v1868, %v1872
  %v1877 = vand.u32 2147483647, %v1867
  %vm1878 = vcmp.eq.f32.partialorder %v1877, 8.507059e+37
  %v1879 = vand.u32 %v1867, 2147483648
  %v1880 = vor.u32 1.1754944e-38, %v1879
  %v1881 = vsel %vm1878, %v1880, %v1876
  %v1882 = vmul.f32 1.0, %v1881
  %v1883 = vmul.f32 %v1862, %v1587
  %v1884 = vmul.f32 %v1843, %v1863
  %v1885 = vadd.f32 %v1883, %v1884
  %v1886 = vtanh.pop %v1885
  %v1887 = vmul.f32 %v1882, %v1886
  %s1888 = scalar_lea.vmem %s8, 24
  %1889 = vst [vmem:[%s1888] sm:$0xff] %v1824
  %s1890 = scalar_lea.vmem %s66, 32
  %1891 = vst [vmem:[%s1890] sm:$0xff] %v1887
  %1892 = vmatpush.msra.mxu0 %v629
  %1893 = vmatpush.msra.mxu0 %v625
  %1894 = vmatpush.msra.mxu0 %v621
  %1895 = vmatpush.msra.mxu0 %v617
  %1896 = vmatpush.msra.mxu0 %v613
  %1897 = vmatpush.msra.mxu0 %v609
  %1898 = vmatpush.msra.mxu0 %v605
  %1899 = vmatpush.msra.mxu0 %v601
  %1900 = vmatpush.msra.mxu0 %v597
  %1901 = vmatpush.msra.mxu0 %v593
  %1902 = vmatpush.msra.mxu0 %v589
  %1903 = vmatpush.msra.mxu0 %v585
  %1904 = vmatpush.msra.mxu0 %v581
  %1905 = vmatpush.msra.mxu0 %v577
  %1906 = vmatpush.msra.mxu0 %v573
  %1907 = vmatpush.msra.mxu0 %v569
  %1908 = vmatmul.f32.gmra.mxu0 %v1824
  %v1909 = vpop.f32.mrf.mxu0
  %v1910 = vadd.f32 0.0, %v1909
  %1911 = vdwg.mxu0
  %1912 = vmatpush.msra.mxu0 %v630
  %1913 = vmatpush.msra.mxu0 %v626
  %1914 = vmatpush.msra.mxu0 %v622
  %1915 = vmatpush.msra.mxu0 %v618
  %1916 = vmatpush.msra.mxu0 %v614
  %1917 = vmatpush.msra.mxu0 %v610
  %1918 = vmatpush.msra.mxu0 %v606
  %1919 = vmatpush.msra.mxu0 %v602
  %1920 = vmatpush.msra.mxu0 %v598
  %1921 = vmatpush.msra.mxu0 %v594
  %1922 = vmatpush.msra.mxu0 %v590
  %1923 = vmatpush.msra.mxu0 %v586
  %1924 = vmatpush.msra.mxu0 %v582
  %1925 = vmatpush.msra.mxu0 %v578
  %1926 = vmatpush.msra.mxu0 %v574
  %1927 = vmatpush.msra.mxu0 %v570
  %1928 = vmatmul.f32.gmra.mxu0 %v1824
  %v1929 = vpop.f32.mrf.mxu0
  %v1930 = vadd.f32 0.0, %v1929
  %1931 = vdwg.mxu0
  %1932 = vmatpush.msra.mxu0 %v631
  %1933 = vmatpush.msra.mxu0 %v627
  %1934 = vmatpush.msra.mxu0 %v623
  %1935 = vmatpush.msra.mxu0 %v619
  %1936 = vmatpush.msra.mxu0 %v615
  %1937 = vmatpush.msra.mxu0 %v611
  %1938 = vmatpush.msra.mxu0 %v607
  %1939 = vmatpush.msra.mxu0 %v603
  %1940 = vmatpush.msra.mxu0 %v599
  %1941 = vmatpush.msra.mxu0 %v595
  %1942 = vmatpush.msra.mxu0 %v591
  %1943 = vmatpush.msra.mxu0 %v587
  %1944 = vmatpush.msra.mxu0 %v583
  %1945 = vmatpush.msra.mxu0 %v579
  %1946 = vmatpush.msra.mxu0 %v575
  %1947 = vmatpush.msra.mxu0 %v571
  %1948 = vmatmul.f32.gmra.mxu0 %v1824
  %v1949 = vpop.f32.mrf.mxu0
  %v1950 = vadd.f32 0.0, %v1949
  %1951 = vdwg.mxu0
  %1952 = vmatpush.msra.mxu0 %v632
  %1953 = vmatpush.msra.mxu0 %v628
  %1954 = vmatpush.msra.mxu0 %v624
  %1955 = vmatpush.msra.mxu0 %v620
  %1956 = vmatpush.msra.mxu0 %v616
  %1957 = vmatpush.msra.mxu0 %v612
  %1958 = vmatpush.msra.mxu0 %v608
  %1959 = vmatpush.msra.mxu0 %v604
  %1960 = vmatpush.msra.mxu0 %v600
  %1961 = vmatpush.msra.mxu0 %v596
  %1962 = vmatpush.msra.mxu0 %v592
  %1963 = vmatpush.msra.mxu0 %v588
  %1964 = vmatpush.msra.mxu0 %v584
  %1965 = vmatpush.msra.mxu0 %v580
  %1966 = vmatpush.msra.mxu0 %v576
  %1967 = vmatpush.msra.mxu0 %v572
  %1968 = vmatmul.f32.gmra.mxu0 %v1824
  %v1969 = vpop.f32.mrf.mxu0
  %v1970 = vadd.f32 0.0, %v1969
  %1971 = vdwg.mxu0
  %v1972 = vadd.f32 %v189, %v1910
  %v1973 = vadd.f32 %v230, %v1930
  %v1974 = vadd.f32 %v271, %v1950
  %v1975 = vadd.f32 %v312, %v1970
  %1976 = vmatpush.msra.mxu0 %v693
  %1977 = vmatpush.msra.mxu0 %v689
  %1978 = vmatpush.msra.mxu0 %v685
  %1979 = vmatpush.msra.mxu0 %v681
  %1980 = vmatpush.msra.mxu0 %v677
  %1981 = vmatpush.msra.mxu0 %v673
  %1982 = vmatpush.msra.mxu0 %v669
  %1983 = vmatpush.msra.mxu0 %v665
  %1984 = vmatpush.msra.mxu0 %v661
  %1985 = vmatpush.msra.mxu0 %v657
  %1986 = vmatpush.msra.mxu0 %v653
  %1987 = vmatpush.msra.mxu0 %v649
  %1988 = vmatpush.msra.mxu0 %v645
  %1989 = vmatpush.msra.mxu0 %v641
  %1990 = vmatpush.msra.mxu0 %v637
  %1991 = vmatpush.msra.mxu0 %v633
  %1992 = vmatmul.f32.gmra.mxu0 %v1887
  %v1993 = vpop.f32.mrf.mxu0
  %v1994 = vadd.f32 0.0, %v1993
  %1995 = vdwg.mxu0
  %1996 = vmatpush.msra.mxu0 %v694
  %1997 = vmatpush.msra.mxu0 %v690
  %1998 = vmatpush.msra.mxu0 %v686
  %1999 = vmatpush.msra.mxu0 %v682
  %2000 = vmatpush.msra.mxu0 %v678
  %2001 = vmatpush.msra.mxu0 %v674
  %2002 = vmatpush.msra.mxu0 %v670
  %2003 = vmatpush.msra.mxu0 %v666
  %2004 = vmatpush.msra.mxu0 %v662
  %2005 = vmatpush.msra.mxu0 %v658
  %2006 = vmatpush.msra.mxu0 %v654
  %2007 = vmatpush.msra.mxu0 %v650
  %2008 = vmatpush.msra.mxu0 %v646
  %2009 = vmatpush.msra.mxu0 %v642
  %2010 = vmatpush.msra.mxu0 %v638
  %2011 = vmatpush.msra.mxu0 %v634
  %2012 = vmatmul.f32.gmra.mxu0 %v1887
  %v2013 = vpop.f32.mrf.mxu0
  %v2014 = vadd.f32 0.0, %v2013
  %2015 = vdwg.mxu0
  %2016 = vmatpush.msra.mxu0 %v695
  %2017 = vmatpush.msra.mxu0 %v691
  %2018 = vmatpush.msra.mxu0 %v687
  %2019 = vmatpush.msra.mxu0 %v683
  %2020 = vmatpush.msra.mxu0 %v679
  %2021 = vmatpush.msra.mxu0 %v675
  %2022 = vmatpush.msra.mxu0 %v671
  %2023 = vmatpush.msra.mxu0 %v667
  %2024 = vmatpush.msra.mxu0 %v663
  %2025 = vmatpush.msra.mxu0 %v659
  %2026 = vmatpush.msra.mxu0 %v655
  %2027 = vmatpush.msra.mxu0 %v651
  %2028 = vmatpush.msra.mxu0 %v647
  %2029 = vmatpush.msra.mxu0 %v643
  %2030 = vmatpush.msra.mxu0 %v639
  %2031 = vmatpush.msra.mxu0 %v635
  %2032 = vmatmul.f32.gmra.mxu0 %v1887
  %v2033 = vpop.f32.mrf.mxu0
  %v2034 = vadd.f32 0.0, %v2033
  %2035 = vdwg.mxu0
  %2036 = vmatpush.msra.mxu0 %v696
  %2037 = vmatpush.msra.mxu0 %v692
  %2038 = vmatpush.msra.mxu0 %v688
  %2039 = vmatpush.msra.mxu0 %v684
  %2040 = vmatpush.msra.mxu0 %v680
  %2041 = vmatpush.msra.mxu0 %v676
  %2042 = vmatpush.msra.mxu0 %v672
  %2043 = vmatpush.msra.mxu0 %v668
  %2044 = vmatpush.msra.mxu0 %v664
  %2045 = vmatpush.msra.mxu0 %v660
  %2046 = vmatpush.msra.mxu0 %v656
  %2047 = vmatpush.msra.mxu0 %v652
  %2048 = vmatpush.msra.mxu0 %v648
  %2049 = vmatpush.msra.mxu0 %v644
  %2050 = vmatpush.msra.mxu0 %v640
  %2051 = vmatpush.msra.mxu0 %v636
  %2052 = vmatmul.f32.gmra.mxu0 %v1887
  %v2053 = vpop.f32.mrf.mxu0
  %v2054 = vadd.f32 0.0, %v2053
  %2055 = vdwg.mxu0
  %v2056 = vadd.f32 %v432, %v1994
  %v2057 = vadd.f32 %v473, %v2014
  %v2058 = vadd.f32 %v514, %v2034
  %v2059 = vadd.f32 %v555, %v2054
  %v2060 = vxor.u32 %v1972, 2147483648
  %v2061 = vmul.f32 %v2060, 1.442695
  %v2062 = vpow.pop %v2061
  %v2063 = vadd.f32 %v2062, 1.0
  %v2064 = vrcp.pop %v2063
  %v2065 = vmul.f32 %v2063, %v2064
  %v2066 = vsub.f32 1.0, %v2065
  %v2067 = vmul.f32 %v2064, %v2066
  %v2068 = vadd.f32 %v2064, %v2067
  %vm2069 = vweird.f32 %v2063
  %vm2070 = vweird.f32 %v2064
  %vm2071 = vmor %vm2069, %vm2070
  %v2072 = vsel %vm2071, %v2064, %v2068
  %v2073 = vand.u32 2147483647, %v2063
  %vm2074 = vcmp.eq.f32.partialorder %v2073, 8.507059e+37
  %v2075 = vand.u32 %v2063, 2147483648
  %v2076 = vor.u32 1.1754944e-38, %v2075
  %v2077 = vsel %vm2074, %v2076, %v2072
  %v2078 = vmul.f32 1.0, %v2077
  %v2079 = vxor.u32 %v1973, 2147483648
  %v2080 = vmul.f32 %v2079, 1.442695
  %v2081 = vpow.pop %v2080
  %v2082 = vadd.f32 %v2081, 1.0
  %v2083 = vrcp.pop %v2082
  %v2084 = vmul.f32 %v2082, %v2083
  %v2085 = vsub.f32 1.0, %v2084
  %v2086 = vmul.f32 %v2083, %v2085
  %v2087 = vadd.f32 %v2083, %v2086
  %vm2088 = vweird.f32 %v2082
  %vm2089 = vweird.f32 %v2083
  %vm2090 = vmor %vm2088, %vm2089
  %v2091 = vsel %vm2090, %v2083, %v2087
  %v2092 = vand.u32 2147483647, %v2082
  %vm2093 = vcmp.eq.f32.partialorder %v2092, 8.507059e+37
  %v2094 = vand.u32 %v2082, 2147483648
  %v2095 = vor.u32 1.1754944e-38, %v2094
  %v2096 = vsel %vm2093, %v2095, %v2091
  %v2097 = vmul.f32 1.0, %v2096
  %v2098 = vtanh.pop %v1974
  %v2099 = vxor.u32 %v1975, 2147483648
  %v2100 = vmul.f32 %v2099, 1.442695
  %v2101 = vpow.pop %v2100
  %v2102 = vadd.f32 %v2101, 1.0
  %v2103 = vrcp.pop %v2102
  %v2104 = vmul.f32 %v2102, %v2103
  %v2105 = vsub.f32 1.0, %v2104
  %v2106 = vmul.f32 %v2103, %v2105
  %v2107 = vadd.f32 %v2103, %v2106
  %vm2108 = vweird.f32 %v2102
  %vm2109 = vweird.f32 %v2103
  %vm2110 = vmor %vm2108, %vm2109
  %v2111 = vsel %vm2110, %v2103, %v2107
  %v2112 = vand.u32 2147483647, %v2102
  %vm2113 = vcmp.eq.f32.partialorder %v2112, 8.507059e+37
  %v2114 = vand.u32 %v2102, 2147483648
  %v2115 = vor.u32 1.1754944e-38, %v2114
  %v2116 = vsel %vm2113, %v2115, %v2111
  %v2117 = vmul.f32 1.0, %v2116
  %v2118 = vmul.f32 %v2097, %v1822
  %v2119 = vmul.f32 %v2078, %v2098
  %v2120 = vadd.f32 %v2118, %v2119
  %v2121 = vtanh.pop %v2120
  %v2122 = vmul.f32 %v2117, %v2121
  %v2123 = vxor.u32 %v2056, 2147483648
  %v2124 = vmul.f32 %v2123, 1.442695
  %v2125 = vpow.pop %v2124
  %v2126 = vadd.f32 %v2125, 1.0
  %v2127 = vrcp.pop %v2126
  %v2128 = vmul.f32 %v2126, %v2127
  %v2129 = vsub.f32 1.0, %v2128
  %v2130 = vmul.f32 %v2127, %v2129
  %v2131 = vadd.f32 %v2127, %v2130
  %vm2132 = vweird.f32 %v2126
  %vm2133 = vweird.f32 %v2127
  %vm2134 = vmor %vm2132, %vm2133
  %v2135 = vsel %vm2134, %v2127, %v2131
  %v2136 = vand.u32 2147483647, %v2126
  %vm2137 = vcmp.eq.f32.partialorder %v2136, 8.507059e+37
  %v2138 = vand.u32 %v2126, 2147483648
  %v2139 = vor.u32 1.1754944e-38, %v2138
  %v2140 = vsel %vm2137, %v2139, %v2135
  %v2141 = vmul.f32 1.0, %v2140
  %v2142 = vxor.u32 %v2057, 2147483648
  %v2143 = vmul.f32 %v2142, 1.442695
  %v2144 = vpow.pop %v2143
  %v2145 = vadd.f32 %v2144, 1.0
  %v2146 = vrcp.pop %v2145
  %v2147 = vmul.f32 %v2145, %v2146
  %v2148 = vsub.f32 1.0, %v2147
  %v2149 = vmul.f32 %v2146, %v2148
  %v2150 = vadd.f32 %v2146, %v2149
  %vm2151 = vweird.f32 %v2145
  %vm2152 = vweird.f32 %v2146
  %vm2153 = vmor %vm2151, %vm2152
  %v2154 = vsel %vm2153, %v2146, %v2150
  %v2155 = vand.u32 2147483647, %v2145
  %vm2156 = vcmp.eq.f32.partialorder %v2155, 8.507059e+37
  %v2157 = vand.u32 %v2145, 2147483648
  %v2158 = vor.u32 1.1754944e-38, %v2157
  %v2159 = vsel %vm2156, %v2158, %v2154
  %v2160 = vmul.f32 1.0, %v2159
  %v2161 = vtanh.pop %v2058
  %v2162 = vxor.u32 %v2059, 2147483648
  %v2163 = vmul.f32 %v2162, 1.442695
  %v2164 = vpow.pop %v2163
  %v2165 = vadd.f32 %v2164, 1.0
  %v2166 = vrcp.pop %v2165
  %v2167 = vmul.f32 %v2165, %v2166
  %v2168 = vsub.f32 1.0, %v2167
  %v2169 = vmul.f32 %v2166, %v2168
  %v2170 = vadd.f32 %v2166, %v2169
  %vm2171 = vweird.f32 %v2165
  %vm2172 = vweird.f32 %v2166
  %vm2173 = vmor %vm2171, %vm2172
  %v2174 = vsel %vm2173, %v2166, %v2170
  %v2175 = vand.u32 2147483647, %v2165
  %vm2176 = vcmp.eq.f32.partialorder %v2175, 8.507059e+37
  %v2177 = vand.u32 %v2165, 2147483648
  %v2178 = vor.u32 1.1754944e-38, %v2177
  %v2179 = vsel %vm2176, %v2178, %v2174
  %v2180 = vmul.f32 1.0, %v2179
  %v2181 = vmul.f32 %v2160, %v1885
  %v2182 = vmul.f32 %v2141, %v2161
  %v2183 = vadd.f32 %v2181, %v2182
  %v2184 = vtanh.pop %v2183
  %v2185 = vmul.f32 %v2180, %v2184
  %s2186 = scalar_lea.vmem %s8, 32
  %2187 = vst [vmem:[%s2186] sm:$0xff] %v2122
  %s2188 = scalar_lea.vmem %s66, 24
  %2189 = vst [vmem:[%s2188] sm:$0xff] %v2185
  %2190 = vmatpush.msra.mxu0 %v629
  %2191 = vmatpush.msra.mxu0 %v625
  %2192 = vmatpush.msra.mxu0 %v621
  %2193 = vmatpush.msra.mxu0 %v617
  %2194 = vmatpush.msra.mxu0 %v613
  %2195 = vmatpush.msra.mxu0 %v609
  %2196 = vmatpush.msra.mxu0 %v605
  %2197 = vmatpush.msra.mxu0 %v601
  %2198 = vmatpush.msra.mxu0 %v597
  %2199 = vmatpush.msra.mxu0 %v593
  %2200 = vmatpush.msra.mxu0 %v589
  %2201 = vmatpush.msra.mxu0 %v585
  %2202 = vmatpush.msra.mxu0 %v581
  %2203 = vmatpush.msra.mxu0 %v577
  %2204 = vmatpush.msra.mxu0 %v573
  %2205 = vmatpush.msra.mxu0 %v569
  %2206 = vmatmul.f32.gmra.mxu0 %v2122
  %v2207 = vpop.f32.mrf.mxu0
  %v2208 = vadd.f32 0.0, %v2207
  %2209 = vdwg.mxu0
  %2210 = vmatpush.msra.mxu0 %v630
  %2211 = vmatpush.msra.mxu0 %v626
  %2212 = vmatpush.msra.mxu0 %v622
  %2213 = vmatpush.msra.mxu0 %v618
  %2214 = vmatpush.msra.mxu0 %v614
  %2215 = vmatpush.msra.mxu0 %v610
  %2216 = vmatpush.msra.mxu0 %v606
  %2217 = vmatpush.msra.mxu0 %v602
  %2218 = vmatpush.msra.mxu0 %v598
  %2219 = vmatpush.msra.mxu0 %v594
  %2220 = vmatpush.msra.mxu0 %v590
  %2221 = vmatpush.msra.mxu0 %v586
  %2222 = vmatpush.msra.mxu0 %v582
  %2223 = vmatpush.msra.mxu0 %v578
  %2224 = vmatpush.msra.mxu0 %v574
  %2225 = vmatpush.msra.mxu0 %v570
  %2226 = vmatmul.f32.gmra.mxu0 %v2122
  %v2227 = vpop.f32.mrf.mxu0
  %v2228 = vadd.f32 0.0, %v2227
  %2229 = vdwg.mxu0
  %2230 = vmatpush.msra.mxu0 %v631
  %2231 = vmatpush.msra.mxu0 %v627
  %2232 = vmatpush.msra.mxu0 %v623
  %2233 = vmatpush.msra.mxu0 %v619
  %2234 = vmatpush.msra.mxu0 %v615
  %2235 = vmatpush.msra.mxu0 %v611
  %2236 = vmatpush.msra.mxu0 %v607
  %2237 = vmatpush.msra.mxu0 %v603
  %2238 = vmatpush.msra.mxu0 %v599
  %2239 = vmatpush.msra.mxu0 %v595
  %2240 = vmatpush.msra.mxu0 %v591
  %2241 = vmatpush.msra.mxu0 %v587
  %2242 = vmatpush.msra.mxu0 %v583
  %2243 = vmatpush.msra.mxu0 %v579
  %2244 = vmatpush.msra.mxu0 %v575
  %2245 = vmatpush.msra.mxu0 %v571
  %2246 = vmatmul.f32.gmra.mxu0 %v2122
  %v2247 = vpop.f32.mrf.mxu0
  %v2248 = vadd.f32 0.0, %v2247
  %2249 = vdwg.mxu0
  %2250 = vmatpush.msra.mxu0 %v632
  %2251 = vmatpush.msra.mxu0 %v628
  %2252 = vmatpush.msra.mxu0 %v624
  %2253 = vmatpush.msra.mxu0 %v620
  %2254 = vmatpush.msra.mxu0 %v616
  %2255 = vmatpush.msra.mxu0 %v612
  %2256 = vmatpush.msra.mxu0 %v608
  %2257 = vmatpush.msra.mxu0 %v604
  %2258 = vmatpush.msra.mxu0 %v600
  %2259 = vmatpush.msra.mxu0 %v596
  %2260 = vmatpush.msra.mxu0 %v592
  %2261 = vmatpush.msra.mxu0 %v588
  %2262 = vmatpush.msra.mxu0 %v584
  %2263 = vmatpush.msra.mxu0 %v580
  %2264 = vmatpush.msra.mxu0 %v576
  %2265 = vmatpush.msra.mxu0 %v572
  %2266 = vmatmul.f32.gmra.mxu0 %v2122
  %v2267 = vpop.f32.mrf.mxu0
  %v2268 = vadd.f32 0.0, %v2267
  %2269 = vdwg.mxu0
  %v2270 = vadd.f32 %v192, %v2208
  %v2271 = vadd.f32 %v233, %v2228
  %v2272 = vadd.f32 %v274, %v2248
  %v2273 = vadd.f32 %v315, %v2268
  %2274 = vmatpush.msra.mxu0 %v693
  %2275 = vmatpush.msra.mxu0 %v689
  %2276 = vmatpush.msra.mxu0 %v685
  %2277 = vmatpush.msra.mxu0 %v681
  %2278 = vmatpush.msra.mxu0 %v677
  %2279 = vmatpush.msra.mxu0 %v673
  %2280 = vmatpush.msra.mxu0 %v669
  %2281 = vmatpush.msra.mxu0 %v665
  %2282 = vmatpush.msra.mxu0 %v661
  %2283 = vmatpush.msra.mxu0 %v657
  %2284 = vmatpush.msra.mxu0 %v653
  %2285 = vmatpush.msra.mxu0 %v649
  %2286 = vmatpush.msra.mxu0 %v645
  %2287 = vmatpush.msra.mxu0 %v641
  %2288 = vmatpush.msra.mxu0 %v637
  %2289 = vmatpush.msra.mxu0 %v633
  %2290 = vmatmul.f32.gmra.mxu0 %v2185
  %v2291 = vpop.f32.mrf.mxu0
  %v2292 = vadd.f32 0.0, %v2291
  %2293 = vdwg.mxu0
  %2294 = vmatpush.msra.mxu0 %v694
  %2295 = vmatpush.msra.mxu0 %v690
  %2296 = vmatpush.msra.mxu0 %v686
  %2297 = vmatpush.msra.mxu0 %v682
  %2298 = vmatpush.msra.mxu0 %v678
  %2299 = vmatpush.msra.mxu0 %v674
  %2300 = vmatpush.msra.mxu0 %v670
  %2301 = vmatpush.msra.mxu0 %v666
  %2302 = vmatpush.msra.mxu0 %v662
  %2303 = vmatpush.msra.mxu0 %v658
  %2304 = vmatpush.msra.mxu0 %v654
  %2305 = vmatpush.msra.mxu0 %v650
  %2306 = vmatpush.msra.mxu0 %v646
  %2307 = vmatpush.msra.mxu0 %v642
  %2308 = vmatpush.msra.mxu0 %v638
  %2309 = vmatpush.msra.mxu0 %v634
  %2310 = vmatmul.f32.gmra.mxu0 %v2185
  %v2311 = vpop.f32.mrf.mxu0
  %v2312 = vadd.f32 0.0, %v2311
  %2313 = vdwg.mxu0
  %2314 = vmatpush.msra.mxu0 %v695
  %2315 = vmatpush.msra.mxu0 %v691
  %2316 = vmatpush.msra.mxu0 %v687
  %2317 = vmatpush.msra.mxu0 %v683
  %2318 = vmatpush.msra.mxu0 %v679
  %2319 = vmatpush.msra.mxu0 %v675
  %2320 = vmatpush.msra.mxu0 %v671
  %2321 = vmatpush.msra.mxu0 %v667
  %2322 = vmatpush.msra.mxu0 %v663
  %2323 = vmatpush.msra.mxu0 %v659
  %2324 = vmatpush.msra.mxu0 %v655
  %2325 = vmatpush.msra.mxu0 %v651
  %2326 = vmatpush.msra.mxu0 %v647
  %2327 = vmatpush.msra.mxu0 %v643
  %2328 = vmatpush.msra.mxu0 %v639
  %2329 = vmatpush.msra.mxu0 %v635
  %2330 = vmatmul.f32.gmra.mxu0 %v2185
  %v2331 = vpop.f32.mrf.mxu0
  %v2332 = vadd.f32 0.0, %v2331
  %2333 = vdwg.mxu0
  %2334 = vmatpush.msra.mxu0 %v696
  %2335 = vmatpush.msra.mxu0 %v692
  %2336 = vmatpush.msra.mxu0 %v688
  %2337 = vmatpush.msra.mxu0 %v684
  %2338 = vmatpush.msra.mxu0 %v680
  %2339 = vmatpush.msra.mxu0 %v676
  %2340 = vmatpush.msra.mxu0 %v672
  %2341 = vmatpush.msra.mxu0 %v668
  %2342 = vmatpush.msra.mxu0 %v664
  %2343 = vmatpush.msra.mxu0 %v660
  %2344 = vmatpush.msra.mxu0 %v656
  %2345 = vmatpush.msra.mxu0 %v652
  %2346 = vmatpush.msra.mxu0 %v648
  %2347 = vmatpush.msra.mxu0 %v644
  %2348 = vmatpush.msra.mxu0 %v640
  %2349 = vmatpush.msra.mxu0 %v636
  %2350 = vmatmul.f32.gmra.mxu0 %v2185
  %v2351 = vpop.f32.mrf.mxu0
  %v2352 = vadd.f32 0.0, %v2351
  %2353 = vdwg.mxu0
  %v2354 = vadd.f32 %v429, %v2292
  %v2355 = vadd.f32 %v470, %v2312
  %v2356 = vadd.f32 %v511, %v2332
  %v2357 = vadd.f32 %v552, %v2352
  %v2358 = vxor.u32 %v2270, 2147483648
  %v2359 = vmul.f32 %v2358, 1.442695
  %v2360 = vpow.pop %v2359
  %v2361 = vadd.f32 %v2360, 1.0
  %v2362 = vrcp.pop %v2361
  %v2363 = vmul.f32 %v2361, %v2362
  %v2364 = vsub.f32 1.0, %v2363
  %v2365 = vmul.f32 %v2362, %v2364
  %v2366 = vadd.f32 %v2362, %v2365
  %vm2367 = vweird.f32 %v2361
  %vm2368 = vweird.f32 %v2362
  %vm2369 = vmor %vm2367, %vm2368
  %v2370 = vsel %vm2369, %v2362, %v2366
  %v2371 = vand.u32 2147483647, %v2361
  %vm2372 = vcmp.eq.f32.partialorder %v2371, 8.507059e+37
  %v2373 = vand.u32 %v2361, 2147483648
  %v2374 = vor.u32 1.1754944e-38, %v2373
  %v2375 = vsel %vm2372, %v2374, %v2370
  %v2376 = vmul.f32 1.0, %v2375
  %v2377 = vxor.u32 %v2271, 2147483648
  %v2378 = vmul.f32 %v2377, 1.442695
  %v2379 = vpow.pop %v2378
  %v2380 = vadd.f32 %v2379, 1.0
  %v2381 = vrcp.pop %v2380
  %v2382 = vmul.f32 %v2380, %v2381
  %v2383 = vsub.f32 1.0, %v2382
  %v2384 = vmul.f32 %v2381, %v2383
  %v2385 = vadd.f32 %v2381, %v2384
  %vm2386 = vweird.f32 %v2380
  %vm2387 = vweird.f32 %v2381
  %vm2388 = vmor %vm2386, %vm2387
  %v2389 = vsel %vm2388, %v2381, %v2385
  %v2390 = vand.u32 2147483647, %v2380
  %vm2391 = vcmp.eq.f32.partialorder %v2390, 8.507059e+37
  %v2392 = vand.u32 %v2380, 2147483648
  %v2393 = vor.u32 1.1754944e-38, %v2392
  %v2394 = vsel %vm2391, %v2393, %v2389
  %v2395 = vmul.f32 1.0, %v2394
  %v2396 = vtanh.pop %v2272
  %v2397 = vxor.u32 %v2273, 2147483648
  %v2398 = vmul.f32 %v2397, 1.442695
  %v2399 = vpow.pop %v2398
  %v2400 = vadd.f32 %v2399, 1.0
  %v2401 = vrcp.pop %v2400
  %v2402 = vmul.f32 %v2400, %v2401
  %v2403 = vsub.f32 1.0, %v2402
  %v2404 = vmul.f32 %v2401, %v2403
  %v2405 = vadd.f32 %v2401, %v2404
  %vm2406 = vweird.f32 %v2400
  %vm2407 = vweird.f32 %v2401
  %vm2408 = vmor %vm2406, %vm2407
  %v2409 = vsel %vm2408, %v2401, %v2405
  %v2410 = vand.u32 2147483647, %v2400
  %vm2411 = vcmp.eq.f32.partialorder %v2410, 8.507059e+37
  %v2412 = vand.u32 %v2400, 2147483648
  %v2413 = vor.u32 1.1754944e-38, %v2412
  %v2414 = vsel %vm2411, %v2413, %v2409
  %v2415 = vmul.f32 1.0, %v2414
  %v2416 = vmul.f32 %v2395, %v2120
  %v2417 = vmul.f32 %v2376, %v2396
  %v2418 = vadd.f32 %v2416, %v2417
  %v2419 = vtanh.pop %v2418
  %v2420 = vmul.f32 %v2415, %v2419
  %v2421 = vxor.u32 %v2354, 2147483648
  %v2422 = vmul.f32 %v2421, 1.442695
  %v2423 = vpow.pop %v2422
  %v2424 = vadd.f32 %v2423, 1.0
  %v2425 = vrcp.pop %v2424
  %v2426 = vmul.f32 %v2424, %v2425
  %v2427 = vsub.f32 1.0, %v2426
  %v2428 = vmul.f32 %v2425, %v2427
  %v2429 = vadd.f32 %v2425, %v2428
  %vm2430 = vweird.f32 %v2424
  %vm2431 = vweird.f32 %v2425
  %vm2432 = vmor %vm2430, %vm2431
  %v2433 = vsel %vm2432, %v2425, %v2429
  %v2434 = vand.u32 2147483647, %v2424
  %vm2435 = vcmp.eq.f32.partialorder %v2434, 8.507059e+37
  %v2436 = vand.u32 %v2424, 2147483648
  %v2437 = vor.u32 1.1754944e-38, %v2436
  %v2438 = vsel %vm2435, %v2437, %v2433
  %v2439 = vmul.f32 1.0, %v2438
  %v2440 = vxor.u32 %v2355, 2147483648
  %v2441 = vmul.f32 %v2440, 1.442695
  %v2442 = vpow.pop %v2441
  %v2443 = vadd.f32 %v2442, 1.0
  %v2444 = vrcp.pop %v2443
  %v2445 = vmul.f32 %v2443, %v2444
  %v2446 = vsub.f32 1.0, %v2445
  %v2447 = vmul.f32 %v2444, %v2446
  %v2448 = vadd.f32 %v2444, %v2447
  %vm2449 = vweird.f32 %v2443
  %vm2450 = vweird.f32 %v2444
  %vm2451 = vmor %vm2449, %vm2450
  %v2452 = vsel %vm2451, %v2444, %v2448
  %v2453 = vand.u32 2147483647, %v2443
  %vm2454 = vcmp.eq.f32.partialorder %v2453, 8.507059e+37
  %v2455 = vand.u32 %v2443, 2147483648
  %v2456 = vor.u32 1.1754944e-38, %v2455
  %v2457 = vsel %vm2454, %v2456, %v2452
  %v2458 = vmul.f32 1.0, %v2457
  %v2459 = vtanh.pop %v2356
  %v2460 = vxor.u32 %v2357, 2147483648
  %v2461 = vmul.f32 %v2460, 1.442695
  %v2462 = vpow.pop %v2461
  %v2463 = vadd.f32 %v2462, 1.0
  %v2464 = vrcp.pop %v2463
  %v2465 = vmul.f32 %v2463, %v2464
  %v2466 = vsub.f32 1.0, %v2465
  %v2467 = vmul.f32 %v2464, %v2466
  %v2468 = vadd.f32 %v2464, %v2467
  %vm2469 = vweird.f32 %v2463
  %vm2470 = vweird.f32 %v2464
  %vm2471 = vmor %vm2469, %vm2470
  %v2472 = vsel %vm2471, %v2464, %v2468
  %v2473 = vand.u32 2147483647, %v2463
  %vm2474 = vcmp.eq.f32.partialorder %v2473, 8.507059e+37
  %v2475 = vand.u32 %v2463, 2147483648
  %v2476 = vor.u32 1.1754944e-38, %v2475
  %v2477 = vsel %vm2474, %v2476, %v2472
  %v2478 = vmul.f32 1.0, %v2477
  %v2479 = vmul.f32 %v2458, %v2183
  %v2480 = vmul.f32 %v2439, %v2459
  %v2481 = vadd.f32 %v2479, %v2480
  %v2482 = vtanh.pop %v2481
  %v2483 = vmul.f32 %v2478, %v2482
  %s2484 = scalar_lea.vmem %s8, 40
  %2485 = vst [vmem:[%s2484] sm:$0xff] %v2420
  %s2486 = scalar_lea.vmem %s66, 16
  %2487 = vst [vmem:[%s2486] sm:$0xff] %v2483
  %2488 = vmatpush.msra.mxu0 %v629
  %2489 = vmatpush.msra.mxu0 %v625
  %2490 = vmatpush.msra.mxu0 %v621
  %2491 = vmatpush.msra.mxu0 %v617
  %2492 = vmatpush.msra.mxu0 %v613
  %2493 = vmatpush.msra.mxu0 %v609
  %2494 = vmatpush.msra.mxu0 %v605
  %2495 = vmatpush.msra.mxu0 %v601
  %2496 = vmatpush.msra.mxu0 %v597
  %2497 = vmatpush.msra.mxu0 %v593
  %2498 = vmatpush.msra.mxu0 %v589
  %2499 = vmatpush.msra.mxu0 %v585
  %2500 = vmatpush.msra.mxu0 %v581
  %2501 = vmatpush.msra.mxu0 %v577
  %2502 = vmatpush.msra.mxu0 %v573
  %2503 = vmatpush.msra.mxu0 %v569
  %2504 = vmatmul.f32.gmra.mxu0 %v2420
  %v2505 = vpop.f32.mrf.mxu0
  %v2506 = vadd.f32 0.0, %v2505
  %2507 = vdwg.mxu0
  %2508 = vmatpush.msra.mxu0 %v630
  %2509 = vmatpush.msra.mxu0 %v626
  %2510 = vmatpush.msra.mxu0 %v622
  %2511 = vmatpush.msra.mxu0 %v618
  %2512 = vmatpush.msra.mxu0 %v614
  %2513 = vmatpush.msra.mxu0 %v610
  %2514 = vmatpush.msra.mxu0 %v606
  %2515 = vmatpush.msra.mxu0 %v602
  %2516 = vmatpush.msra.mxu0 %v598
  %2517 = vmatpush.msra.mxu0 %v594
  %2518 = vmatpush.msra.mxu0 %v590
  %2519 = vmatpush.msra.mxu0 %v586
  %2520 = vmatpush.msra.mxu0 %v582
  %2521 = vmatpush.msra.mxu0 %v578
  %2522 = vmatpush.msra.mxu0 %v574
  %2523 = vmatpush.msra.mxu0 %v570
  %2524 = vmatmul.f32.gmra.mxu0 %v2420
  %v2525 = vpop.f32.mrf.mxu0
  %v2526 = vadd.f32 0.0, %v2525
  %2527 = vdwg.mxu0
  %2528 = vmatpush.msra.mxu0 %v631
  %2529 = vmatpush.msra.mxu0 %v627
  %2530 = vmatpush.msra.mxu0 %v623
  %2531 = vmatpush.msra.mxu0 %v619
  %2532 = vmatpush.msra.mxu0 %v615
  %2533 = vmatpush.msra.mxu0 %v611
  %2534 = vmatpush.msra.mxu0 %v607
  %2535 = vmatpush.msra.mxu0 %v603
  %2536 = vmatpush.msra.mxu0 %v599
  %2537 = vmatpush.msra.mxu0 %v595
  %2538 = vmatpush.msra.mxu0 %v591
  %2539 = vmatpush.msra.mxu0 %v587
  %2540 = vmatpush.msra.mxu0 %v583
  %2541 = vmatpush.msra.mxu0 %v579
  %2542 = vmatpush.msra.mxu0 %v575
  %2543 = vmatpush.msra.mxu0 %v571
  %2544 = vmatmul.f32.gmra.mxu0 %v2420
  %v2545 = vpop.f32.mrf.mxu0
  %v2546 = vadd.f32 0.0, %v2545
  %2547 = vdwg.mxu0
  %2548 = vmatpush.msra.mxu0 %v632
  %2549 = vmatpush.msra.mxu0 %v628
  %2550 = vmatpush.msra.mxu0 %v624
  %2551 = vmatpush.msra.mxu0 %v620
  %2552 = vmatpush.msra.mxu0 %v616
  %2553 = vmatpush.msra.mxu0 %v612
  %2554 = vmatpush.msra.mxu0 %v608
  %2555 = vmatpush.msra.mxu0 %v604
  %2556 = vmatpush.msra.mxu0 %v600
  %2557 = vmatpush.msra.mxu0 %v596
  %2558 = vmatpush.msra.mxu0 %v592
  %2559 = vmatpush.msra.mxu0 %v588
  %2560 = vmatpush.msra.mxu0 %v584
  %2561 = vmatpush.msra.mxu0 %v580
  %2562 = vmatpush.msra.mxu0 %v576
  %2563 = vmatpush.msra.mxu0 %v572
  %2564 = vmatmul.f32.gmra.mxu0 %v2420
  %v2565 = vpop.f32.mrf.mxu0
  %v2566 = vadd.f32 0.0, %v2565
  %2567 = vdwg.mxu0
  %v2568 = vadd.f32 %v195, %v2506
  %v2569 = vadd.f32 %v236, %v2526
  %v2570 = vadd.f32 %v277, %v2546
  %v2571 = vadd.f32 %v318, %v2566
  %2572 = vmatpush.msra.mxu0 %v693
  %2573 = vmatpush.msra.mxu0 %v689
  %2574 = vmatpush.msra.mxu0 %v685
  %2575 = vmatpush.msra.mxu0 %v681
  %2576 = vmatpush.msra.mxu0 %v677
  %2577 = vmatpush.msra.mxu0 %v673
  %2578 = vmatpush.msra.mxu0 %v669
  %2579 = vmatpush.msra.mxu0 %v665
  %2580 = vmatpush.msra.mxu0 %v661
  %2581 = vmatpush.msra.mxu0 %v657
  %2582 = vmatpush.msra.mxu0 %v653
  %2583 = vmatpush.msra.mxu0 %v649
  %2584 = vmatpush.msra.mxu0 %v645
  %2585 = vmatpush.msra.mxu0 %v641
  %2586 = vmatpush.msra.mxu0 %v637
  %2587 = vmatpush.msra.mxu0 %v633
  %2588 = vmatmul.f32.gmra.mxu0 %v2483
  %v2589 = vpop.f32.mrf.mxu0
  %v2590 = vadd.f32 0.0, %v2589
  %2591 = vdwg.mxu0
  %2592 = vmatpush.msra.mxu0 %v694
  %2593 = vmatpush.msra.mxu0 %v690
  %2594 = vmatpush.msra.mxu0 %v686
  %2595 = vmatpush.msra.mxu0 %v682
  %2596 = vmatpush.msra.mxu0 %v678
  %2597 = vmatpush.msra.mxu0 %v674
  %2598 = vmatpush.msra.mxu0 %v670
  %2599 = vmatpush.msra.mxu0 %v666
  %2600 = vmatpush.msra.mxu0 %v662
  %2601 = vmatpush.msra.mxu0 %v658
  %2602 = vmatpush.msra.mxu0 %v654
  %2603 = vmatpush.msra.mxu0 %v650
  %2604 = vmatpush.msra.mxu0 %v646
  %2605 = vmatpush.msra.mxu0 %v642
  %2606 = vmatpush.msra.mxu0 %v638
  %2607 = vmatpush.msra.mxu0 %v634
  %2608 = vmatmul.f32.gmra.mxu0 %v2483
  %v2609 = vpop.f32.mrf.mxu0
  %v2610 = vadd.f32 0.0, %v2609
  %2611 = vdwg.mxu0
  %2612 = vmatpush.msra.mxu0 %v695
  %2613 = vmatpush.msra.mxu0 %v691
  %2614 = vmatpush.msra.mxu0 %v687
  %2615 = vmatpush.msra.mxu0 %v683
  %2616 = vmatpush.msra.mxu0 %v679
  %2617 = vmatpush.msra.mxu0 %v675
  %2618 = vmatpush.msra.mxu0 %v671
  %2619 = vmatpush.msra.mxu0 %v667
  %2620 = vmatpush.msra.mxu0 %v663
  %2621 = vmatpush.msra.mxu0 %v659
  %2622 = vmatpush.msra.mxu0 %v655
  %2623 = vmatpush.msra.mxu0 %v651
  %2624 = vmatpush.msra.mxu0 %v647
  %2625 = vmatpush.msra.mxu0 %v643
  %2626 = vmatpush.msra.mxu0 %v639
  %2627 = vmatpush.msra.mxu0 %v635
  %2628 = vmatmul.f32.gmra.mxu0 %v2483
  %v2629 = vpop.f32.mrf.mxu0
  %v2630 = vadd.f32 0.0, %v2629
  %2631 = vdwg.mxu0
  %2632 = vmatpush.msra.mxu0 %v696
  %2633 = vmatpush.msra.mxu0 %v692
  %2634 = vmatpush.msra.mxu0 %v688
  %2635 = vmatpush.msra.mxu0 %v684
  %2636 = vmatpush.msra.mxu0 %v680
  %2637 = vmatpush.msra.mxu0 %v676
  %2638 = vmatpush.msra.mxu0 %v672
  %2639 = vmatpush.msra.mxu0 %v668
  %2640 = vmatpush.msra.mxu0 %v664
  %2641 = vmatpush.msra.mxu0 %v660
  %2642 = vmatpush.msra.mxu0 %v656
  %2643 = vmatpush.msra.mxu0 %v652
  %2644 = vmatpush.msra.mxu0 %v648
  %2645 = vmatpush.msra.mxu0 %v644
  %2646 = vmatpush.msra.mxu0 %v640
  %2647 = vmatpush.msra.mxu0 %v636
  %2648 = vmatmul.f32.gmra.mxu0 %v2483
  %v2649 = vpop.f32.mrf.mxu0
  %v2650 = vadd.f32 0.0, %v2649
  %2651 = vdwg.mxu0
  %v2652 = vadd.f32 %v426, %v2590
  %v2653 = vadd.f32 %v467, %v2610
  %v2654 = vadd.f32 %v508, %v2630
  %v2655 = vadd.f32 %v549, %v2650
  %v2656 = vxor.u32 %v2568, 2147483648
  %v2657 = vmul.f32 %v2656, 1.442695
  %v2658 = vpow.pop %v2657
  %v2659 = vadd.f32 %v2658, 1.0
  %v2660 = vrcp.pop %v2659
  %v2661 = vmul.f32 %v2659, %v2660
  %v2662 = vsub.f32 1.0, %v2661
  %v2663 = vmul.f32 %v2660, %v2662
  %v2664 = vadd.f32 %v2660, %v2663
  %vm2665 = vweird.f32 %v2659
  %vm2666 = vweird.f32 %v2660
  %vm2667 = vmor %vm2665, %vm2666
  %v2668 = vsel %vm2667, %v2660, %v2664
  %v2669 = vand.u32 2147483647, %v2659
  %vm2670 = vcmp.eq.f32.partialorder %v2669, 8.507059e+37
  %v2671 = vand.u32 %v2659, 2147483648
  %v2672 = vor.u32 1.1754944e-38, %v2671
  %v2673 = vsel %vm2670, %v2672, %v2668
  %v2674 = vmul.f32 1.0, %v2673
  %v2675 = vxor.u32 %v2569, 2147483648
  %v2676 = vmul.f32 %v2675, 1.442695
  %v2677 = vpow.pop %v2676
  %v2678 = vadd.f32 %v2677, 1.0
  %v2679 = vrcp.pop %v2678
  %v2680 = vmul.f32 %v2678, %v2679
  %v2681 = vsub.f32 1.0, %v2680
  %v2682 = vmul.f32 %v2679, %v2681
  %v2683 = vadd.f32 %v2679, %v2682
  %vm2684 = vweird.f32 %v2678
  %vm2685 = vweird.f32 %v2679
  %vm2686 = vmor %vm2684, %vm2685
  %v2687 = vsel %vm2686, %v2679, %v2683
  %v2688 = vand.u32 2147483647, %v2678
  %vm2689 = vcmp.eq.f32.partialorder %v2688, 8.507059e+37
  %v2690 = vand.u32 %v2678, 2147483648
  %v2691 = vor.u32 1.1754944e-38, %v2690
  %v2692 = vsel %vm2689, %v2691, %v2687
  %v2693 = vmul.f32 1.0, %v2692
  %v2694 = vtanh.pop %v2570
  %v2695 = vxor.u32 %v2571, 2147483648
  %v2696 = vmul.f32 %v2695, 1.442695
  %v2697 = vpow.pop %v2696
  %v2698 = vadd.f32 %v2697, 1.0
  %v2699 = vrcp.pop %v2698
  %v2700 = vmul.f32 %v2698, %v2699
  %v2701 = vsub.f32 1.0, %v2700
  %v2702 = vmul.f32 %v2699, %v2701
  %v2703 = vadd.f32 %v2699, %v2702
  %vm2704 = vweird.f32 %v2698
  %vm2705 = vweird.f32 %v2699
  %vm2706 = vmor %vm2704, %vm2705
  %v2707 = vsel %vm2706, %v2699, %v2703
  %v2708 = vand.u32 2147483647, %v2698
  %vm2709 = vcmp.eq.f32.partialorder %v2708, 8.507059e+37
  %v2710 = vand.u32 %v2698, 2147483648
  %v2711 = vor.u32 1.1754944e-38, %v2710
  %v2712 = vsel %vm2709, %v2711, %v2707
  %v2713 = vmul.f32 1.0, %v2712
  %v2714 = vmul.f32 %v2693, %v2418
  %v2715 = vmul.f32 %v2674, %v2694
  %v2716 = vadd.f32 %v2714, %v2715
  %v2717 = vtanh.pop %v2716
  %v2718 = vmul.f32 %v2713, %v2717
  %v2719 = vxor.u32 %v2652, 2147483648
  %v2720 = vmul.f32 %v2719, 1.442695
  %v2721 = vpow.pop %v2720
  %v2722 = vadd.f32 %v2721, 1.0
  %v2723 = vrcp.pop %v2722
  %v2724 = vmul.f32 %v2722, %v2723
  %v2725 = vsub.f32 1.0, %v2724
  %v2726 = vmul.f32 %v2723, %v2725
  %v2727 = vadd.f32 %v2723, %v2726
  %vm2728 = vweird.f32 %v2722
  %vm2729 = vweird.f32 %v2723
  %vm2730 = vmor %vm2728, %vm2729
  %v2731 = vsel %vm2730, %v2723, %v2727
  %v2732 = vand.u32 2147483647, %v2722
  %vm2733 = vcmp.eq.f32.partialorder %v2732, 8.507059e+37
  %v2734 = vand.u32 %v2722, 2147483648
  %v2735 = vor.u32 1.1754944e-38, %v2734
  %v2736 = vsel %vm2733, %v2735, %v2731
  %v2737 = vmul.f32 1.0, %v2736
  %v2738 = vxor.u32 %v2653, 2147483648
  %v2739 = vmul.f32 %v2738, 1.442695
  %v2740 = vpow.pop %v2739
  %v2741 = vadd.f32 %v2740, 1.0
  %v2742 = vrcp.pop %v2741
  %v2743 = vmul.f32 %v2741, %v2742
  %v2744 = vsub.f32 1.0, %v2743
  %v2745 = vmul.f32 %v2742, %v2744
  %v2746 = vadd.f32 %v2742, %v2745
  %vm2747 = vweird.f32 %v2741
  %vm2748 = vweird.f32 %v2742
  %vm2749 = vmor %vm2747, %vm2748
  %v2750 = vsel %vm2749, %v2742, %v2746
  %v2751 = vand.u32 2147483647, %v2741
  %vm2752 = vcmp.eq.f32.partialorder %v2751, 8.507059e+37
  %v2753 = vand.u32 %v2741, 2147483648
  %v2754 = vor.u32 1.1754944e-38, %v2753
  %v2755 = vsel %vm2752, %v2754, %v2750
  %v2756 = vmul.f32 1.0, %v2755
  %v2757 = vtanh.pop %v2654
  %v2758 = vxor.u32 %v2655, 2147483648
  %v2759 = vmul.f32 %v2758, 1.442695
  %v2760 = vpow.pop %v2759
  %v2761 = vadd.f32 %v2760, 1.0
  %v2762 = vrcp.pop %v2761
  %v2763 = vmul.f32 %v2761, %v2762
  %v2764 = vsub.f32 1.0, %v2763
  %v2765 = vmul.f32 %v2762, %v2764
  %v2766 = vadd.f32 %v2762, %v2765
  %vm2767 = vweird.f32 %v2761
  %vm2768 = vweird.f32 %v2762
  %vm2769 = vmor %vm2767, %vm2768
  %v2770 = vsel %vm2769, %v2762, %v2766
  %v2771 = vand.u32 2147483647, %v2761
  %vm2772 = vcmp.eq.f32.partialorder %v2771, 8.507059e+37
  %v2773 = vand.u32 %v2761, 2147483648
  %v2774 = vor.u32 1.1754944e-38, %v2773
  %v2775 = vsel %vm2772, %v2774, %v2770
  %v2776 = vmul.f32 1.0, %v2775
  %v2777 = vmul.f32 %v2756, %v2481
  %v2778 = vmul.f32 %v2737, %v2757
  %v2779 = vadd.f32 %v2777, %v2778
  %v2780 = vtanh.pop %v2779
  %v2781 = vmul.f32 %v2776, %v2780
  %s2782 = scalar_lea.vmem %s8, 48
  %2783 = vst [vmem:[%s2782] sm:$0xff] %v2718
  %s2784 = scalar_lea.vmem %s66, 8
  %2785 = vst [vmem:[%s2784] sm:$0xff] %v2781
  %2786 = vmatpush.msra.mxu0 %v629
  %2787 = vmatpush.msra.mxu0 %v625
  %2788 = vmatpush.msra.mxu0 %v621
  %2789 = vmatpush.msra.mxu0 %v617
  %2790 = vmatpush.msra.mxu0 %v613
  %2791 = vmatpush.msra.mxu0 %v609
  %2792 = vmatpush.msra.mxu0 %v605
  %2793 = vmatpush.msra.mxu0 %v601
  %2794 = vmatpush.msra.mxu0 %v597
  %2795 = vmatpush.msra.mxu0 %v593
  %2796 = vmatpush.msra.mxu0 %v589
  %2797 = vmatpush.msra.mxu0 %v585
  %2798 = vmatpush.msra.mxu0 %v581
  %2799 = vmatpush.msra.mxu0 %v577
  %2800 = vmatpush.msra.mxu0 %v573
  %2801 = vmatpush.msra.mxu0 %v569
  %2802 = vmatmul.f32.gmra.mxu0 %v2718
  %v2803 = vpop.f32.mrf.mxu0
  %v2804 = vadd.f32 0.0, %v2803
  %2805 = vdwg.mxu0
  %2806 = vmatpush.msra.mxu0 %v630
  %2807 = vmatpush.msra.mxu0 %v626
  %2808 = vmatpush.msra.mxu0 %v622
  %2809 = vmatpush.msra.mxu0 %v618
  %2810 = vmatpush.msra.mxu0 %v614
  %2811 = vmatpush.msra.mxu0 %v610
  %2812 = vmatpush.msra.mxu0 %v606
  %2813 = vmatpush.msra.mxu0 %v602
  %2814 = vmatpush.msra.mxu0 %v598
  %2815 = vmatpush.msra.mxu0 %v594
  %2816 = vmatpush.msra.mxu0 %v590
  %2817 = vmatpush.msra.mxu0 %v586
  %2818 = vmatpush.msra.mxu0 %v582
  %2819 = vmatpush.msra.mxu0 %v578
  %2820 = vmatpush.msra.mxu0 %v574
  %2821 = vmatpush.msra.mxu0 %v570
  %2822 = vmatmul.f32.gmra.mxu0 %v2718
  %v2823 = vpop.f32.mrf.mxu0
  %v2824 = vadd.f32 0.0, %v2823
  %2825 = vdwg.mxu0
  %2826 = vmatpush.msra.mxu0 %v631
  %2827 = vmatpush.msra.mxu0 %v627
  %2828 = vmatpush.msra.mxu0 %v623
  %2829 = vmatpush.msra.mxu0 %v619
  %2830 = vmatpush.msra.mxu0 %v615
  %2831 = vmatpush.msra.mxu0 %v611
  %2832 = vmatpush.msra.mxu0 %v607
  %2833 = vmatpush.msra.mxu0 %v603
  %2834 = vmatpush.msra.mxu0 %v599
  %2835 = vmatpush.msra.mxu0 %v595
  %2836 = vmatpush.msra.mxu0 %v591
  %2837 = vmatpush.msra.mxu0 %v587
  %2838 = vmatpush.msra.mxu0 %v583
  %2839 = vmatpush.msra.mxu0 %v579
  %2840 = vmatpush.msra.mxu0 %v575
  %2841 = vmatpush.msra.mxu0 %v571
  %2842 = vmatmul.f32.gmra.mxu0 %v2718
  %v2843 = vpop.f32.mrf.mxu0
  %v2844 = vadd.f32 0.0, %v2843
  %2845 = vdwg.mxu0
  %2846 = vmatpush.msra.mxu0 %v632
  %2847 = vmatpush.msra.mxu0 %v628
  %2848 = vmatpush.msra.mxu0 %v624
  %2849 = vmatpush.msra.mxu0 %v620
  %2850 = vmatpush.msra.mxu0 %v616
  %2851 = vmatpush.msra.mxu0 %v612
  %2852 = vmatpush.msra.mxu0 %v608
  %2853 = vmatpush.msra.mxu0 %v604
  %2854 = vmatpush.msra.mxu0 %v600
  %2855 = vmatpush.msra.mxu0 %v596
  %2856 = vmatpush.msra.mxu0 %v592
  %2857 = vmatpush.msra.mxu0 %v588
  %2858 = vmatpush.msra.mxu0 %v584
  %2859 = vmatpush.msra.mxu0 %v580
  %2860 = vmatpush.msra.mxu0 %v576
  %2861 = vmatpush.msra.mxu0 %v572
  %2862 = vmatmul.f32.gmra.mxu0 %v2718
  %v2863 = vpop.f32.mrf.mxu0
  %v2864 = vadd.f32 0.0, %v2863
  %2865 = vdwg.mxu0
  %v2866 = vadd.f32 %v198, %v2804
  %v2867 = vadd.f32 %v239, %v2824
  %v2868 = vadd.f32 %v280, %v2844
  %v2869 = vadd.f32 %v321, %v2864
  %2870 = vmatpush.msra.mxu0 %v693
  %2871 = vmatpush.msra.mxu0 %v689
  %2872 = vmatpush.msra.mxu0 %v685
  %2873 = vmatpush.msra.mxu0 %v681
  %2874 = vmatpush.msra.mxu0 %v677
  %2875 = vmatpush.msra.mxu0 %v673
  %2876 = vmatpush.msra.mxu0 %v669
  %2877 = vmatpush.msra.mxu0 %v665
  %2878 = vmatpush.msra.mxu0 %v661
  %2879 = vmatpush.msra.mxu0 %v657
  %2880 = vmatpush.msra.mxu0 %v653
  %2881 = vmatpush.msra.mxu0 %v649
  %2882 = vmatpush.msra.mxu0 %v645
  %2883 = vmatpush.msra.mxu0 %v641
  %2884 = vmatpush.msra.mxu0 %v637
  %2885 = vmatpush.msra.mxu0 %v633
  %2886 = vmatmul.f32.gmra.mxu0 %v2781
  %v2887 = vpop.f32.mrf.mxu0
  %v2888 = vadd.f32 0.0, %v2887
  %2889 = vdwg.mxu0
  %2890 = vmatpush.msra.mxu0 %v694
  %2891 = vmatpush.msra.mxu0 %v690
  %2892 = vmatpush.msra.mxu0 %v686
  %2893 = vmatpush.msra.mxu0 %v682
  %2894 = vmatpush.msra.mxu0 %v678
  %2895 = vmatpush.msra.mxu0 %v674
  %2896 = vmatpush.msra.mxu0 %v670
  %2897 = vmatpush.msra.mxu0 %v666
  %2898 = vmatpush.msra.mxu0 %v662
  %2899 = vmatpush.msra.mxu0 %v658
  %2900 = vmatpush.msra.mxu0 %v654
  %2901 = vmatpush.msra.mxu0 %v650
  %2902 = vmatpush.msra.mxu0 %v646
  %2903 = vmatpush.msra.mxu0 %v642
  %2904 = vmatpush.msra.mxu0 %v638
  %2905 = vmatpush.msra.mxu0 %v634
  %2906 = vmatmul.f32.gmra.mxu0 %v2781
  %v2907 = vpop.f32.mrf.mxu0
  %v2908 = vadd.f32 0.0, %v2907
  %2909 = vdwg.mxu0
  %2910 = vmatpush.msra.mxu0 %v695
  %2911 = vmatpush.msra.mxu0 %v691
  %2912 = vmatpush.msra.mxu0 %v687
  %2913 = vmatpush.msra.mxu0 %v683
  %2914 = vmatpush.msra.mxu0 %v679
  %2915 = vmatpush.msra.mxu0 %v675
  %2916 = vmatpush.msra.mxu0 %v671
  %2917 = vmatpush.msra.mxu0 %v667
  %2918 = vmatpush.msra.mxu0 %v663
  %2919 = vmatpush.msra.mxu0 %v659
  %2920 = vmatpush.msra.mxu0 %v655
  %2921 = vmatpush.msra.mxu0 %v651
  %2922 = vmatpush.msra.mxu0 %v647
  %2923 = vmatpush.msra.mxu0 %v643
  %2924 = vmatpush.msra.mxu0 %v639
  %2925 = vmatpush.msra.mxu0 %v635
  %2926 = vmatmul.f32.gmra.mxu0 %v2781
  %v2927 = vpop.f32.mrf.mxu0
  %v2928 = vadd.f32 0.0, %v2927
  %2929 = vdwg.mxu0
  %2930 = vmatpush.msra.mxu0 %v696
  %2931 = vmatpush.msra.mxu0 %v692
  %2932 = vmatpush.msra.mxu0 %v688
  %2933 = vmatpush.msra.mxu0 %v684
  %2934 = vmatpush.msra.mxu0 %v680
  %2935 = vmatpush.msra.mxu0 %v676
  %2936 = vmatpush.msra.mxu0 %v672
  %2937 = vmatpush.msra.mxu0 %v668
  %2938 = vmatpush.msra.mxu0 %v664
  %2939 = vmatpush.msra.mxu0 %v660
  %2940 = vmatpush.msra.mxu0 %v656
  %2941 = vmatpush.msra.mxu0 %v652
  %2942 = vmatpush.msra.mxu0 %v648
  %2943 = vmatpush.msra.mxu0 %v644
  %2944 = vmatpush.msra.mxu0 %v640
  %2945 = vmatpush.msra.mxu0 %v636
  %2946 = vmatmul.f32.gmra.mxu0 %v2781
  %v2947 = vpop.f32.mrf.mxu0
  %v2948 = vadd.f32 0.0, %v2947
  %2949 = vdwg.mxu0
  %v2950 = vadd.f32 %v423, %v2888
  %v2951 = vadd.f32 %v464, %v2908
  %v2952 = vadd.f32 %v505, %v2928
  %v2953 = vadd.f32 %v546, %v2948
  %v2954 = vxor.u32 %v2866, 2147483648
  %v2955 = vmul.f32 %v2954, 1.442695
  %v2956 = vpow.pop %v2955
  %v2957 = vadd.f32 %v2956, 1.0
  %v2958 = vrcp.pop %v2957
  %v2959 = vmul.f32 %v2957, %v2958
  %v2960 = vsub.f32 1.0, %v2959
  %v2961 = vmul.f32 %v2958, %v2960
  %v2962 = vadd.f32 %v2958, %v2961
  %vm2963 = vweird.f32 %v2957
  %vm2964 = vweird.f32 %v2958
  %vm2965 = vmor %vm2963, %vm2964
  %v2966 = vsel %vm2965, %v2958, %v2962
  %v2967 = vand.u32 2147483647, %v2957
  %vm2968 = vcmp.eq.f32.partialorder %v2967, 8.507059e+37
  %v2969 = vand.u32 %v2957, 2147483648
  %v2970 = vor.u32 1.1754944e-38, %v2969
  %v2971 = vsel %vm2968, %v2970, %v2966
  %v2972 = vmul.f32 1.0, %v2971
  %v2973 = vxor.u32 %v2867, 2147483648
  %v2974 = vmul.f32 %v2973, 1.442695
  %v2975 = vpow.pop %v2974
  %v2976 = vadd.f32 %v2975, 1.0
  %v2977 = vrcp.pop %v2976
  %v2978 = vmul.f32 %v2976, %v2977
  %v2979 = vsub.f32 1.0, %v2978
  %v2980 = vmul.f32 %v2977, %v2979
  %v2981 = vadd.f32 %v2977, %v2980
  %vm2982 = vweird.f32 %v2976
  %vm2983 = vweird.f32 %v2977
  %vm2984 = vmor %vm2982, %vm2983
  %v2985 = vsel %vm2984, %v2977, %v2981
  %v2986 = vand.u32 2147483647, %v2976
  %vm2987 = vcmp.eq.f32.partialorder %v2986, 8.507059e+37
  %v2988 = vand.u32 %v2976, 2147483648
  %v2989 = vor.u32 1.1754944e-38, %v2988
  %v2990 = vsel %vm2987, %v2989, %v2985
  %v2991 = vmul.f32 1.0, %v2990
  %v2992 = vtanh.pop %v2868
  %v2993 = vxor.u32 %v2869, 2147483648
  %v2994 = vmul.f32 %v2993, 1.442695
  %v2995 = vpow.pop %v2994
  %v2996 = vadd.f32 %v2995, 1.0
  %v2997 = vrcp.pop %v2996
  %v2998 = vmul.f32 %v2996, %v2997
  %v2999 = vsub.f32 1.0, %v2998
  %v3000 = vmul.f32 %v2997, %v2999
  %v3001 = vadd.f32 %v2997, %v3000
  %vm3002 = vweird.f32 %v2996
  %vm3003 = vweird.f32 %v2997
  %vm3004 = vmor %vm3002, %vm3003
  %v3005 = vsel %vm3004, %v2997, %v3001
  %v3006 = vand.u32 2147483647, %v2996
  %vm3007 = vcmp.eq.f32.partialorder %v3006, 8.507059e+37
  %v3008 = vand.u32 %v2996, 2147483648
  %v3009 = vor.u32 1.1754944e-38, %v3008
  %v3010 = vsel %vm3007, %v3009, %v3005
  %v3011 = vmul.f32 1.0, %v3010
  %v3012 = vmul.f32 %v2991, %v2716
  %v3013 = vmul.f32 %v2972, %v2992
  %v3014 = vadd.f32 %v3012, %v3013
  %v3015 = vtanh.pop %v3014
  %v3016 = vmul.f32 %v3011, %v3015
  %v3017 = vxor.u32 %v2950, 2147483648
  %v3018 = vmul.f32 %v3017, 1.442695
  %v3019 = vpow.pop %v3018
  %v3020 = vadd.f32 %v3019, 1.0
  %v3021 = vrcp.pop %v3020
  %v3022 = vmul.f32 %v3020, %v3021
  %v3023 = vsub.f32 1.0, %v3022
  %v3024 = vmul.f32 %v3021, %v3023
  %v3025 = vadd.f32 %v3021, %v3024
  %vm3026 = vweird.f32 %v3020
  %vm3027 = vweird.f32 %v3021
  %vm3028 = vmor %vm3026, %vm3027
  %v3029 = vsel %vm3028, %v3021, %v3025
  %v3030 = vand.u32 2147483647, %v3020
  %vm3031 = vcmp.eq.f32.partialorder %v3030, 8.507059e+37
  %v3032 = vand.u32 %v3020, 2147483648
  %v3033 = vor.u32 1.1754944e-38, %v3032
  %v3034 = vsel %vm3031, %v3033, %v3029
  %v3035 = vmul.f32 1.0, %v3034
  %v3036 = vxor.u32 %v2951, 2147483648
  %v3037 = vmul.f32 %v3036, 1.442695
  %v3038 = vpow.pop %v3037
  %v3039 = vadd.f32 %v3038, 1.0
  %v3040 = vrcp.pop %v3039
  %v3041 = vmul.f32 %v3039, %v3040
  %v3042 = vsub.f32 1.0, %v3041
  %v3043 = vmul.f32 %v3040, %v3042
  %v3044 = vadd.f32 %v3040, %v3043
  %vm3045 = vweird.f32 %v3039
  %vm3046 = vweird.f32 %v3040
  %vm3047 = vmor %vm3045, %vm3046
  %v3048 = vsel %vm3047, %v3040, %v3044
  %v3049 = vand.u32 2147483647, %v3039
  %vm3050 = vcmp.eq.f32.partialorder %v3049, 8.507059e+37
  %v3051 = vand.u32 %v3039, 2147483648
  %v3052 = vor.u32 1.1754944e-38, %v3051
  %v3053 = vsel %vm3050, %v3052, %v3048
  %v3054 = vmul.f32 1.0, %v3053
  %v3055 = vtanh.pop %v2952
  %v3056 = vxor.u32 %v2953, 2147483648
  %v3057 = vmul.f32 %v3056, 1.442695
  %v3058 = vpow.pop %v3057
  %v3059 = vadd.f32 %v3058, 1.0
  %v3060 = vrcp.pop %v3059
  %v3061 = vmul.f32 %v3059, %v3060
  %v3062 = vsub.f32 1.0, %v3061
  %v3063 = vmul.f32 %v3060, %v3062
  %v3064 = vadd.f32 %v3060, %v3063
  %vm3065 = vweird.f32 %v3059
  %vm3066 = vweird.f32 %v3060
  %vm3067 = vmor %vm3065, %vm3066
  %v3068 = vsel %vm3067, %v3060, %v3064
  %v3069 = vand.u32 2147483647, %v3059
  %vm3070 = vcmp.eq.f32.partialorder %v3069, 8.507059e+37
  %v3071 = vand.u32 %v3059, 2147483648
  %v3072 = vor.u32 1.1754944e-38, %v3071
  %v3073 = vsel %vm3070, %v3072, %v3068
  %v3074 = vmul.f32 1.0, %v3073
  %v3075 = vmul.f32 %v3054, %v2779
  %v3076 = vmul.f32 %v3035, %v3055
  %v3077 = vadd.f32 %v3075, %v3076
  %v3078 = vtanh.pop %v3077
  %v3079 = vmul.f32 %v3074, %v3078
  %s3080 = scalar_lea.vmem %s8, 56
  %3081 = vst [vmem:[%s3080] sm:$0xff] %v3016
  %3082 = vst [vmem:[%s66] sm:$0xff] %v3079
  %3083 = vst [vmem:[#allocation2] sm:$0xff] %v3016
  %3084 = vst [vmem:[#allocation3] sm:$0xff] %v3014
  %3085 = vst [vmem:[#allocation4] sm:$0xff] %v3079
  %3086 = vst [vmem:[#allocation5] sm:$0xff] %v3077
  // Predicated region
  $region38: #{encoder_forward.1} parent=0 // pred_check
    %p3087 = pneg %p69
  $region39: #{encoder_forward.1} parent=0 // pred_check_branch
    %3089 = sbr.rel (%p3087) target = $region41
  $region40: #{encoder_forward.1} parent=0 // pred_region
    %3090 = vst [vmem:[%s10] sm:$0xff] %v3016
    %s3091 = scalar_lea.vmem %s10, 8
    %3092 = vst [vmem:[%s3091] sm:$0xff] %v3079
    %3093 = vst [vmem:[%s11] sm:$0xff] %v3014
    %s3094 = scalar_lea.vmem %s11, 8
    %3095 = vst [vmem:[%s3094] sm:$0xff] %v3077
  $region41: #{encoder_forward.1} parent=0 // pred_fallthru
    _
  %s3096 = ssub.s32 0, 0
  %s3097 = smul.u32 8, %s3096
  %p3098 = scmp.lt.s32.totalorder %s3097, 7
  %s3099 = scalar_select %p3098, %s3097, 7
  %s3100 = smul.addr %s3099, 8
  %s3101 = scalar_lea.vmem %s9, %s3100
  // Predicated region
  $region42: #{encoder_forward.1} parent=0 // pred_check
    _
  $region43: #{encoder_forward.1} parent=0 // pred_check_branch
    %3103 = sbr.rel (0) target = $region45
  $region44: #{encoder_forward.1} parent=0 // pred_region
    _
  $region45: #{encoder_forward.1} parent=0 // pred_fallthru
    _
  // Predicated region
  $region46: #{encoder_forward.1} parent=0 // pred_check
    _
  $region47: #{encoder_forward.1} parent=0 // pred_check_branch
    %3105 = sbr.rel (0) target = $region49
  $region48: #{encoder_forward.1} parent=0 // pred_region
    %s3106 = ssub.s32 0, 0
    %s3107 = smul.u32 8, %s3106
  $region49: #{encoder_forward.1} parent=0 // pred_fallthru
    _
  // Predicated region
  $region50: #{encoder_forward.1} parent=0 // pred_check
    _
  $region51: #{encoder_forward.1} parent=0 // pred_check_branch
    %3109 = sbr.rel (0) target = $region53
  $region52: #{encoder_forward.1} parent=0 // pred_region
    _
  $region53: #{encoder_forward.1} parent=0 // pred_fallthru
    _
  // Predicated region
  $region54: #{encoder_forward.1} parent=0 // pred_check
    _
  $region55: #{encoder_forward.1} parent=0 // pred_check_branch
    %3111 = sbr.rel (0) target = $region57
  $region56: #{encoder_forward.1} parent=0 // pred_region
    _
  $region57: #{encoder_forward.1} parent=0 // pred_fallthru
    _
  // Predicated region
  $region58: #{encoder_forward.1} parent=0 // pred_check
    _
  $region59: #{encoder_forward.1} parent=0 // pred_check_branch
    %3113 = sbr.rel (0) target = $region61
  $region60: #{encoder_forward.1} parent=0 // pred_region
    _
  $region61: #{encoder_forward.1} parent=0 // pred_fallthru
    _
  // Predicated region
  $region62: #{encoder_forward.1} parent=0 // pred_check
    _
  $region63: #{encoder_forward.1} parent=0 // pred_check_branch
    %3115 = sbr.rel (0) target = $region65
  $region64: #{encoder_forward.1} parent=0 // pred_region
    %s3116 = ssub.s32 0, 0
    %s3117 = smul.u32 8, %s3116
    %p3118 = scmp.lt.s32.totalorder %s3117, 7
    %s3119 = scalar_select %p3118, %s3117, 7
    %s3120 = smul.addr %s3119, 8
    %s3121 = scalar_lea.vmem %s9, %s3120
  $region65: #{encoder_forward.1} parent=0 // pred_fallthru
    _
  // Predicated region
  $region66: #{encoder_forward.1} parent=0 // pred_check
    _
  $region67: #{encoder_forward.1} parent=0 // pred_check_branch
    %3123 = sbr.rel (0) target = $region69
  $region68: #{encoder_forward.1} parent=0 // pred_region
    _
  $region69: #{encoder_forward.1} parent=0 // pred_fallthru
    _
  // Predicated region
  $region70: #{encoder_forward.1} parent=0 // pred_check
    _
  $region71: #{encoder_forward.1} parent=0 // pred_check_branch
    %3125 = sbr.rel (0) target = $region73
  $region72: #{encoder_forward.1} parent=0 // pred_region
    _
  $region73: #{encoder_forward.1} parent=0 // pred_fallthru
    _

</llo_original>
